<compile_context>
chip_gen: v5e
topology: v5e:2x2
jax: 0.10.0
libtpu: 0.0.40
codegen_flags: <defaults>
</compile_context>

<pallas_src>
import functools

import jax
import jax.numpy as jnp
from jax import lax
from jax.experimental import pallas as pl
from jax.experimental.pallas import tpu as pltpu

F32 = jnp.float32
BF16 = jnp.bfloat16

_VMEM = pl.BlockSpec(memory_space=pltpu.MemorySpace.VMEM)


def _round_up(x, m):
    return (x + m - 1) // m * m


def _tpu_vmem_bytes():
    try:
        return int(pltpu.get_tpu_info().vmem_capacity_bytes)
    except Exception:  # pragma: no cover - conservative fallback
        return 64 * 1024 * 1024


# --------------------------------------------------------------------------
# Kernel A: NNConv edge network (Linear -> ReLU -> Linear), tiled over edges.
#   edge feats (edge_in, E) -> per-edge flattened weights, feature-major (D*D, E) bf16.
#   Edges live on the lane axis, so the output feeds kernel B with no relayout.
# --------------------------------------------------------------------------
def _edge_net_kernel(chunk_rows, efT_ref, w1T_ref, b1T_ref, w2T_ref, b2T_ref, out_ref):
    DD = w2T_ref.shape[0]
    # Linear(edge_in -> H) + ReLU (small-K matmul; K = edge_in).
    h = jnp.dot(w1T_ref[...], efT_ref[...].astype(BF16),
                preferred_element_type=F32) + b1T_ref[...]
    hb = jnp.maximum(h, 0.0).astype(BF16)

    # Linear(H -> D*D) in sublane chunks to keep the f32 intermediate small.
    def chunk_body(c, carry):
        r0 = pl.multiple_of(c * chunk_rows, 8)
        y = jnp.dot(w2T_ref[pl.ds(r0, chunk_rows), :], hb,
                    preferred_element_type=F32)
        out_ref[pl.ds(r0, chunk_rows), :] = (
            y + b2T_ref[pl.ds(r0, chunk_rows), :]).astype(BF16)
        return carry

    lax.fori_loop(0, DD // chunk_rows, chunk_body, 0)


def edge_network_T(efT_pad, w1T, b1T, w2T, b2T, *, tile_e, vmem_limit):
    edge_in, E_pad = efT_pad.shape
    H = w1T.shape[0]
    DD = w2T.shape[0]
    chunk_rows = 2048 if DD % 2048 == 0 else DD
    grid = (E_pad // tile_e,)
    return pl.pallas_call(
        functools.partial(_edge_net_kernel, chunk_rows),
        out_shape=jax.ShapeDtypeStruct((DD, E_pad), BF16),
        grid=grid,
        in_specs=[
            pl.BlockSpec((edge_in, tile_e), lambda i: (0, i)),
            pl.BlockSpec((H, edge_in), lambda i: (0, 0)),
            pl.BlockSpec((H, 1), lambda i: (0, 0)),
            pl.BlockSpec((DD, H), lambda i: (0, 0)),
            pl.BlockSpec((DD, 1), lambda i: (0, 0)),
        ],
        out_specs=pl.BlockSpec((DD, tile_e), lambda i: (0, i)),
        compiler_params=pltpu.CompilerParams(
            dimension_semantics=("parallel",),
            vmem_limit_bytes=vmem_limit,
        ),
    )(efT_pad, w1T, b1T, w2T, b2T)


# --------------------------------------------------------------------------
# Kernel B: fused MPNNGNN core + both DotProductPredictor heads (feature-major).
#   hT = ReLU(WpT @ nfT + bp)                                      (D, V)
#   repeat num_steps:
#     hsrcT       = hT @ SrcScat                                   gather (MXU)
#     msgT[j, e]  = sum_i hsrcT[i, e] * WedgeT[i*D + j, e]         VPU broadcast-FMA
#     aggT        = msgT @ DstOneHot + b_conv                      scatter-sum (MXU)
#     xT          = ReLU(aggT)
#     hT          = GRUCell(xT, hT)      fused (3D, D) gate matmuls, order r, z, n
#   pos = sum_d (hT @ SrcScat) * (hT @ DstScat)   (and same for the negative subgraph)
# --------------------------------------------------------------------------
def _gnn_predict_kernel(num_steps, D,
                        nfT_ref, wedgeT_ref,
                        src_scat_ref, dst_scat_ref, dst_oh_ref,
                        nsrc_scat_ref, ndst_scat_ref,
                        wpT_ref, bpT_ref, bconvT_ref,
                        wiT_ref, whT_ref, biT_ref, bhT_ref,
                        pos_ref, neg_ref,
                        hsrcT_ref):
    V_pad = src_scat_ref.shape[0]
    E_pad = wedgeT_ref.shape[1]

    # project_node_feats: ReLU(WpT @ nfT + bp)   (bf16 MXU, f32 accumulate)
    hT = jnp.maximum(
        jnp.dot(wpT_ref[...], nfT_ref[...].astype(BF16),
                preferred_element_type=F32) + bpT_ref[...], 0.0)          # (D, V_pad)

    # Weights / biases hoisted out of the (unrolled) message-passing loop.
    src_scat = src_scat_ref[...]
    dst_oh = dst_oh_ref[...]
    wiT = wiT_ref[...]
    whT = whT_ref[...]
    bconvT = bconvT_ref[...]
    biT = biT_ref[...]
    bhT = bhT_ref[...]

    def mp_step(_, hT):
        hTb = hT.astype(BF16)

        # Gather h at every edge source with one MXU matmul (exact 0/1 one-hot).
        hsrcT_ref[...] = jnp.dot(hTb, src_scat, preferred_element_type=F32)  # (D, E_pad)

        # NNConv weight application: msg[e] = h[src[e]] @ W[e], vectorized over edges.
        def col_body(i, acc):
            off = pl.multiple_of(i * D, 8)
            w_blk = wedgeT_ref[pl.ds(off, D), :].astype(F32)                 # (D, E_pad)
            row = hsrcT_ref[pl.ds(i, 1), :]                                  # (1, E_pad)
            return acc + jnp.broadcast_to(row, (D, E_pad)) * w_blk

        msgT = lax.fori_loop(0, D, col_body,
                             jnp.zeros((D, E_pad), F32), unroll=4)

        # NNConv 'sum' aggregation over destinations + bias (one-hot scatter on MXU).
        aggT = jnp.dot(msgT.astype(BF16), dst_oh,
                       preferred_element_type=F32) + bconvT                 # (D, V_pad)
        xTb = jnp.maximum(aggT, 0.0).astype(BF16)

        # GRU cell (PyTorch gate order r, z, n) with fused (3D, D) gate matmuls.
        gi = jnp.dot(wiT, xTb, preferred_element_type=F32) + biT            # (3D, V_pad)
        gh = jnp.dot(whT, hTb, preferred_element_type=F32) + bhT
        r = jax.nn.sigmoid(gi[0:D] + gh[0:D])
        z = jax.nn.sigmoid(gi[D:2 * D] + gh[D:2 * D])
        n = jnp.tanh(gi[2 * D:3 * D] + r * gh[2 * D:3 * D])
        return (1.0 - z) * n + z * hT

    hT = lax.fori_loop(0, num_steps, mp_step, hT, unroll=True)

    # ---- fused DotProductPredictor heads (lane-dense (1, E) outputs) ----
    hTb = hT.astype(BF16)
    hsT = jnp.dot(hTb, src_scat, preferred_element_type=F32)
    hdT = jnp.dot(hTb, dst_scat_ref[...], preferred_element_type=F32)
    pos_ref[...] = jnp.sum(hsT * hdT, axis=0, keepdims=True)
    nsT = jnp.dot(hTb, nsrc_scat_ref[...], preferred_element_type=F32)
    ndT = jnp.dot(hTb, ndst_scat_ref[...], preferred_element_type=F32)
    neg_ref[...] = jnp.sum(nsT * ndT, axis=0, keepdims=True)


def mpnn_gnn_predict(nfT, wedgeT, src_scat, dst_scat, dst_oh, nsrc_scat, ndst_scat,
                     wpT, bpT, bconvT, wiT, whT, biT, bhT, *,
                     num_steps, D, vmem_limit):
    E_pad = wedgeT.shape[1]
    En_pad = nsrc_scat.shape[1]
    kernel = functools.partial(_gnn_predict_kernel, num_steps, D)

    # TODO(synk): for very large graphs, keep wedgeT in HBM (memory_space=pl.ANY) and
    # stream lane-tiles with a double-buffered DMA pipeline per message-passing step
    # (v7x 64 MiB VMEM); also replace the dense one-hot scatter by a sorted-dst segment
    # sum when E*V grows too large.
    # TODO(synk): shard the edge/node work across v7x's two TensorCores via
    # pl.core_map / CORE_PARALLEL with per-core partial aggregations.
    return pl.pallas_call(
        kernel,
        out_shape=(jax.ShapeDtypeStruct((1, E_pad), F32),
                   jax.ShapeDtypeStruct((1, En_pad), F32)),
        in_specs=[_VMEM] * 14,
        out_specs=(_VMEM, _VMEM),
        scratch_shapes=[pltpu.VMEM((D, E_pad), F32)],   # hsrcT (per-step edge gather)
        compiler_params=pltpu.CompilerParams(vmem_limit_bytes=vmem_limit),
    )(nfT, wedgeT, src_scat, dst_scat, dst_oh, nsrc_scat, ndst_scat,
      wpT, bpT, bconvT, wiT, whT, biT, bhT)


# --------------------------------------------------------------------------
# Parameters + forward glue
# --------------------------------------------------------------------------
def init_params(key, node_in, edge_in, D, edge_hidden):
    ks = jax.random.split(key, 9)

    def lin(k, fan_in, fan_out, scale=None):
        s = (1.0 / (fan_in ** 0.5)) if scale is None else scale
        return jax.random.uniform(k, (fan_in, fan_out), F32, -s, s)

    def bias(n):
        return jnp.full((n,), 0.01, F32)

    return {
        # project_node_feats
        "wp": lin(ks[0], node_in, D), "bp": bias(D),
        # edge network: Linear(edge_in, H) -> ReLU -> Linear(H, D*D)
        "we1": lin(ks[1], edge_in, edge_hidden), "be1": bias(edge_hidden),
        "we2": lin(ks[2], edge_hidden, D * D) * 0.1, "be2": jnp.zeros((D * D,), F32),
        # NNConv bias
        "bconv": bias(D),
        # GRU ('x @ W' orientation; gate order r, z, n)
        "w_ir": lin(ks[3], D, D), "w_iz": lin(ks[4], D, D), "w_in": lin(ks[5], D, D),
        "w_hr": lin(ks[6], D, D), "w_hz": lin(ks[7], D, D), "w_hn": lin(ks[8], D, D),
        "b_ir": bias(D), "b_iz": bias(D), "b_in": bias(D),
        "b_hr": bias(D), "b_hz": bias(D), "b_hn": bias(D),
    }


def mpnn_predictor_forward(params, node_feats, edge_feats,
                           g_src, g_dst, neg_src, neg_dst,
                           num_step_message_passing):
    V, node_in = node_feats.shape
    E, edge_in = edge_feats.shape
    En = int(neg_src.shape[0])
    D = int(params["bconv"].shape[0])

    # Generation-dependent tiling / VMEM budgets (v5e/v6e: 128 MiB, v7x: 64 MiB).
    vmem_cap = _tpu_vmem_bytes()
    big_vmem = vmem_cap >= 96 * 1024 * 1024
    tile_cap = 512 if big_vmem else 256
    ka_vmem = (80 if big_vmem else 48) * 1024 * 1024
    kb_vmem = (96 if big_vmem else 48) * 1024 * 1024

    V_pad = _round_up(V, 8)
    E8 = _round_up(E, 8)
    if E8 <= tile_cap:
        tile_e, E_pad = E8, E8
    else:
        tile_e, E_pad = tile_cap, _round_up(E, tile_cap)
    En_pad = _round_up(En, 8)

    bf = lambda a: a.astype(BF16)

    # Feature-major (transposed) node / edge features, zero padded.
    nfT = jnp.zeros((V_pad, node_in), F32).at[:V].set(node_feats.astype(F32)).T
    efT = jnp.zeros((E_pad, edge_in), F32).at[:E].set(edge_feats.astype(F32)).T

    # Edge endpoint 0/1 gather/scatter matrices (exact in bf16); padded edges use the
    # sentinel -1 so their rows/columns are all zero and never contribute.
    def pad_idx(idx, n):
        return jnp.full((n,), -1, jnp.int32).at[:idx.shape[0]].set(idx.astype(jnp.int32))

    src_p, dst_p = pad_idx(g_src, E_pad), pad_idx(g_dst, E_pad)
    nsrc_p, ndst_p = pad_idx(neg_src, En_pad), pad_idx(neg_dst, En_pad)
    iota_v = jnp.arange(V_pad, dtype=jnp.int32)
    src_scat = bf(iota_v[:, None] == src_p[None, :])     # (V_pad, E_pad)  gather h[src]
    dst_scat = bf(iota_v[:, None] == dst_p[None, :])     # (V_pad, E_pad)  gather h[dst]
    dst_oh = bf(dst_p[:, None] == iota_v[None, :])       # (E_pad, V_pad)  scatter-sum
    nsrc_scat = bf(iota_v[:, None] == nsrc_p[None, :])   # (V_pad, En_pad)
    ndst_scat = bf(iota_v[:, None] == ndst_p[None, :])   # (V_pad, En_pad)

    # NNConv edge_func is input-independent across message-passing steps -> compute once.
    # Output is (D*D, E_pad) bf16, consumed by kernel B with no relayout.
    wedgeT = edge_network_T(efT, bf(params["we1"].T), params["be1"][:, None],
                            bf(params["we2"].T), bf(params["be2"])[:, None],
                            tile_e=tile_e, vmem_limit=ka_vmem)

    # Fused GRU gate weights / biases (rows 0:D -> r, D:2D -> z, 2D:3D -> n).
    wiT = bf(jnp.concatenate([params["w_ir"].T, params["w_iz"].T, params["w_in"].T], 0))
    whT = bf(jnp.concatenate([params["w_hr"].T, params["w_hz"].T, params["w_hn"].T], 0))
    biT = jnp.concatenate([params["b_ir"], params["b_iz"], params["b_in"]])[:, None]
    bhT = jnp.concatenate([params["b_hr"], params["b_hz"], params["b_hn"]])[:, None]

    pos_row, neg_row = mpnn_gnn_predict(
        nfT, wedgeT, src_scat, dst_scat, dst_oh, nsrc_scat, ndst_scat,
        bf(params["wp"].T), params["bp"][:, None], params["bconv"][:, None],
        wiT, whT, biT, bhT,
        num_steps=int(num_step_message_passing), D=D, vmem_limit=kb_vmem)

    # u_dot_v scores, shape (E, 1) like DGL's edata['score'].
    return pos_row[0, :E][:, None], neg_row[0, :En][:, None]


if __name__ == "__main__":
    # Small synthetic problem consistent with the module's forward signature.
    V, E, E_NEG = 16, 24, 16
    NODE_IN, EDGE_IN = 32, 16
    D, EDGE_HIDDEN = 128, 128            # node_out_feats, edge_hidden_feats (lane-aligned)
    NUM_STEP_MP = 6                      # num_step_message_passing (default)

    key = jax.random.PRNGKey(0)
    k_nf, k_ef, k_e1, k_e2, k_e3, k_e4, k_p = jax.random.split(key, 7)

    node_feats = jax.random.normal(k_nf, (V, NODE_IN), F32)
    edge_feats = jax.random.normal(k_ef, (E, EDGE_IN), F32)
    g_src = jax.random.randint(k_e1, (E,), 0, V, jnp.int32)
    g_dst = jax.random.randint(k_e2, (E,), 0, V, jnp.int32)
    neg_src = jax.random.randint(k_e3, (E_NEG,), 0, V, jnp.int32)
    neg_dst = jax.random.randint(k_e4, (E_NEG,), 0, V, jnp.int32)

    params = init_params(k_p, NODE_IN, EDGE_IN, D, EDGE_HIDDEN)

    pos_scores, neg_scores = mpnn_predictor_forward(
        params, node_feats, edge_feats, g_src, g_dst, neg_src, neg_dst, NUM_STEP_MP)
    jax.block_until_ready((pos_scores, neg_scores))

    assert pos_scores.shape == (E, 1) and neg_scores.shape == (E_NEG, 1)
    assert pos_scores.dtype == F32 and neg_scores.dtype == F32
    assert bool(jnp.all(jnp.isfinite(pos_scores))) and bool(jnp.all(jnp.isfinite(neg_scores)))
    print("KERNEL_OK")
</pallas_src>

<mosaic_0001>
module attributes {stable_mosaic.version = 11 : i64} {
  func.func @_edge_net_kernel(%arg0: i32, %arg1: memref<16x24xf32, #tpu.memory_space<vmem>>, %arg2: memref<128x16xbf16, #tpu.memory_space<vmem>>, %arg3: memref<128x1xf32, #tpu.memory_space<vmem>>, %arg4: memref<16384x128xbf16, #tpu.memory_space<vmem>>, %arg5: memref<16384x1xbf16, #tpu.memory_space<vmem>>, %arg6: memref<16384x24xbf16, #tpu.memory_space<vmem>>) attributes {dimension_semantics = [#tpu.dimension_semantics<parallel>], iteration_bounds = array<i64: 1>, scalar_prefetch = 0 : i64, scratch_operands = 0 : i64, tpu.core_type = #tpu.core_type<tc>, window_params = [{transform_indices = @transform_0, window_bounds = array<i64: 16, 24>}, {pipeline_mode = #tpu.pipeline_mode<synchronous>, transform_indices = @transform_1, window_bounds = array<i64: 128, 16>}, {pipeline_mode = #tpu.pipeline_mode<synchronous>, transform_indices = @transform_2, window_bounds = array<i64: 128, 1>}, {pipeline_mode = #tpu.pipeline_mode<synchronous>, transform_indices = @transform_3, window_bounds = array<i64: 16384, 128>}, {pipeline_mode = #tpu.pipeline_mode<synchronous>, transform_indices = @transform_4, window_bounds = array<i64: 16384, 1>}, {transform_indices = @transform_5, window_bounds = array<i64: 16384, 24>}]} {
    %c0 = arith.constant 0 : index
    %c0_0 = arith.constant 0 : index
    %0 = vector.load %arg2[%c0, %c0_0] : memref<128x16xbf16, #tpu.memory_space<vmem>>, vector<128x16xbf16>
    %c0_1 = arith.constant 0 : index
    %c0_2 = arith.constant 0 : index
    %1 = vector.load %arg1[%c0_1, %c0_2] : memref<16x24xf32, #tpu.memory_space<vmem>>, vector<16x24xf32>
    %2 = arith.truncf %1 : vector<16x24xf32> to vector<16x24xbf16>
    %cst = arith.constant dense<0.000000e+00> : vector<128x24xf32>
    %3 = tpu.matmul %0, %2, %cst {dimension_numbers = #tpu.dot_dimension_numbers<[1], [0], [0], [1], [0, 0, 1, 1], [], []>} : vector<128x16xbf16>, vector<16x24xbf16>, vector<128x24xf32> -> vector<128x24xf32>
    %c0_3 = arith.constant 0 : index
    %c0_4 = arith.constant 0 : index
    %4 = vector.load %arg3[%c0_3, %c0_4] : memref<128x1xf32, #tpu.memory_space<vmem>>, vector<128x1xf32>
    %5 = vector.broadcast %4 : vector<128x1xf32> to vector<128x24xf32>
    %6 = arith.addf %3, %5 : vector<128x24xf32>
    %cst_5 = arith.constant 0.000000e+00 : f32
    %7 = vector.broadcast %cst_5 : f32 to vector<128x24xf32>
    %8 = arith.maximumf %6, %7 : vector<128x24xf32>
    %9 = arith.truncf %8 : vector<128x24xf32> to vector<128x24xbf16>
    %c0_i32 = arith.constant 0 : i32
    %c8_i32 = arith.constant 8 : i32
    %10 = arith.addi %c0_i32, %c8_i32 : i32
    %c1_i32 = arith.constant 1 : i32
    scf.for %arg7 = %c0_i32 to %10 step %c1_i32  : i32 {
      %c2048_i32 = arith.constant 2048 : i32
      %11 = arith.muli %arg7, %c2048_i32 : i32
      %12 = tpu.assume_multiple %11, 8 : i32
      %13 = arith.index_cast %12 : i32 to index
      %c0_7 = arith.constant 0 : index
      %14 = vector.load %arg4[%13, %c0_7] : memref<16384x128xbf16, #tpu.memory_space<vmem>>, vector<2048x128xbf16>
      %cst_8 = arith.constant dense<0.000000e+00> : vector<2048x24xf32>
      %15 = tpu.matmul %14, %9, %cst_8 {dimension_numbers = #tpu.dot_dimension_numbers<[1], [0], [0], [1], [0, 0, 1, 1], [], []>} : vector<2048x128xbf16>, vector<128x24xbf16>, vector<2048x24xf32> -> vector<2048x24xf32>
      %16 = arith.index_cast %12 : i32 to index
      %c0_9 = arith.constant 0 : index
      %17 = vector.load %arg5[%16, %c0_9] : memref<16384x1xbf16, #tpu.memory_space<vmem>>, vector<2048x1xbf16>
      %18 = arith.extf %17 : vector<2048x1xbf16> to vector<2048x1xf32>
      %19 = vector.broadcast %18 : vector<2048x1xf32> to vector<2048x24xf32>
      %20 = arith.addf %15, %19 : vector<2048x24xf32>
      %21 = arith.truncf %20 : vector<2048x24xf32> to vector<2048x24xbf16>
      %22 = arith.index_cast %12 : i32 to index
      %c0_10 = arith.constant 0 : index
      %23 = vector.load %arg6[%22, %c0_10] : memref<16384x24xbf16, #tpu.memory_space<vmem>>, vector<2048x24xbf16>
      tpu.vector_store %arg6[%22, %c0_10], %21 {strides = array<i32>} : memref<16384x24xbf16, #tpu.memory_space<vmem>>, vector<2048x24xbf16>,
    }
    %c8_i32_6 = arith.constant 8 : i32
    return
  }
  func.func @transform_0(%arg0: i32) -> (i32, i32) {
    %c0_i32 = arith.constant 0 : i32
    %c0_i32_0 = arith.constant 0 : i32
    return %c0_i32, %arg0 : i32, i32
  }
  func.func @transform_1(%arg0: i32) -> (i32, i32) {
    %c0_i32 = arith.constant 0 : i32
    %c0_i32_0 = arith.constant 0 : i32
    %c0_i32_1 = arith.constant 0 : i32
    return %c0_i32, %c0_i32_0 : i32, i32
  }
  func.func @transform_2(%arg0: i32) -> (i32, i32) {
    %c0_i32 = arith.constant 0 : i32
    %c0_i32_0 = arith.constant 0 : i32
    %c0_i32_1 = arith.constant 0 : i32
    return %c0_i32, %c0_i32_0 : i32, i32
  }
  func.func @transform_3(%arg0: i32) -> (i32, i32) {
    %c0_i32 = arith.constant 0 : i32
    %c0_i32_0 = arith.constant 0 : i32
    %c0_i32_1 = arith.constant 0 : i32
    return %c0_i32, %c0_i32_0 : i32, i32
  }
  func.func @transform_4(%arg0: i32) -> (i32, i32) {
    %c0_i32 = arith.constant 0 : i32
    %c0_i32_0 = arith.constant 0 : i32
    %c0_i32_1 = arith.constant 0 : i32
    return %c0_i32, %c0_i32_0 : i32, i32
  }
  func.func @transform_5(%arg0: i32) -> (i32, i32) {
    %c0_i32 = arith.constant 0 : i32
    %c0_i32_0 = arith.constant 0 : i32
    return %c0_i32, %arg0 : i32, i32
  }
}

</mosaic_0001>

<llo_original>
// kernel: tpu_custom_call.1
$region0: #{tpu_custom_call.1}
  #allocation0 [shape = 'u32[]', space=smem, size = 0x4, offset = 0x4, fixed_abs, tag = 'smem constant byte address 0x4 - core index']
  #allocation1 [shape = 'u32[72,128]{1,0:T(1,128)}', space=vmem, size = 0x9000, scoped, tag = 'internal scratch']
  %s0 = inlined_call_operand.vmem [shape: f32[16,24], index: 0, kind: input, shape index: {}]
  %s1 = inlined_call_operand.vmem [shape: bf16[128,16], index: 1, kind: input, shape index: {}]
  %s2 = inlined_call_operand.vmem [shape: f32[128,1], index: 2, kind: input, shape index: {}]
  %s3 = inlined_call_operand.vmem [shape: bf16[16384,128], index: 3, kind: input, shape index: {}]
  %s4 = inlined_call_operand.vmem [shape: bf16[16384,1], index: 4, kind: input, shape index: {}]
  %s5 = inlined_call_operand.vmem [shape: bf16[16384,24], index: 5, kind: output, shape index: {}]
  %s6 = sld [smem:[#allocation0]]
  $region37: #{tpu_custom_call.1} parent=0
    _
  %s8 = ssub.s32 1, %s6
  %s9 = scalar_select 0, %s8, %s6
  // Predicated region
  $region2: #{tpu_custom_call.1} parent=0 // pred_check
    _
  $region3: #{tpu_custom_call.1} parent=0 // pred_check_branch
    %11 = sbr.rel (0) target = $region5
  $region4: #{tpu_custom_call.1} parent=0 // pred_region
    _
  $region5: #{tpu_custom_call.1} parent=0 // pred_fallthru
    _
  // Predicated region
  $region6: #{tpu_custom_call.1} parent=0 // pred_check
    _
  $region7: #{tpu_custom_call.1} parent=0 // pred_check_branch
    %13 = sbr.rel (0) target = $region9
  $region8: #{tpu_custom_call.1} parent=0 // pred_region
    _
  $region9: #{tpu_custom_call.1} parent=0 // pred_fallthru
    _
  // Predicated region
  $region10: #{tpu_custom_call.1} parent=0 // pred_check
    _
  $region11: #{tpu_custom_call.1} parent=0 // pred_check_branch
    %15 = sbr.rel (0) target = $region13
  $region12: #{tpu_custom_call.1} parent=0 // pred_region
    _
  $region13: #{tpu_custom_call.1} parent=0 // pred_fallthru
    _
  // Predicated region
  $region14: #{tpu_custom_call.1} parent=0 // pred_check
    _
  $region15: #{tpu_custom_call.1} parent=0 // pred_check_branch
    %17 = sbr.rel (0) target = $region17
  $region16: #{tpu_custom_call.1} parent=0 // pred_region
    _
  $region17: #{tpu_custom_call.1} parent=0 // pred_fallthru
    _
  // Predicated region
  $region18: #{tpu_custom_call.1} parent=0 // pred_check
    _
  $region19: #{tpu_custom_call.1} parent=0 // pred_check_branch
    %19 = sbr.rel (0) target = $region21
  $region20: #{tpu_custom_call.1} parent=0 // pred_region
    _
  $region21: #{tpu_custom_call.1} parent=0 // pred_fallthru
    _
  %v21 = vld [vmem:[%s1] sm:$0xf]
  %v22 = vld [vmem:[%s1 + $0x4] sm:$0xf]
  %v23 = vld [vmem:[%s1 + $0x8] sm:$0xf]
  %v24 = vld [vmem:[%s1 + $0xc] sm:$0xf]
  %v25 = vld [vmem:[%s1 + $0x10] sm:$0xf]
  %v26 = vld [vmem:[%s1 + $0x14] sm:$0xf]
  %v27 = vld [vmem:[%s1 + $0x18] sm:$0xf]
  %v28 = vld [vmem:[%s1 + $0x1c] sm:$0xf]
  %v29 = vld [vmem:[%s1 + $0x20] sm:$0xf]
  %v30 = vld [vmem:[%s1 + $0x24] sm:$0xf]
  %v31 = vld [vmem:[%s1 + $0x28] sm:$0xf]
  %v32 = vld [vmem:[%s1 + $0x2c] sm:$0xf]
  %v33 = vld [vmem:[%s1 + $0x30] sm:$0xf]
  %v34 = vld [vmem:[%s1 + $0x34] sm:$0xf]
  %v35 = vld [vmem:[%s1 + $0x38] sm:$0xf]
  %v36 = vld [vmem:[%s1 + $0x3c] sm:$0xf]
  %v37 = vld [vmem:[%s0] sm:$0xff]
  %v38 = vld [vmem:[%s0 + $0x8] sm:$0xff]
  %v39 = vpack.c.bf16 %v38, %v37
  %v40 = vld [vmem:[%s2] sm:$0xff]
  %v41 = vld [vmem:[%s2 + $0x8] sm:$0xff]
  %v42 = vld [vmem:[%s2 + $0x10] sm:$0xff]
  %v43 = vld [vmem:[%s2 + $0x18] sm:$0xff]
  %v44 = vld [vmem:[%s2 + $0x20] sm:$0xff]
  %v45 = vld [vmem:[%s2 + $0x28] sm:$0xff]
  %v46 = vld [vmem:[%s2 + $0x30] sm:$0xff]
  %v47 = vld [vmem:[%s2 + $0x38] sm:$0xff]
  %v48 = vld [vmem:[%s2 + $0x40] sm:$0xff]
  %v49 = vld [vmem:[%s2 + $0x48] sm:$0xff]
  %v50 = vld [vmem:[%s2 + $0x50] sm:$0xff]
  %v51 = vld [vmem:[%s2 + $0x58] sm:$0xff]
  %v52 = vld [vmem:[%s2 + $0x60] sm:$0xff]
  %v53 = vld [vmem:[%s2 + $0x68] sm:$0xff]
  %v54 = vld [vmem:[%s2 + $0x70] sm:$0xff]
  %v55 = vld [vmem:[%s2 + $0x78] sm:$0xff]
  %57 = vset.pattern.permute.xlu0 0
  %58 = vperm.xlu0 %57, %v40
  %v59 = vpop.permute.xlu0 %58
  %62 = vset.pattern.permute.xlu0 0
  %63 = vperm.xlu0 %62, %v41
  %v64 = vpop.permute.xlu0 %63
  %67 = vset.pattern.permute.xlu0 0
  %68 = vperm.xlu0 %67, %v42
  %v69 = vpop.permute.xlu0 %68
  %72 = vset.pattern.permute.xlu0 0
  %73 = vperm.xlu0 %72, %v43
  %v74 = vpop.permute.xlu0 %73
  %77 = vset.pattern.permute.xlu0 0
  %78 = vperm.xlu0 %77, %v44
  %v79 = vpop.permute.xlu0 %78
  %82 = vset.pattern.permute.xlu0 0
  %83 = vperm.xlu0 %82, %v45
  %v84 = vpop.permute.xlu0 %83
  %87 = vset.pattern.permute.xlu0 0
  %88 = vperm.xlu0 %87, %v46
  %v89 = vpop.permute.xlu0 %88
  %92 = vset.pattern.permute.xlu0 0
  %93 = vperm.xlu0 %92, %v47
  %v94 = vpop.permute.xlu0 %93
  %97 = vset.pattern.permute.xlu0 0
  %98 = vperm.xlu0 %97, %v48
  %v99 = vpop.permute.xlu0 %98
  %102 = vset.pattern.permute.xlu0 0
  %103 = vperm.xlu0 %102, %v49
  %v104 = vpop.permute.xlu0 %103
  %107 = vset.pattern.permute.xlu0 0
  %108 = vperm.xlu0 %107, %v50
  %v109 = vpop.permute.xlu0 %108
  %112 = vset.pattern.permute.xlu0 0
  %113 = vperm.xlu0 %112, %v51
  %v114 = vpop.permute.xlu0 %113
  %117 = vset.pattern.permute.xlu0 0
  %118 = vperm.xlu0 %117, %v52
  %v119 = vpop.permute.xlu0 %118
  %122 = vset.pattern.permute.xlu0 0
  %123 = vperm.xlu0 %122, %v53
  %v124 = vpop.permute.xlu0 %123
  %127 = vset.pattern.permute.xlu0 0
  %128 = vperm.xlu0 %127, %v54
  %v129 = vpop.permute.xlu0 %128
  %132 = vset.pattern.permute.xlu0 0
  %133 = vperm.xlu0 %132, %v55
  %v134 = vpop.permute.xlu0 %133
  %v152 = vunpack.c.l.b16 %v21
  %v153 = vunpack.c.l.b16 %v22
  %v154 = vunpack.c.l.b16 %v23
  %v155 = vunpack.c.l.b16 %v24
  %v156 = vunpack.c.l.b16 %v25
  %v157 = vunpack.c.l.b16 %v26
  %v158 = vunpack.c.l.b16 %v27
  %v159 = vunpack.c.l.b16 %v28
  %v160 = vunpack.c.l.b16 %v29
  %v161 = vunpack.c.l.b16 %v30
  %v162 = vunpack.c.l.b16 %v31
  %v163 = vunpack.c.l.b16 %v32
  %v164 = vunpack.c.l.b16 %v33
  %v165 = vunpack.c.l.b16 %v34
  %v166 = vunpack.c.l.b16 %v35
  %v167 = vunpack.c.l.b16 %v36
  %v168 = vpack.c.b16 %v153, %v152
  %v169 = vpack.c.b16 %v155, %v154
  %v170 = vpack.c.b16 %v157, %v156
  %v171 = vpack.c.b16 %v159, %v158
  %v172 = vpack.c.b16 %v161, %v160
  %v173 = vpack.c.b16 %v163, %v162
  %v174 = vpack.c.b16 %v165, %v164
  %v175 = vpack.c.b16 %v167, %v166
  %vm176 = vcmask 130048
  %v178 = vsel %vm176, %v168, 0
  %v181 = vsel %vm176, %v169, 0
  %v184 = vsel %vm176, %v170, 0
  %v187 = vsel %vm176, %v171, 0
  %v190 = vsel %vm176, %v172, 0
  %v193 = vsel %vm176, %v173, 0
  %v196 = vsel %vm176, %v174, 0
  %v199 = vsel %vm176, %v175, 0
  %201 = vmatpush.bf16.msra.mxu0 0
  %202 = vmatpush.bf16.msra.mxu0 0
  %203 = vmatpush.bf16.msra.mxu0 0
  %204 = vmatpush.bf16.msra.mxu0 0
  %205 = vmatpush.bf16.msra.mxu0 0
  %206 = vmatpush.bf16.msra.mxu0 0
  %207 = vmatpush.bf16.msra.mxu0 0
  %208 = vmatpush.bf16.msra.mxu0 %v39
  %209 = vmatmul.bf16.gmra.mxu0 %v178
  %v210 = vpop.f32.mrf.mxu0
  %v211 = vadd.f32 %v59, %v210
  %v212 = vpop.f32.mrf.mxu0
  %v213 = vadd.f32 %v64, %v212
  %214 = vmatmul.bf16.gmra.mxu0 %v181
  %v215 = vpop.f32.mrf.mxu0
  %v216 = vadd.f32 %v69, %v215
  %v217 = vpop.f32.mrf.mxu0
  %v218 = vadd.f32 %v74, %v217
  %219 = vmatmul.bf16.gmra.mxu0 %v184
  %v220 = vpop.f32.mrf.mxu0
  %v221 = vadd.f32 %v79, %v220
  %v222 = vpop.f32.mrf.mxu0
  %v223 = vadd.f32 %v84, %v222
  %224 = vmatmul.bf16.gmra.mxu0 %v187
  %v225 = vpop.f32.mrf.mxu0
  %v226 = vadd.f32 %v89, %v225
  %v227 = vpop.f32.mrf.mxu0
  %v228 = vadd.f32 %v94, %v227
  %229 = vmatmul.bf16.gmra.mxu0 %v190
  %v230 = vpop.f32.mrf.mxu0
  %v231 = vadd.f32 %v99, %v230
  %v232 = vpop.f32.mrf.mxu0
  %v233 = vadd.f32 %v104, %v232
  %234 = vmatmul.bf16.gmra.mxu0 %v193
  %v235 = vpop.f32.mrf.mxu0
  %v236 = vadd.f32 %v109, %v235
  %v237 = vpop.f32.mrf.mxu0
  %v238 = vadd.f32 %v114, %v237
  %239 = vmatmul.bf16.gmra.mxu0 %v196
  %v240 = vpop.f32.mrf.mxu0
  %v241 = vadd.f32 %v119, %v240
  %v242 = vpop.f32.mrf.mxu0
  %v243 = vadd.f32 %v124, %v242
  %244 = vmatmul.bf16.gmra.mxu0 %v199
  %v245 = vpop.f32.mrf.mxu0
  %v246 = vadd.f32 %v129, %v245
  %v247 = vpop.f32.mrf.mxu0
  %v248 = vadd.f32 %v134, %v247
  %249 = vdwg.mxu0
  %v250 = vmax.f32 %v211, 0.0
  %v251 = vmax.f32 %v213, 0.0
  %v252 = vmax.f32 %v216, 0.0
  %v253 = vmax.f32 %v218, 0.0
  %v254 = vmax.f32 %v221, 0.0
  %v255 = vmax.f32 %v223, 0.0
  %v256 = vmax.f32 %v226, 0.0
  %v257 = vmax.f32 %v228, 0.0
  %v258 = vmax.f32 %v231, 0.0
  %v259 = vmax.f32 %v233, 0.0
  %v260 = vmax.f32 %v236, 0.0
  %v261 = vmax.f32 %v238, 0.0
  %v262 = vmax.f32 %v241, 0.0
  %v263 = vmax.f32 %v243, 0.0
  %v264 = vmax.f32 %v246, 0.0
  %v265 = vmax.f32 %v248, 0.0
  %v266 = vpack.c.bf16 %v251, %v250
  %v267 = vpack.c.bf16 %v253, %v252
  %v268 = vpack.c.bf16 %v255, %v254
  %v269 = vpack.c.bf16 %v257, %v256
  %v270 = vpack.c.bf16 %v259, %v258
  %v271 = vpack.c.bf16 %v261, %v260
  %v272 = vpack.c.bf16 %v263, %v262
  %v273 = vpack.c.bf16 %v265, %v264
  loop: start=0, step=1, limit=8
  $region22: #{tpu_custom_call.1} parent=0 // loop_pre_header
    _
  $region23: #{tpu_custom_call.1} parent=0 // loop_header
    %s275 = sphi 0, %s279
    %p276 = scmp.ge.s32.totalorder %s275, 8
  $region24: #{tpu_custom_call.1} parent=0 // loop_header_branch
    %278 = sbr.rel (%p276) target = $region28
  $region25: #{tpu_custom_call.1} parent=0 // loop_body
    %s280 = smul.u32 %s275, 2048
    %s281 = sshra.s32 %s280, 3
    %s282 = sand.u32 %s280, 7
    %s283 = smul.addr %s281, 4
    %s284 = scalar_lea.vmem %s3, %s283
    %v285 = vld [vmem:[%s284] sm:$0xf]
    %v286 = vld [vmem:[%s284 + $0x4] sm:$0xf]
    %v287 = vld [vmem:[%s284 + $0x8] sm:$0xf]
    %v288 = vld [vmem:[%s284 + $0xc] sm:$0xf]
    %v289 = vld [vmem:[%s284 + $0x10] sm:$0xf]
    %v290 = vld [vmem:[%s284 + $0x14] sm:$0xf]
    %v291 = vld [vmem:[%s284 + $0x18] sm:$0xf]
    %v292 = vld [vmem:[%s284 + $0x1c] sm:$0xf]
    %v293 = vld [vmem:[%s284 + $0x20] sm:$0xf]
    %v294 = vld [vmem:[%s284 + $0x24] sm:$0xf]
    %v295 = vld [vmem:[%s284 + $0x28] sm:$0xf]
    %v296 = vld [vmem:[%s284 + $0x2c] sm:$0xf]
    %v297 = vld [vmem:[%s284 + $0x30] sm:$0xf]
    %v298 = vld [vmem:[%s284 + $0x34] sm:$0xf]
    %v299 = vld [vmem:[%s284 + $0x38] sm:$0xf]
    %v300 = vld [vmem:[%s284 + $0x3c] sm:$0xf]
    %v301 = vld [vmem:[%s284 + $0x40] sm:$0xf]
    %v302 = vld [vmem:[%s284 + $0x44] sm:$0xf]
    %v303 = vld [vmem:[%s284 + $0x48] sm:$0xf]
    %v304 = vld [vmem:[%s284 + $0x4c] sm:$0xf]
    %v305 = vld [vmem:[%s284 + $0x50] sm:$0xf]
    %v306 = vld [vmem:[%s284 + $0x54] sm:$0xf]
    %v307 = vld [vmem:[%s284 + $0x58] sm:$0xf]
    %v308 = vld [vmem:[%s284 + $0x5c] sm:$0xf]
    %v309 = vld [vmem:[%s284 + $0x60] sm:$0xf]
    %v310 = vld [vmem:[%s284 + $0x64] sm:$0xf]
    %v311 = vld [vmem:[%s284 + $0x68] sm:$0xf]
    %v312 = vld [vmem:[%s284 + $0x6c] sm:$0xf]
    %v313 = vld [vmem:[%s284 + $0x70] sm:$0xf]
    %v314 = vld [vmem:[%s284 + $0x74] sm:$0xf]
    %v315 = vld [vmem:[%s284 + $0x78] sm:$0xf]
    %v316 = vld [vmem:[%s284 + $0x7c] sm:$0xf]
    %v317 = vld [vmem:[%s284 + $0x80] sm:$0xf]
    %v318 = vld [vmem:[%s284 + $0x84] sm:$0xf]
    %v319 = vld [vmem:[%s284 + $0x88] sm:$0xf]
    %v320 = vld [vmem:[%s284 + $0x8c] sm:$0xf]
    %v321 = vld [vmem:[%s284 + $0x90] sm:$0xf]
    %v322 = vld [vmem:[%s284 + $0x94] sm:$0xf]
    %v323 = vld [vmem:[%s284 + $0x98] sm:$0xf]
    %v324 = vld [vmem:[%s284 + $0x9c] sm:$0xf]
    %v325 = vld [vmem:[%s284 + $0xa0] sm:$0xf]
    %v326 = vld [vmem:[%s284 + $0xa4] sm:$0xf]
    %v327 = vld [vmem:[%s284 + $0xa8] sm:$0xf]
    %v328 = vld [vmem:[%s284 + $0xac] sm:$0xf]
    %v329 = vld [vmem:[%s284 + $0xb0] sm:$0xf]
    %v330 = vld [vmem:[%s284 + $0xb4] sm:$0xf]
    %v331 = vld [vmem:[%s284 + $0xb8] sm:$0xf]
    %v332 = vld [vmem:[%s284 + $0xbc] sm:$0xf]
    %v333 = vld [vmem:[%s284 + $0xc0] sm:$0xf]
    %v334 = vld [vmem:[%s284 + $0xc4] sm:$0xf]
    %v335 = vld [vmem:[%s284 + $0xc8] sm:$0xf]
    %v336 = vld [vmem:[%s284 + $0xcc] sm:$0xf]
    %v337 = vld [vmem:[%s284 + $0xd0] sm:$0xf]
    %v338 = vld [vmem:[%s284 + $0xd4] sm:$0xf]
    %v339 = vld [vmem:[%s284 + $0xd8] sm:$0xf]
    %v340 = vld [vmem:[%s284 + $0xdc] sm:$0xf]
    %v341 = vld [vmem:[%s284 + $0xe0] sm:$0xf]
    %v342 = vld [vmem:[%s284 + $0xe4] sm:$0xf]
    %v343 = vld [vmem:[%s284 + $0xe8] sm:$0xf]
    %v344 = vld [vmem:[%s284 + $0xec] sm:$0xf]
    %v345 = vld [vmem:[%s284 + $0xf0] sm:$0xf]
    %v346 = vld [vmem:[%s284 + $0xf4] sm:$0xf]
    %v347 = vld [vmem:[%s284 + $0xf8] sm:$0xf]
    %v348 = vld [vmem:[%s284 + $0xfc] sm:$0xf]
    %v349 = vld [vmem:[%s284 + $0x100] sm:$0xf]
    %v350 = vld [vmem:[%s284 + $0x104] sm:$0xf]
    %v351 = vld [vmem:[%s284 + $0x108] sm:$0xf]
    %v352 = vld [vmem:[%s284 + $0x10c] sm:$0xf]
    %v353 = vld [vmem:[%s284 + $0x110] sm:$0xf]
    %v354 = vld [vmem:[%s284 + $0x114] sm:$0xf]
    %v355 = vld [vmem:[%s284 + $0x118] sm:$0xf]
    %v356 = vld [vmem:[%s284 + $0x11c] sm:$0xf]
    %v357 = vld [vmem:[%s284 + $0x120] sm:$0xf]
    %v358 = vld [vmem:[%s284 + $0x124] sm:$0xf]
    %v359 = vld [vmem:[%s284 + $0x128] sm:$0xf]
    %v360 = vld [vmem:[%s284 + $0x12c] sm:$0xf]
    %v361 = vld [vmem:[%s284 + $0x130] sm:$0xf]
    %v362 = vld [vmem:[%s284 + $0x134] sm:$0xf]
    %v363 = vld [vmem:[%s284 + $0x138] sm:$0xf]
    %v364 = vld [vmem:[%s284 + $0x13c] sm:$0xf]
    %v365 = vld [vmem:[%s284 + $0x140] sm:$0xf]
    %v366 = vld [vmem:[%s284 + $0x144] sm:$0xf]
    %v367 = vld [vmem:[%s284 + $0x148] sm:$0xf]
    %v368 = vld [vmem:[%s284 + $0x14c] sm:$0xf]
    %v369 = vld [vmem:[%s284 + $0x150] sm:$0xf]
    %v370 = vld [vmem:[%s284 + $0x154] sm:$0xf]
    %v371 = vld [vmem:[%s284 + $0x158] sm:$0xf]
    %v372 = vld [vmem:[%s284 + $0x15c] sm:$0xf]
    %v373 = vld [vmem:[%s284 + $0x160] sm:$0xf]
    %v374 = vld [vmem:[%s284 + $0x164] sm:$0xf]
    %v375 = vld [vmem:[%s284 + $0x168] sm:$0xf]
    %v376 = vld [vmem:[%s284 + $0x16c] sm:$0xf]
    %v377 = vld [vmem:[%s284 + $0x170] sm:$0xf]
    %v378 = vld [vmem:[%s284 + $0x174] sm:$0xf]
    %v379 = vld [vmem:[%s284 + $0x178] sm:$0xf]
    %v380 = vld [vmem:[%s284 + $0x17c] sm:$0xf]
    %v381 = vld [vmem:[%s284 + $0x180] sm:$0xf]
    %v382 = vld [vmem:[%s284 + $0x184] sm:$0xf]
    %v383 = vld [vmem:[%s284 + $0x188] sm:$0xf]
    %v384 = vld [vmem:[%s284 + $0x18c] sm:$0xf]
    %v385 = vld [vmem:[%s284 + $0x190] sm:$0xf]
    %v386 = vld [vmem:[%s284 + $0x194] sm:$0xf]
    %v387 = vld [vmem:[%s284 + $0x198] sm:$0xf]
    %v388 = vld [vmem:[%s284 + $0x19c] sm:$0xf]
    %v389 = vld [vmem:[%s284 + $0x1a0] sm:$0xf]
    %v390 = vld [vmem:[%s284 + $0x1a4] sm:$0xf]
    %v391 = vld [vmem:[%s284 + $0x1a8] sm:$0xf]
    %v392 = vld [vmem:[%s284 + $0x1ac] sm:$0xf]
    %v393 = vld [vmem:[%s284 + $0x1b0] sm:$0xf]
    %v394 = vld [vmem:[%s284 + $0x1b4] sm:$0xf]
    %v395 = vld [vmem:[%s284 + $0x1b8] sm:$0xf]
    %v396 = vld [vmem:[%s284 + $0x1bc] sm:$0xf]
    %v397 = vld [vmem:[%s284 + $0x1c0] sm:$0xf]
    %v398 = vld [vmem:[%s284 + $0x1c4] sm:$0xf]
    %v399 = vld [vmem:[%s284 + $0x1c8] sm:$0xf]
    %v400 = vld [vmem:[%s284 + $0x1cc] sm:$0xf]
    %v401 = vld [vmem:[%s284 + $0x1d0] sm:$0xf]
    %v402 = vld [vmem:[%s284 + $0x1d4] sm:$0xf]
    %v403 = vld [vmem:[%s284 + $0x1d8] sm:$0xf]
    %v404 = vld [vmem:[%s284 + $0x1dc] sm:$0xf]
    %v405 = vld [vmem:[%s284 + $0x1e0] sm:$0xf]
    %v406 = vld [vmem:[%s284 + $0x1e4] sm:$0xf]
    %v407 = vld [vmem:[%s284 + $0x1e8] sm:$0xf]
    %v408 = vld [vmem:[%s284 + $0x1ec] sm:$0xf]
    %v409 = vld [vmem:[%s284 + $0x1f0] sm:$0xf]
    %v410 = vld [vmem:[%s284 + $0x1f4] sm:$0xf]
    %v411 = vld [vmem:[%s284 + $0x1f8] sm:$0xf]
    %v412 = vld [vmem:[%s284 + $0x1fc] sm:$0xf]
    %v413 = vld [vmem:[%s284 + $0x200] sm:$0xf]
    %v414 = vld [vmem:[%s284 + $0x204] sm:$0xf]
    %v415 = vld [vmem:[%s284 + $0x208] sm:$0xf]
    %v416 = vld [vmem:[%s284 + $0x20c] sm:$0xf]
    %v417 = vld [vmem:[%s284 + $0x210] sm:$0xf]
    %v418 = vld [vmem:[%s284 + $0x214] sm:$0xf]
    %v419 = vld [vmem:[%s284 + $0x218] sm:$0xf]
    %v420 = vld [vmem:[%s284 + $0x21c] sm:$0xf]
    %v421 = vld [vmem:[%s284 + $0x220] sm:$0xf]
    %v422 = vld [vmem:[%s284 + $0x224] sm:$0xf]
    %v423 = vld [vmem:[%s284 + $0x228] sm:$0xf]
    %v424 = vld [vmem:[%s284 + $0x22c] sm:$0xf]
    %v425 = vld [vmem:[%s284 + $0x230] sm:$0xf]
    %v426 = vld [vmem:[%s284 + $0x234] sm:$0xf]
    %v427 = vld [vmem:[%s284 + $0x238] sm:$0xf]
    %v428 = vld [vmem:[%s284 + $0x23c] sm:$0xf]
    %v429 = vld [vmem:[%s284 + $0x240] sm:$0xf]
    %v430 = vld [vmem:[%s284 + $0x244] sm:$0xf]
    %v431 = vld [vmem:[%s284 + $0x248] sm:$0xf]
    %v432 = vld [vmem:[%s284 + $0x24c] sm:$0xf]
    %v433 = vld [vmem:[%s284 + $0x250] sm:$0xf]
    %v434 = vld [vmem:[%s284 + $0x254] sm:$0xf]
    %v435 = vld [vmem:[%s284 + $0x258] sm:$0xf]
    %v436 = vld [vmem:[%s284 + $0x25c] sm:$0xf]
    %v437 = vld [vmem:[%s284 + $0x260] sm:$0xf]
    %v438 = vld [vmem:[%s284 + $0x264] sm:$0xf]
    %v439 = vld [vmem:[%s284 + $0x268] sm:$0xf]
    %v440 = vld [vmem:[%s284 + $0x26c] sm:$0xf]
    %v441 = vld [vmem:[%s284 + $0x270] sm:$0xf]
    %v442 = vld [vmem:[%s284 + $0x274] sm:$0xf]
    %v443 = vld [vmem:[%s284 + $0x278] sm:$0xf]
    %v444 = vld [vmem:[%s284 + $0x27c] sm:$0xf]
    %v445 = vld [vmem:[%s284 + $0x280] sm:$0xf]
    %v446 = vld [vmem:[%s284 + $0x284] sm:$0xf]
    %v447 = vld [vmem:[%s284 + $0x288] sm:$0xf]
    %v448 = vld [vmem:[%s284 + $0x28c] sm:$0xf]
    %v449 = vld [vmem:[%s284 + $0x290] sm:$0xf]
    %v450 = vld [vmem:[%s284 + $0x294] sm:$0xf]
    %v451 = vld [vmem:[%s284 + $0x298] sm:$0xf]
    %v452 = vld [vmem:[%s284 + $0x29c] sm:$0xf]
    %v453 = vld [vmem:[%s284 + $0x2a0] sm:$0xf]
    %v454 = vld [vmem:[%s284 + $0x2a4] sm:$0xf]
    %v455 = vld [vmem:[%s284 + $0x2a8] sm:$0xf]
    %v456 = vld [vmem:[%s284 + $0x2ac] sm:$0xf]
    %v457 = vld [vmem:[%s284 + $0x2b0] sm:$0xf]
    %v458 = vld [vmem:[%s284 + $0x2b4] sm:$0xf]
    %v459 = vld [vmem:[%s284 + $0x2b8] sm:$0xf]
    %v460 = vld [vmem:[%s284 + $0x2bc] sm:$0xf]
    %v461 = vld [vmem:[%s284 + $0x2c0] sm:$0xf]
    %v462 = vld [vmem:[%s284 + $0x2c4] sm:$0xf]
    %v463 = vld [vmem:[%s284 + $0x2c8] sm:$0xf]
    %v464 = vld [vmem:[%s284 + $0x2cc] sm:$0xf]
    %v465 = vld [vmem:[%s284 + $0x2d0] sm:$0xf]
    %v466 = vld [vmem:[%s284 + $0x2d4] sm:$0xf]
    %v467 = vld [vmem:[%s284 + $0x2d8] sm:$0xf]
    %v468 = vld [vmem:[%s284 + $0x2dc] sm:$0xf]
    %v469 = vld [vmem:[%s284 + $0x2e0] sm:$0xf]
    %v470 = vld [vmem:[%s284 + $0x2e4] sm:$0xf]
    %v471 = vld [vmem:[%s284 + $0x2e8] sm:$0xf]
    %v472 = vld [vmem:[%s284 + $0x2ec] sm:$0xf]
    %v473 = vld [vmem:[%s284 + $0x2f0] sm:$0xf]
    %v474 = vld [vmem:[%s284 + $0x2f4] sm:$0xf]
    %v475 = vld [vmem:[%s284 + $0x2f8] sm:$0xf]
    %v476 = vld [vmem:[%s284 + $0x2fc] sm:$0xf]
    %v477 = vld [vmem:[%s284 + $0x300] sm:$0xf]
    %v478 = vld [vmem:[%s284 + $0x304] sm:$0xf]
    %v479 = vld [vmem:[%s284 + $0x308] sm:$0xf]
    %v480 = vld [vmem:[%s284 + $0x30c] sm:$0xf]
    %v481 = vld [vmem:[%s284 + $0x310] sm:$0xf]
    %v482 = vld [vmem:[%s284 + $0x314] sm:$0xf]
    %v483 = vld [vmem:[%s284 + $0x318] sm:$0xf]
    %v484 = vld [vmem:[%s284 + $0x31c] sm:$0xf]
    %v485 = vld [vmem:[%s284 + $0x320] sm:$0xf]
    %v486 = vld [vmem:[%s284 + $0x324] sm:$0xf]
    %v487 = vld [vmem:[%s284 + $0x328] sm:$0xf]
    %v488 = vld [vmem:[%s284 + $0x32c] sm:$0xf]
    %v489 = vld [vmem:[%s284 + $0x330] sm:$0xf]
    %v490 = vld [vmem:[%s284 + $0x334] sm:$0xf]
    %v491 = vld [vmem:[%s284 + $0x338] sm:$0xf]
    %v492 = vld [vmem:[%s284 + $0x33c] sm:$0xf]
    %v493 = vld [vmem:[%s284 + $0x340] sm:$0xf]
    %v494 = vld [vmem:[%s284 + $0x344] sm:$0xf]
    %v495 = vld [vmem:[%s284 + $0x348] sm:$0xf]
    %v496 = vld [vmem:[%s284 + $0x34c] sm:$0xf]
    %v497 = vld [vmem:[%s284 + $0x350] sm:$0xf]
    %v498 = vld [vmem:[%s284 + $0x354] sm:$0xf]
    %v499 = vld [vmem:[%s284 + $0x358] sm:$0xf]
    %v500 = vld [vmem:[%s284 + $0x35c] sm:$0xf]
    %v501 = vld [vmem:[%s284 + $0x360] sm:$0xf]
    %v502 = vld [vmem:[%s284 + $0x364] sm:$0xf]
    %v503 = vld [vmem:[%s284 + $0x368] sm:$0xf]
    %v504 = vld [vmem:[%s284 + $0x36c] sm:$0xf]
    %v505 = vld [vmem:[%s284 + $0x370] sm:$0xf]
    %v506 = vld [vmem:[%s284 + $0x374] sm:$0xf]
    %v507 = vld [vmem:[%s284 + $0x378] sm:$0xf]
    %v508 = vld [vmem:[%s284 + $0x37c] sm:$0xf]
    %v509 = vld [vmem:[%s284 + $0x380] sm:$0xf]
    %v510 = vld [vmem:[%s284 + $0x384] sm:$0xf]
    %v511 = vld [vmem:[%s284 + $0x388] sm:$0xf]
    %v512 = vld [vmem:[%s284 + $0x38c] sm:$0xf]
    %v513 = vld [vmem:[%s284 + $0x390] sm:$0xf]
    %v514 = vld [vmem:[%s284 + $0x394] sm:$0xf]
    %v515 = vld [vmem:[%s284 + $0x398] sm:$0xf]
    %v516 = vld [vmem:[%s284 + $0x39c] sm:$0xf]
    %v517 = vld [vmem:[%s284 + $0x3a0] sm:$0xf]
    %v518 = vld [vmem:[%s284 + $0x3a4] sm:$0xf]
    %v519 = vld [vmem:[%s284 + $0x3a8] sm:$0xf]
    %v520 = vld [vmem:[%s284 + $0x3ac] sm:$0xf]
    %v521 = vld [vmem:[%s284 + $0x3b0] sm:$0xf]
    %v522 = vld [vmem:[%s284 + $0x3b4] sm:$0xf]
    %v523 = vld [vmem:[%s284 + $0x3b8] sm:$0xf]
    %v524 = vld [vmem:[%s284 + $0x3bc] sm:$0xf]
    %v525 = vld [vmem:[%s284 + $0x3c0] sm:$0xf]
    %v526 = vld [vmem:[%s284 + $0x3c4] sm:$0xf]
    %v527 = vld [vmem:[%s284 + $0x3c8] sm:$0xf]
    %v528 = vld [vmem:[%s284 + $0x3cc] sm:$0xf]
    %v529 = vld [vmem:[%s284 + $0x3d0] sm:$0xf]
    %v530 = vld [vmem:[%s284 + $0x3d4] sm:$0xf]
    %v531 = vld [vmem:[%s284 + $0x3d8] sm:$0xf]
    %v532 = vld [vmem:[%s284 + $0x3dc] sm:$0xf]
    %v533 = vld [vmem:[%s284 + $0x3e0] sm:$0xf]
    %v534 = vld [vmem:[%s284 + $0x3e4] sm:$0xf]
    %v535 = vld [vmem:[%s284 + $0x3e8] sm:$0xf]
    %v536 = vld [vmem:[%s284 + $0x3ec] sm:$0xf]
    %v537 = vld [vmem:[%s284 + $0x3f0] sm:$0xf]
    %v538 = vld [vmem:[%s284 + $0x3f4] sm:$0xf]
    %v539 = vld [vmem:[%s284 + $0x3f8] sm:$0xf]
    %v540 = vld [vmem:[%s284 + $0x3fc] sm:$0xf]
    %s541 = smul.addr %s281, 4
    %s542 = scalar_lea.vmem %s4, %s541
    %v543 = vld [vmem:[%s542] sm:$0xf]
    %v544 = vld [vmem:[%s542 + $0x4] sm:$0xf]
    %v545 = vld [vmem:[%s542 + $0x8] sm:$0xf]
    %v546 = vld [vmem:[%s542 + $0xc] sm:$0xf]
    %v547 = vld [vmem:[%s542 + $0x10] sm:$0xf]
    %v548 = vld [vmem:[%s542 + $0x14] sm:$0xf]
    %v549 = vld [vmem:[%s542 + $0x18] sm:$0xf]
    %v550 = vld [vmem:[%s542 + $0x1c] sm:$0xf]
    %v551 = vld [vmem:[%s542 + $0x20] sm:$0xf]
    %v552 = vld [vmem:[%s542 + $0x24] sm:$0xf]
    %v553 = vld [vmem:[%s542 + $0x28] sm:$0xf]
    %v554 = vld [vmem:[%s542 + $0x2c] sm:$0xf]
    %v555 = vld [vmem:[%s542 + $0x30] sm:$0xf]
    %v556 = vld [vmem:[%s542 + $0x34] sm:$0xf]
    %v557 = vld [vmem:[%s542 + $0x38] sm:$0xf]
    %v558 = vld [vmem:[%s542 + $0x3c] sm:$0xf]
    %v559 = vld [vmem:[%s542 + $0x40] sm:$0xf]
    %v560 = vld [vmem:[%s542 + $0x44] sm:$0xf]
    %v561 = vld [vmem:[%s542 + $0x48] sm:$0xf]
    %v562 = vld [vmem:[%s542 + $0x4c] sm:$0xf]
    %v563 = vld [vmem:[%s542 + $0x50] sm:$0xf]
    %v564 = vld [vmem:[%s542 + $0x54] sm:$0xf]
    %v565 = vld [vmem:[%s542 + $0x58] sm:$0xf]
    %v566 = vld [vmem:[%s542 + $0x5c] sm:$0xf]
    %v567 = vld [vmem:[%s542 + $0x60] sm:$0xf]
    %v568 = vld [vmem:[%s542 + $0x64] sm:$0xf]
    %v569 = vld [vmem:[%s542 + $0x68] sm:$0xf]
    %v570 = vld [vmem:[%s542 + $0x6c] sm:$0xf]
    %v571 = vld [vmem:[%s542 + $0x70] sm:$0xf]
    %v572 = vld [vmem:[%s542 + $0x74] sm:$0xf]
    %v573 = vld [vmem:[%s542 + $0x78] sm:$0xf]
    %v574 = vld [vmem:[%s542 + $0x7c] sm:$0xf]
    %v575 = vld [vmem:[%s542 + $0x80] sm:$0xf]
    %v576 = vld [vmem:[%s542 + $0x84] sm:$0xf]
    %v577 = vld [vmem:[%s542 + $0x88] sm:$0xf]
    %v578 = vld [vmem:[%s542 + $0x8c] sm:$0xf]
    %v579 = vld [vmem:[%s542 + $0x90] sm:$0xf]
    %v580 = vld [vmem:[%s542 + $0x94] sm:$0xf]
    %v581 = vld [vmem:[%s542 + $0x98] sm:$0xf]
    %v582 = vld [vmem:[%s542 + $0x9c] sm:$0xf]
    %v583 = vld [vmem:[%s542 + $0xa0] sm:$0xf]
    %v584 = vld [vmem:[%s542 + $0xa4] sm:$0xf]
    %v585 = vld [vmem:[%s542 + $0xa8] sm:$0xf]
    %v586 = vld [vmem:[%s542 + $0xac] sm:$0xf]
    %v587 = vld [vmem:[%s542 + $0xb0] sm:$0xf]
    %v588 = vld [vmem:[%s542 + $0xb4] sm:$0xf]
    %v589 = vld [vmem:[%s542 + $0xb8] sm:$0xf]
    %v590 = vld [vmem:[%s542 + $0xbc] sm:$0xf]
    %v591 = vld [vmem:[%s542 + $0xc0] sm:$0xf]
    %v592 = vld [vmem:[%s542 + $0xc4] sm:$0xf]
    %v593 = vld [vmem:[%s542 + $0xc8] sm:$0xf]
    %v594 = vld [vmem:[%s542 + $0xcc] sm:$0xf]
    %v595 = vld [vmem:[%s542 + $0xd0] sm:$0xf]
    %v596 = vld [vmem:[%s542 + $0xd4] sm:$0xf]
    %v597 = vld [vmem:[%s542 + $0xd8] sm:$0xf]
    %v598 = vld [vmem:[%s542 + $0xdc] sm:$0xf]
    %v599 = vld [vmem:[%s542 + $0xe0] sm:$0xf]
    %v600 = vld [vmem:[%s542 + $0xe4] sm:$0xf]
    %v601 = vld [vmem:[%s542 + $0xe8] sm:$0xf]
    %v602 = vld [vmem:[%s542 + $0xec] sm:$0xf]
    %v603 = vld [vmem:[%s542 + $0xf0] sm:$0xf]
    %v604 = vld [vmem:[%s542 + $0xf4] sm:$0xf]
    %v605 = vld [vmem:[%s542 + $0xf8] sm:$0xf]
    %v606 = vld [vmem:[%s542 + $0xfc] sm:$0xf]
    %v607 = vld [vmem:[%s542 + $0x100] sm:$0xf]
    %v608 = vld [vmem:[%s542 + $0x104] sm:$0xf]
    %v609 = vld [vmem:[%s542 + $0x108] sm:$0xf]
    %v610 = vld [vmem:[%s542 + $0x10c] sm:$0xf]
    %v611 = vld [vmem:[%s542 + $0x110] sm:$0xf]
    %v612 = vld [vmem:[%s542 + $0x114] sm:$0xf]
    %v613 = vld [vmem:[%s542 + $0x118] sm:$0xf]
    %v614 = vld [vmem:[%s542 + $0x11c] sm:$0xf]
    %v615 = vld [vmem:[%s542 + $0x120] sm:$0xf]
    %v616 = vld [vmem:[%s542 + $0x124] sm:$0xf]
    %v617 = vld [vmem:[%s542 + $0x128] sm:$0xf]
    %v618 = vld [vmem:[%s542 + $0x12c] sm:$0xf]
    %v619 = vld [vmem:[%s542 + $0x130] sm:$0xf]
    %v620 = vld [vmem:[%s542 + $0x134] sm:$0xf]
    %v621 = vld [vmem:[%s542 + $0x138] sm:$0xf]
    %v622 = vld [vmem:[%s542 + $0x13c] sm:$0xf]
    %v623 = vld [vmem:[%s542 + $0x140] sm:$0xf]
    %v624 = vld [vmem:[%s542 + $0x144] sm:$0xf]
    %v625 = vld [vmem:[%s542 + $0x148] sm:$0xf]
    %v626 = vld [vmem:[%s542 + $0x14c] sm:$0xf]
    %v627 = vld [vmem:[%s542 + $0x150] sm:$0xf]
    %v628 = vld [vmem:[%s542 + $0x154] sm:$0xf]
    %v629 = vld [vmem:[%s542 + $0x158] sm:$0xf]
    %v630 = vld [vmem:[%s542 + $0x15c] sm:$0xf]
    %v631 = vld [vmem:[%s542 + $0x160] sm:$0xf]
    %v632 = vld [vmem:[%s542 + $0x164] sm:$0xf]
    %v633 = vld [vmem:[%s542 + $0x168] sm:$0xf]
    %v634 = vld [vmem:[%s542 + $0x16c] sm:$0xf]
    %v635 = vld [vmem:[%s542 + $0x170] sm:$0xf]
    %v636 = vld [vmem:[%s542 + $0x174] sm:$0xf]
    %v637 = vld [vmem:[%s542 + $0x178] sm:$0xf]
    %v638 = vld [vmem:[%s542 + $0x17c] sm:$0xf]
    %v639 = vld [vmem:[%s542 + $0x180] sm:$0xf]
    %v640 = vld [vmem:[%s542 + $0x184] sm:$0xf]
    %v641 = vld [vmem:[%s542 + $0x188] sm:$0xf]
    %v642 = vld [vmem:[%s542 + $0x18c] sm:$0xf]
    %v643 = vld [vmem:[%s542 + $0x190] sm:$0xf]
    %v644 = vld [vmem:[%s542 + $0x194] sm:$0xf]
    %v645 = vld [vmem:[%s542 + $0x198] sm:$0xf]
    %v646 = vld [vmem:[%s542 + $0x19c] sm:$0xf]
    %v647 = vld [vmem:[%s542 + $0x1a0] sm:$0xf]
    %v648 = vld [vmem:[%s542 + $0x1a4] sm:$0xf]
    %v649 = vld [vmem:[%s542 + $0x1a8] sm:$0xf]
    %v650 = vld [vmem:[%s542 + $0x1ac] sm:$0xf]
    %v651 = vld [vmem:[%s542 + $0x1b0] sm:$0xf]
    %v652 = vld [vmem:[%s542 + $0x1b4] sm:$0xf]
    %v653 = vld [vmem:[%s542 + $0x1b8] sm:$0xf]
    %v654 = vld [vmem:[%s542 + $0x1bc] sm:$0xf]
    %v655 = vld [vmem:[%s542 + $0x1c0] sm:$0xf]
    %v656 = vld [vmem:[%s542 + $0x1c4] sm:$0xf]
    %v657 = vld [vmem:[%s542 + $0x1c8] sm:$0xf]
    %v658 = vld [vmem:[%s542 + $0x1cc] sm:$0xf]
    %v659 = vld [vmem:[%s542 + $0x1d0] sm:$0xf]
    %v660 = vld [vmem:[%s542 + $0x1d4] sm:$0xf]
    %v661 = vld [vmem:[%s542 + $0x1d8] sm:$0xf]
    %v662 = vld [vmem:[%s542 + $0x1dc] sm:$0xf]
    %v663 = vld [vmem:[%s542 + $0x1e0] sm:$0xf]
    %v664 = vld [vmem:[%s542 + $0x1e4] sm:$0xf]
    %v665 = vld [vmem:[%s542 + $0x1e8] sm:$0xf]
    %v666 = vld [vmem:[%s542 + $0x1ec] sm:$0xf]
    %v667 = vld [vmem:[%s542 + $0x1f0] sm:$0xf]
    %v668 = vld [vmem:[%s542 + $0x1f4] sm:$0xf]
    %v669 = vld [vmem:[%s542 + $0x1f8] sm:$0xf]
    %v670 = vld [vmem:[%s542 + $0x1fc] sm:$0xf]
    %v671 = vld [vmem:[%s542 + $0x200] sm:$0xf]
    %v672 = vld [vmem:[%s542 + $0x204] sm:$0xf]
    %v673 = vld [vmem:[%s542 + $0x208] sm:$0xf]
    %v674 = vld [vmem:[%s542 + $0x20c] sm:$0xf]
    %v675 = vld [vmem:[%s542 + $0x210] sm:$0xf]
    %v676 = vld [vmem:[%s542 + $0x214] sm:$0xf]
    %v677 = vld [vmem:[%s542 + $0x218] sm:$0xf]
    %v678 = vld [vmem:[%s542 + $0x21c] sm:$0xf]
    %v679 = vld [vmem:[%s542 + $0x220] sm:$0xf]
    %v680 = vld [vmem:[%s542 + $0x224] sm:$0xf]
    %v681 = vld [vmem:[%s542 + $0x228] sm:$0xf]
    %v682 = vld [vmem:[%s542 + $0x22c] sm:$0xf]
    %v683 = vld [vmem:[%s542 + $0x230] sm:$0xf]
    %v684 = vld [vmem:[%s542 + $0x234] sm:$0xf]
    %v685 = vld [vmem:[%s542 + $0x238] sm:$0xf]
    %v686 = vld [vmem:[%s542 + $0x23c] sm:$0xf]
    %v687 = vld [vmem:[%s542 + $0x240] sm:$0xf]
    %v688 = vld [vmem:[%s542 + $0x244] sm:$0xf]
    %v689 = vld [vmem:[%s542 + $0x248] sm:$0xf]
    %v690 = vld [vmem:[%s542 + $0x24c] sm:$0xf]
    %v691 = vld [vmem:[%s542 + $0x250] sm:$0xf]
    %v692 = vld [vmem:[%s542 + $0x254] sm:$0xf]
    %v693 = vld [vmem:[%s542 + $0x258] sm:$0xf]
    %v694 = vld [vmem:[%s542 + $0x25c] sm:$0xf]
    %v695 = vld [vmem:[%s542 + $0x260] sm:$0xf]
    %v696 = vld [vmem:[%s542 + $0x264] sm:$0xf]
    %v697 = vld [vmem:[%s542 + $0x268] sm:$0xf]
    %v698 = vld [vmem:[%s542 + $0x26c] sm:$0xf]
    %v699 = vld [vmem:[%s542 + $0x270] sm:$0xf]
    %v700 = vld [vmem:[%s542 + $0x274] sm:$0xf]
    %v701 = vld [vmem:[%s542 + $0x278] sm:$0xf]
    %v702 = vld [vmem:[%s542 + $0x27c] sm:$0xf]
    %v703 = vld [vmem:[%s542 + $0x280] sm:$0xf]
    %v704 = vld [vmem:[%s542 + $0x284] sm:$0xf]
    %v705 = vld [vmem:[%s542 + $0x288] sm:$0xf]
    %v706 = vld [vmem:[%s542 + $0x28c] sm:$0xf]
    %v707 = vld [vmem:[%s542 + $0x290] sm:$0xf]
    %v708 = vld [vmem:[%s542 + $0x294] sm:$0xf]
    %v709 = vld [vmem:[%s542 + $0x298] sm:$0xf]
    %v710 = vld [vmem:[%s542 + $0x29c] sm:$0xf]
    %v711 = vld [vmem:[%s542 + $0x2a0] sm:$0xf]
    %v712 = vld [vmem:[%s542 + $0x2a4] sm:$0xf]
    %v713 = vld [vmem:[%s542 + $0x2a8] sm:$0xf]
    %v714 = vld [vmem:[%s542 + $0x2ac] sm:$0xf]
    %v715 = vld [vmem:[%s542 + $0x2b0] sm:$0xf]
    %v716 = vld [vmem:[%s542 + $0x2b4] sm:$0xf]
    %v717 = vld [vmem:[%s542 + $0x2b8] sm:$0xf]
    %v718 = vld [vmem:[%s542 + $0x2bc] sm:$0xf]
    %v719 = vld [vmem:[%s542 + $0x2c0] sm:$0xf]
    %v720 = vld [vmem:[%s542 + $0x2c4] sm:$0xf]
    %v721 = vld [vmem:[%s542 + $0x2c8] sm:$0xf]
    %v722 = vld [vmem:[%s542 + $0x2cc] sm:$0xf]
    %v723 = vld [vmem:[%s542 + $0x2d0] sm:$0xf]
    %v724 = vld [vmem:[%s542 + $0x2d4] sm:$0xf]
    %v725 = vld [vmem:[%s542 + $0x2d8] sm:$0xf]
    %v726 = vld [vmem:[%s542 + $0x2dc] sm:$0xf]
    %v727 = vld [vmem:[%s542 + $0x2e0] sm:$0xf]
    %v728 = vld [vmem:[%s542 + $0x2e4] sm:$0xf]
    %v729 = vld [vmem:[%s542 + $0x2e8] sm:$0xf]
    %v730 = vld [vmem:[%s542 + $0x2ec] sm:$0xf]
    %v731 = vld [vmem:[%s542 + $0x2f0] sm:$0xf]
    %v732 = vld [vmem:[%s542 + $0x2f4] sm:$0xf]
    %v733 = vld [vmem:[%s542 + $0x2f8] sm:$0xf]
    %v734 = vld [vmem:[%s542 + $0x2fc] sm:$0xf]
    %v735 = vld [vmem:[%s542 + $0x300] sm:$0xf]
    %v736 = vld [vmem:[%s542 + $0x304] sm:$0xf]
    %v737 = vld [vmem:[%s542 + $0x308] sm:$0xf]
    %v738 = vld [vmem:[%s542 + $0x30c] sm:$0xf]
    %v739 = vld [vmem:[%s542 + $0x310] sm:$0xf]
    %v740 = vld [vmem:[%s542 + $0x314] sm:$0xf]
    %v741 = vld [vmem:[%s542 + $0x318] sm:$0xf]
    %v742 = vld [vmem:[%s542 + $0x31c] sm:$0xf]
    %v743 = vld [vmem:[%s542 + $0x320] sm:$0xf]
    %v744 = vld [vmem:[%s542 + $0x324] sm:$0xf]
    %v745 = vld [vmem:[%s542 + $0x328] sm:$0xf]
    %v746 = vld [vmem:[%s542 + $0x32c] sm:$0xf]
    %v747 = vld [vmem:[%s542 + $0x330] sm:$0xf]
    %v748 = vld [vmem:[%s542 + $0x334] sm:$0xf]
    %v749 = vld [vmem:[%s542 + $0x338] sm:$0xf]
    %v750 = vld [vmem:[%s542 + $0x33c] sm:$0xf]
    %v751 = vld [vmem:[%s542 + $0x340] sm:$0xf]
    %v752 = vld [vmem:[%s542 + $0x344] sm:$0xf]
    %v753 = vld [vmem:[%s542 + $0x348] sm:$0xf]
    %v754 = vld [vmem:[%s542 + $0x34c] sm:$0xf]
    %v755 = vld [vmem:[%s542 + $0x350] sm:$0xf]
    %v756 = vld [vmem:[%s542 + $0x354] sm:$0xf]
    %v757 = vld [vmem:[%s542 + $0x358] sm:$0xf]
    %v758 = vld [vmem:[%s542 + $0x35c] sm:$0xf]
    %v759 = vld [vmem:[%s542 + $0x360] sm:$0xf]
    %v760 = vld [vmem:[%s542 + $0x364] sm:$0xf]
    %v761 = vld [vmem:[%s542 + $0x368] sm:$0xf]
    %v762 = vld [vmem:[%s542 + $0x36c] sm:$0xf]
    %v763 = vld [vmem:[%s542 + $0x370] sm:$0xf]
    %v764 = vld [vmem:[%s542 + $0x374] sm:$0xf]
    %v765 = vld [vmem:[%s542 + $0x378] sm:$0xf]
    %v766 = vld [vmem:[%s542 + $0x37c] sm:$0xf]
    %v767 = vld [vmem:[%s542 + $0x380] sm:$0xf]
    %v768 = vld [vmem:[%s542 + $0x384] sm:$0xf]
    %v769 = vld [vmem:[%s542 + $0x388] sm:$0xf]
    %v770 = vld [vmem:[%s542 + $0x38c] sm:$0xf]
    %v771 = vld [vmem:[%s542 + $0x390] sm:$0xf]
    %v772 = vld [vmem:[%s542 + $0x394] sm:$0xf]
    %v773 = vld [vmem:[%s542 + $0x398] sm:$0xf]
    %v774 = vld [vmem:[%s542 + $0x39c] sm:$0xf]
    %v775 = vld [vmem:[%s542 + $0x3a0] sm:$0xf]
    %v776 = vld [vmem:[%s542 + $0x3a4] sm:$0xf]
    %v777 = vld [vmem:[%s542 + $0x3a8] sm:$0xf]
    %v778 = vld [vmem:[%s542 + $0x3ac] sm:$0xf]
    %v779 = vld [vmem:[%s542 + $0x3b0] sm:$0xf]
    %v780 = vld [vmem:[%s542 + $0x3b4] sm:$0xf]
    %v781 = vld [vmem:[%s542 + $0x3b8] sm:$0xf]
    %v782 = vld [vmem:[%s542 + $0x3bc] sm:$0xf]
    %v783 = vld [vmem:[%s542 + $0x3c0] sm:$0xf]
    %v784 = vld [vmem:[%s542 + $0x3c4] sm:$0xf]
    %v785 = vld [vmem:[%s542 + $0x3c8] sm:$0xf]
    %v786 = vld [vmem:[%s542 + $0x3cc] sm:$0xf]
    %v787 = vld [vmem:[%s542 + $0x3d0] sm:$0xf]
    %v788 = vld [vmem:[%s542 + $0x3d4] sm:$0xf]
    %v789 = vld [vmem:[%s542 + $0x3d8] sm:$0xf]
    %v790 = vld [vmem:[%s542 + $0x3dc] sm:$0xf]
    %v791 = vld [vmem:[%s542 + $0x3e0] sm:$0xf]
    %v792 = vld [vmem:[%s542 + $0x3e4] sm:$0xf]
    %v793 = vld [vmem:[%s542 + $0x3e8] sm:$0xf]
    %v794 = vld [vmem:[%s542 + $0x3ec] sm:$0xf]
    %v795 = vld [vmem:[%s542 + $0x3f0] sm:$0xf]
    %v796 = vld [vmem:[%s542 + $0x3f4] sm:$0xf]
    %v797 = vld [vmem:[%s542 + $0x3f8] sm:$0xf]
    %v798 = vld [vmem:[%s542 + $0x3fc] sm:$0xf]
    %v799 = vunpack.c.l.bf16 %v543
    %v800 = vunpack.c.l.bf16 %v544
    %v801 = vunpack.c.l.bf16 %v545
    %v802 = vunpack.c.l.bf16 %v546
    %v803 = vunpack.c.l.bf16 %v547
    %v804 = vunpack.c.l.bf16 %v548
    %v805 = vunpack.c.l.bf16 %v549
    %v806 = vunpack.c.l.bf16 %v550
    %v807 = vunpack.c.l.bf16 %v551
    %v808 = vunpack.c.l.bf16 %v552
    %v809 = vunpack.c.l.bf16 %v553
    %v810 = vunpack.c.l.bf16 %v554
    %v811 = vunpack.c.l.bf16 %v555
    %v812 = vunpack.c.l.bf16 %v556
    %v813 = vunpack.c.l.bf16 %v557
    %v814 = vunpack.c.l.bf16 %v558
    %v815 = vunpack.c.l.bf16 %v559
    %v816 = vunpack.c.l.bf16 %v560
    %v817 = vunpack.c.l.bf16 %v561
    %v818 = vunpack.c.l.bf16 %v562
    %v819 = vunpack.c.l.bf16 %v563
    %v820 = vunpack.c.l.bf16 %v564
    %v821 = vunpack.c.l.bf16 %v565
    %v822 = vunpack.c.l.bf16 %v566
    %v823 = vunpack.c.l.bf16 %v567
    %v824 = vunpack.c.l.bf16 %v568
    %v825 = vunpack.c.l.bf16 %v569
    %v826 = vunpack.c.l.bf16 %v570
    %v827 = vunpack.c.l.bf16 %v571
    %v828 = vunpack.c.l.bf16 %v572
    %v829 = vunpack.c.l.bf16 %v573
    %v830 = vunpack.c.l.bf16 %v574
    %v831 = vunpack.c.l.bf16 %v575
    %v832 = vunpack.c.l.bf16 %v576
    %v833 = vunpack.c.l.bf16 %v577
    %v834 = vunpack.c.l.bf16 %v578
    %v835 = vunpack.c.l.bf16 %v579
    %v836 = vunpack.c.l.bf16 %v580
    %v837 = vunpack.c.l.bf16 %v581
    %v838 = vunpack.c.l.bf16 %v582
    %v839 = vunpack.c.l.bf16 %v583
    %v840 = vunpack.c.l.bf16 %v584
    %v841 = vunpack.c.l.bf16 %v585
    %v842 = vunpack.c.l.bf16 %v586
    %v843 = vunpack.c.l.bf16 %v587
    %v844 = vunpack.c.l.bf16 %v588
    %v845 = vunpack.c.l.bf16 %v589
    %v846 = vunpack.c.l.bf16 %v590
    %v847 = vunpack.c.l.bf16 %v591
    %v848 = vunpack.c.l.bf16 %v592
    %v849 = vunpack.c.l.bf16 %v593
    %v850 = vunpack.c.l.bf16 %v594
    %v851 = vunpack.c.l.bf16 %v595
    %v852 = vunpack.c.l.bf16 %v596
    %v853 = vunpack.c.l.bf16 %v597
    %v854 = vunpack.c.l.bf16 %v598
    %v855 = vunpack.c.l.bf16 %v599
    %v856 = vunpack.c.l.bf16 %v600
    %v857 = vunpack.c.l.bf16 %v601
    %v858 = vunpack.c.l.bf16 %v602
    %v859 = vunpack.c.l.bf16 %v603
    %v860 = vunpack.c.l.bf16 %v604
    %v861 = vunpack.c.l.bf16 %v605
    %v862 = vunpack.c.l.bf16 %v606
    %v863 = vunpack.c.l.bf16 %v607
    %v864 = vunpack.c.l.bf16 %v608
    %v865 = vunpack.c.l.bf16 %v609
    %v866 = vunpack.c.l.bf16 %v610
    %v867 = vunpack.c.l.bf16 %v611
    %v868 = vunpack.c.l.bf16 %v612
    %v869 = vunpack.c.l.bf16 %v613
    %v870 = vunpack.c.l.bf16 %v614
    %v871 = vunpack.c.l.bf16 %v615
    %v872 = vunpack.c.l.bf16 %v616
    %v873 = vunpack.c.l.bf16 %v617
    %v874 = vunpack.c.l.bf16 %v618
    %v875 = vunpack.c.l.bf16 %v619
    %v876 = vunpack.c.l.bf16 %v620
    %v877 = vunpack.c.l.bf16 %v621
    %v878 = vunpack.c.l.bf16 %v622
    %v879 = vunpack.c.l.bf16 %v623
    %v880 = vunpack.c.l.bf16 %v624
    %v881 = vunpack.c.l.bf16 %v625
    %v882 = vunpack.c.l.bf16 %v626
    %v883 = vunpack.c.l.bf16 %v627
    %v884 = vunpack.c.l.bf16 %v628
    %v885 = vunpack.c.l.bf16 %v629
    %v886 = vunpack.c.l.bf16 %v630
    %v887 = vunpack.c.l.bf16 %v631
    %v888 = vunpack.c.l.bf16 %v632
    %v889 = vunpack.c.l.bf16 %v633
    %v890 = vunpack.c.l.bf16 %v634
    %v891 = vunpack.c.l.bf16 %v635
    %v892 = vunpack.c.l.bf16 %v636
    %v893 = vunpack.c.l.bf16 %v637
    %v894 = vunpack.c.l.bf16 %v638
    %v895 = vunpack.c.l.bf16 %v639
    %v896 = vunpack.c.l.bf16 %v640
    %v897 = vunpack.c.l.bf16 %v641
    %v898 = vunpack.c.l.bf16 %v642
    %v899 = vunpack.c.l.bf16 %v643
    %v900 = vunpack.c.l.bf16 %v644
    %v901 = vunpack.c.l.bf16 %v645
    %v902 = vunpack.c.l.bf16 %v646
    %v903 = vunpack.c.l.bf16 %v647
    %v904 = vunpack.c.l.bf16 %v648
    %v905 = vunpack.c.l.bf16 %v649
    %v906 = vunpack.c.l.bf16 %v650
    %v907 = vunpack.c.l.bf16 %v651
    %v908 = vunpack.c.l.bf16 %v652
    %v909 = vunpack.c.l.bf16 %v653
    %v910 = vunpack.c.l.bf16 %v654
    %v911 = vunpack.c.l.bf16 %v655
    %v912 = vunpack.c.l.bf16 %v656
    %v913 = vunpack.c.l.bf16 %v657
    %v914 = vunpack.c.l.bf16 %v658
    %v915 = vunpack.c.l.bf16 %v659
    %v916 = vunpack.c.l.bf16 %v660
    %v917 = vunpack.c.l.bf16 %v661
    %v918 = vunpack.c.l.bf16 %v662
    %v919 = vunpack.c.l.bf16 %v663
    %v920 = vunpack.c.l.bf16 %v664
    %v921 = vunpack.c.l.bf16 %v665
    %v922 = vunpack.c.l.bf16 %v666
    %v923 = vunpack.c.l.bf16 %v667
    %v924 = vunpack.c.l.bf16 %v668
    %v925 = vunpack.c.l.bf16 %v669
    %v926 = vunpack.c.l.bf16 %v670
    %v927 = vunpack.c.l.bf16 %v671
    %v928 = vunpack.c.l.bf16 %v672
    %v929 = vunpack.c.l.bf16 %v673
    %v930 = vunpack.c.l.bf16 %v674
    %v931 = vunpack.c.l.bf16 %v675
    %v932 = vunpack.c.l.bf16 %v676
    %v933 = vunpack.c.l.bf16 %v677
    %v934 = vunpack.c.l.bf16 %v678
    %v935 = vunpack.c.l.bf16 %v679
    %v936 = vunpack.c.l.bf16 %v680
    %v937 = vunpack.c.l.bf16 %v681
    %v938 = vunpack.c.l.bf16 %v682
    %v939 = vunpack.c.l.bf16 %v683
    %v940 = vunpack.c.l.bf16 %v684
    %v941 = vunpack.c.l.bf16 %v685
    %v942 = vunpack.c.l.bf16 %v686
    %v943 = vunpack.c.l.bf16 %v687
    %v944 = vunpack.c.l.bf16 %v688
    %v945 = vunpack.c.l.bf16 %v689
    %v946 = vunpack.c.l.bf16 %v690
    %v947 = vunpack.c.l.bf16 %v691
    %v948 = vunpack.c.l.bf16 %v692
    %v949 = vunpack.c.l.bf16 %v693
    %v950 = vunpack.c.l.bf16 %v694
    %v951 = vunpack.c.l.bf16 %v695
    %v952 = vunpack.c.l.bf16 %v696
    %v953 = vunpack.c.l.bf16 %v697
    %v954 = vunpack.c.l.bf16 %v698
    %v955 = vunpack.c.l.bf16 %v699
    %v956 = vunpack.c.l.bf16 %v700
    %v957 = vunpack.c.l.bf16 %v701
    %v958 = vunpack.c.l.bf16 %v702
    %v959 = vunpack.c.l.bf16 %v703
    %v960 = vunpack.c.l.bf16 %v704
    %v961 = vunpack.c.l.bf16 %v705
    %v962 = vunpack.c.l.bf16 %v706
    %v963 = vunpack.c.l.bf16 %v707
    %v964 = vunpack.c.l.bf16 %v708
    %v965 = vunpack.c.l.bf16 %v709
    %v966 = vunpack.c.l.bf16 %v710
    %v967 = vunpack.c.l.bf16 %v711
    %v968 = vunpack.c.l.bf16 %v712
    %v969 = vunpack.c.l.bf16 %v713
    %v970 = vunpack.c.l.bf16 %v714
    %v971 = vunpack.c.l.bf16 %v715
    %v972 = vunpack.c.l.bf16 %v716
    %v973 = vunpack.c.l.bf16 %v717
    %v974 = vunpack.c.l.bf16 %v718
    %v975 = vunpack.c.l.bf16 %v719
    %v976 = vunpack.c.l.bf16 %v720
    %v977 = vunpack.c.l.bf16 %v721
    %v978 = vunpack.c.l.bf16 %v722
    %v979 = vunpack.c.l.bf16 %v723
    %v980 = vunpack.c.l.bf16 %v724
    %v981 = vunpack.c.l.bf16 %v725
    %v982 = vunpack.c.l.bf16 %v726
    %v983 = vunpack.c.l.bf16 %v727
    %v984 = vunpack.c.l.bf16 %v728
    %v985 = vunpack.c.l.bf16 %v729
    %v986 = vunpack.c.l.bf16 %v730
    %v987 = vunpack.c.l.bf16 %v731
    %v988 = vunpack.c.l.bf16 %v732
    %v989 = vunpack.c.l.bf16 %v733
    %v990 = vunpack.c.l.bf16 %v734
    %v991 = vunpack.c.l.bf16 %v735
    %v992 = vunpack.c.l.bf16 %v736
    %v993 = vunpack.c.l.bf16 %v737
    %v994 = vunpack.c.l.bf16 %v738
    %v995 = vunpack.c.l.bf16 %v739
    %v996 = vunpack.c.l.bf16 %v740
    %v997 = vunpack.c.l.bf16 %v741
    %v998 = vunpack.c.l.bf16 %v742
    %v999 = vunpack.c.l.bf16 %v743
    %v1000 = vunpack.c.l.bf16 %v744
    %v1001 = vunpack.c.l.bf16 %v745
    %v1002 = vunpack.c.l.bf16 %v746
    %v1003 = vunpack.c.l.bf16 %v747
    %v1004 = vunpack.c.l.bf16 %v748
    %v1005 = vunpack.c.l.bf16 %v749
    %v1006 = vunpack.c.l.bf16 %v750
    %v1007 = vunpack.c.l.bf16 %v751
    %v1008 = vunpack.c.l.bf16 %v752
    %v1009 = vunpack.c.l.bf16 %v753
    %v1010 = vunpack.c.l.bf16 %v754
    %v1011 = vunpack.c.l.bf16 %v755
    %v1012 = vunpack.c.l.bf16 %v756
    %v1013 = vunpack.c.l.bf16 %v757
    %v1014 = vunpack.c.l.bf16 %v758
    %v1015 = vunpack.c.l.bf16 %v759
    %v1016 = vunpack.c.l.bf16 %v760
    %v1017 = vunpack.c.l.bf16 %v761
    %v1018 = vunpack.c.l.bf16 %v762
    %v1019 = vunpack.c.l.bf16 %v763
    %v1020 = vunpack.c.l.bf16 %v764
    %v1021 = vunpack.c.l.bf16 %v765
    %v1022 = vunpack.c.l.bf16 %v766
    %v1023 = vunpack.c.l.bf16 %v767
    %v1024 = vunpack.c.l.bf16 %v768
    %v1025 = vunpack.c.l.bf16 %v769
    %v1026 = vunpack.c.l.bf16 %v770
    %v1027 = vunpack.c.l.bf16 %v771
    %v1028 = vunpack.c.l.bf16 %v772
    %v1029 = vunpack.c.l.bf16 %v773
    %v1030 = vunpack.c.l.bf16 %v774
    %v1031 = vunpack.c.l.bf16 %v775
    %v1032 = vunpack.c.l.bf16 %v776
    %v1033 = vunpack.c.l.bf16 %v777
    %v1034 = vunpack.c.l.bf16 %v778
    %v1035 = vunpack.c.l.bf16 %v779
    %v1036 = vunpack.c.l.bf16 %v780
    %v1037 = vunpack.c.l.bf16 %v781
    %v1038 = vunpack.c.l.bf16 %v782
    %v1039 = vunpack.c.l.bf16 %v783
    %v1040 = vunpack.c.l.bf16 %v784
    %v1041 = vunpack.c.l.bf16 %v785
    %v1042 = vunpack.c.l.bf16 %v786
    %v1043 = vunpack.c.l.bf16 %v787
    %v1044 = vunpack.c.l.bf16 %v788
    %v1045 = vunpack.c.l.bf16 %v789
    %v1046 = vunpack.c.l.bf16 %v790
    %v1047 = vunpack.c.l.bf16 %v791
    %v1048 = vunpack.c.l.bf16 %v792
    %v1049 = vunpack.c.l.bf16 %v793
    %v1050 = vunpack.c.l.bf16 %v794
    %v1051 = vunpack.c.l.bf16 %v795
    %v1052 = vunpack.c.l.bf16 %v796
    %v1053 = vunpack.c.l.bf16 %v797
    %v1054 = vunpack.c.l.bf16 %v798
    %1056 = vset.pattern.permute.xlu0 0
    %1057 = vperm.xlu0 %1056, %v799
    %v1058 = vpop.permute.xlu0 %1057
    %1061 = vset.pattern.permute.xlu0 0
    %1062 = vperm.xlu0 %1061, %v800
    %v1063 = vpop.permute.xlu0 %1062
    %1066 = vset.pattern.permute.xlu0 0
    %1067 = vperm.xlu0 %1066, %v801
    %v1068 = vpop.permute.xlu0 %1067
    %1071 = vset.pattern.permute.xlu0 0
    %1072 = vperm.xlu0 %1071, %v802
    %v1073 = vpop.permute.xlu0 %1072
    %1076 = vset.pattern.permute.xlu0 0
    %1077 = vperm.xlu0 %1076, %v803
    %v1078 = vpop.permute.xlu0 %1077
    %1081 = vset.pattern.permute.xlu0 0
    %1082 = vperm.xlu0 %1081, %v804
    %v1083 = vpop.permute.xlu0 %1082
    %1086 = vset.pattern.permute.xlu0 0
    %1087 = vperm.xlu0 %1086, %v805
    %v1088 = vpop.permute.xlu0 %1087
    %1091 = vset.pattern.permute.xlu0 0
    %1092 = vperm.xlu0 %1091, %v806
    %v1093 = vpop.permute.xlu0 %1092
    %1096 = vset.pattern.permute.xlu0 0
    %1097 = vperm.xlu0 %1096, %v807
    %v1098 = vpop.permute.xlu0 %1097
    %1101 = vset.pattern.permute.xlu0 0
    %1102 = vperm.xlu0 %1101, %v808
    %v1103 = vpop.permute.xlu0 %1102
    %1106 = vset.pattern.permute.xlu0 0
    %1107 = vperm.xlu0 %1106, %v809
    %v1108 = vpop.permute.xlu0 %1107
    %1111 = vset.pattern.permute.xlu0 0
    %1112 = vperm.xlu0 %1111, %v810
    %v1113 = vpop.permute.xlu0 %1112
    %1116 = vset.pattern.permute.xlu0 0
    %1117 = vperm.xlu0 %1116, %v811
    %v1118 = vpop.permute.xlu0 %1117
    %1121 = vset.pattern.permute.xlu0 0
    %1122 = vperm.xlu0 %1121, %v812
    %v1123 = vpop.permute.xlu0 %1122
    %1126 = vset.pattern.permute.xlu0 0
    %1127 = vperm.xlu0 %1126, %v813
    %v1128 = vpop.permute.xlu0 %1127
    %1131 = vset.pattern.permute.xlu0 0
    %1132 = vperm.xlu0 %1131, %v814
    %v1133 = vpop.permute.xlu0 %1132
    %1136 = vset.pattern.permute.xlu0 0
    %1137 = vperm.xlu0 %1136, %v815
    %v1138 = vpop.permute.xlu0 %1137
    %1141 = vset.pattern.permute.xlu0 0
    %1142 = vperm.xlu0 %1141, %v816
    %v1143 = vpop.permute.xlu0 %1142
    %1146 = vset.pattern.permute.xlu0 0
    %1147 = vperm.xlu0 %1146, %v817
    %v1148 = vpop.permute.xlu0 %1147
    %1151 = vset.pattern.permute.xlu0 0
    %1152 = vperm.xlu0 %1151, %v818
    %v1153 = vpop.permute.xlu0 %1152
    %1156 = vset.pattern.permute.xlu0 0
    %1157 = vperm.xlu0 %1156, %v819
    %v1158 = vpop.permute.xlu0 %1157
    %1161 = vset.pattern.permute.xlu0 0
    %1162 = vperm.xlu0 %1161, %v820
    %v1163 = vpop.permute.xlu0 %1162
    %1166 = vset.pattern.permute.xlu0 0
    %1167 = vperm.xlu0 %1166, %v821
    %v1168 = vpop.permute.xlu0 %1167
    %1171 = vset.pattern.permute.xlu0 0
    %1172 = vperm.xlu0 %1171, %v822
    %v1173 = vpop.permute.xlu0 %1172
    %1176 = vset.pattern.permute.xlu0 0
    %1177 = vperm.xlu0 %1176, %v823
    %v1178 = vpop.permute.xlu0 %1177
    %1181 = vset.pattern.permute.xlu0 0
    %1182 = vperm.xlu0 %1181, %v824
    %v1183 = vpop.permute.xlu0 %1182
    %1186 = vset.pattern.permute.xlu0 0
    %1187 = vperm.xlu0 %1186, %v825
    %v1188 = vpop.permute.xlu0 %1187
    %1191 = vset.pattern.permute.xlu0 0
    %1192 = vperm.xlu0 %1191, %v826
    %v1193 = vpop.permute.xlu0 %1192
    %1196 = vset.pattern.permute.xlu0 0
    %1197 = vperm.xlu0 %1196, %v827
    %v1198 = vpop.permute.xlu0 %1197
    %1201 = vset.pattern.permute.xlu0 0
    %1202 = vperm.xlu0 %1201, %v828
    %v1203 = vpop.permute.xlu0 %1202
    %1206 = vset.pattern.permute.xlu0 0
    %1207 = vperm.xlu0 %1206, %v829
    %v1208 = vpop.permute.xlu0 %1207
    %1211 = vset.pattern.permute.xlu0 0
    %1212 = vperm.xlu0 %1211, %v830
    %v1213 = vpop.permute.xlu0 %1212
    %1216 = vset.pattern.permute.xlu0 0
    %1217 = vperm.xlu0 %1216, %v831
    %v1218 = vpop.permute.xlu0 %1217
    %1221 = vset.pattern.permute.xlu0 0
    %1222 = vperm.xlu0 %1221, %v832
    %v1223 = vpop.permute.xlu0 %1222
    %1226 = vset.pattern.permute.xlu0 0
    %1227 = vperm.xlu0 %1226, %v833
    %v1228 = vpop.permute.xlu0 %1227
    %1231 = vset.pattern.permute.xlu0 0
    %1232 = vperm.xlu0 %1231, %v834
    %v1233 = vpop.permute.xlu0 %1232
    %1236 = vset.pattern.permute.xlu0 0
    %1237 = vperm.xlu0 %1236, %v835
    %v1238 = vpop.permute.xlu0 %1237
    %1241 = vset.pattern.permute.xlu0 0
    %1242 = vperm.xlu0 %1241, %v836
    %v1243 = vpop.permute.xlu0 %1242
    %1246 = vset.pattern.permute.xlu0 0
    %1247 = vperm.xlu0 %1246, %v837
    %v1248 = vpop.permute.xlu0 %1247
    %1251 = vset.pattern.permute.xlu0 0
    %1252 = vperm.xlu0 %1251, %v838
    %v1253 = vpop.permute.xlu0 %1252
    %1256 = vset.pattern.permute.xlu0 0
    %1257 = vperm.xlu0 %1256, %v839
    %v1258 = vpop.permute.xlu0 %1257
    %1261 = vset.pattern.permute.xlu0 0
    %1262 = vperm.xlu0 %1261, %v840
    %v1263 = vpop.permute.xlu0 %1262
    %1266 = vset.pattern.permute.xlu0 0
    %1267 = vperm.xlu0 %1266, %v841
    %v1268 = vpop.permute.xlu0 %1267
    %1271 = vset.pattern.permute.xlu0 0
    %1272 = vperm.xlu0 %1271, %v842
    %v1273 = vpop.permute.xlu0 %1272
    %1276 = vset.pattern.permute.xlu0 0
    %1277 = vperm.xlu0 %1276, %v843
    %v1278 = vpop.permute.xlu0 %1277
    %1281 = vset.pattern.permute.xlu0 0
    %1282 = vperm.xlu0 %1281, %v844
    %v1283 = vpop.permute.xlu0 %1282
    %1286 = vset.pattern.permute.xlu0 0
    %1287 = vperm.xlu0 %1286, %v845
    %v1288 = vpop.permute.xlu0 %1287
    %1291 = vset.pattern.permute.xlu0 0
    %1292 = vperm.xlu0 %1291, %v846
    %v1293 = vpop.permute.xlu0 %1292
    %1296 = vset.pattern.permute.xlu0 0
    %1297 = vperm.xlu0 %1296, %v847
    %v1298 = vpop.permute.xlu0 %1297
    %1301 = vset.pattern.permute.xlu0 0
    %1302 = vperm.xlu0 %1301, %v848
    %v1303 = vpop.permute.xlu0 %1302
    %1306 = vset.pattern.permute.xlu0 0
    %1307 = vperm.xlu0 %1306, %v849
    %v1308 = vpop.permute.xlu0 %1307
    %1311 = vset.pattern.permute.xlu0 0
    %1312 = vperm.xlu0 %1311, %v850
    %v1313 = vpop.permute.xlu0 %1312
    %1316 = vset.pattern.permute.xlu0 0
    %1317 = vperm.xlu0 %1316, %v851
    %v1318 = vpop.permute.xlu0 %1317
    %1321 = vset.pattern.permute.xlu0 0
    %1322 = vperm.xlu0 %1321, %v852
    %v1323 = vpop.permute.xlu0 %1322
    %1326 = vset.pattern.permute.xlu0 0
    %1327 = vperm.xlu0 %1326, %v853
    %v1328 = vpop.permute.xlu0 %1327
    %1331 = vset.pattern.permute.xlu0 0
    %1332 = vperm.xlu0 %1331, %v854
    %v1333 = vpop.permute.xlu0 %1332
    %1336 = vset.pattern.permute.xlu0 0
    %1337 = vperm.xlu0 %1336, %v855
    %v1338 = vpop.permute.xlu0 %1337
    %1341 = vset.pattern.permute.xlu0 0
    %1342 = vperm.xlu0 %1341, %v856
    %v1343 = vpop.permute.xlu0 %1342
    %1346 = vset.pattern.permute.xlu0 0
    %1347 = vperm.xlu0 %1346, %v857
    %v1348 = vpop.permute.xlu0 %1347
    %1351 = vset.pattern.permute.xlu0 0
    %1352 = vperm.xlu0 %1351, %v858
    %v1353 = vpop.permute.xlu0 %1352
    %1356 = vset.pattern.permute.xlu0 0
    %1357 = vperm.xlu0 %1356, %v859
    %v1358 = vpop.permute.xlu0 %1357
    %1361 = vset.pattern.permute.xlu0 0
    %1362 = vperm.xlu0 %1361, %v860
    %v1363 = vpop.permute.xlu0 %1362
    %1366 = vset.pattern.permute.xlu0 0
    %1367 = vperm.xlu0 %1366, %v861
    %v1368 = vpop.permute.xlu0 %1367
    %1371 = vset.pattern.permute.xlu0 0
    %1372 = vperm.xlu0 %1371, %v862
    %v1373 = vpop.permute.xlu0 %1372
    %1376 = vset.pattern.permute.xlu0 0
    %1377 = vperm.xlu0 %1376, %v863
    %v1378 = vpop.permute.xlu0 %1377
    %1381 = vset.pattern.permute.xlu0 0
    %1382 = vperm.xlu0 %1381, %v864
    %v1383 = vpop.permute.xlu0 %1382
    %1386 = vset.pattern.permute.xlu0 0
    %1387 = vperm.xlu0 %1386, %v865
    %v1388 = vpop.permute.xlu0 %1387
    %1391 = vset.pattern.permute.xlu0 0
    %1392 = vperm.xlu0 %1391, %v866
    %v1393 = vpop.permute.xlu0 %1392
    %1396 = vset.pattern.permute.xlu0 0
    %1397 = vperm.xlu0 %1396, %v867
    %v1398 = vpop.permute.xlu0 %1397
    %1401 = vset.pattern.permute.xlu0 0
    %1402 = vperm.xlu0 %1401, %v868
    %v1403 = vpop.permute.xlu0 %1402
    %1406 = vset.pattern.permute.xlu0 0
    %1407 = vperm.xlu0 %1406, %v869
    %v1408 = vpop.permute.xlu0 %1407
    %1411 = vset.pattern.permute.xlu0 0
    %1412 = vperm.xlu0 %1411, %v870
    %v1413 = vpop.permute.xlu0 %1412
    %1416 = vset.pattern.permute.xlu0 0
    %1417 = vperm.xlu0 %1416, %v871
    %v1418 = vpop.permute.xlu0 %1417
    %1421 = vset.pattern.permute.xlu0 0
    %1422 = vperm.xlu0 %1421, %v872
    %v1423 = vpop.permute.xlu0 %1422
    %1426 = vset.pattern.permute.xlu0 0
    %1427 = vperm.xlu0 %1426, %v873
    %v1428 = vpop.permute.xlu0 %1427
    %1431 = vset.pattern.permute.xlu0 0
    %1432 = vperm.xlu0 %1431, %v874
    %v1433 = vpop.permute.xlu0 %1432
    %1436 = vset.pattern.permute.xlu0 0
    %1437 = vperm.xlu0 %1436, %v875
    %v1438 = vpop.permute.xlu0 %1437
    %1441 = vset.pattern.permute.xlu0 0
    %1442 = vperm.xlu0 %1441, %v876
    %v1443 = vpop.permute.xlu0 %1442
    %1446 = vset.pattern.permute.xlu0 0
    %1447 = vperm.xlu0 %1446, %v877
    %v1448 = vpop.permute.xlu0 %1447
    %1451 = vset.pattern.permute.xlu0 0
    %1452 = vperm.xlu0 %1451, %v878
    %v1453 = vpop.permute.xlu0 %1452
    %1456 = vset.pattern.permute.xlu0 0
    %1457 = vperm.xlu0 %1456, %v879
    %v1458 = vpop.permute.xlu0 %1457
    %1461 = vset.pattern.permute.xlu0 0
    %1462 = vperm.xlu0 %1461, %v880
    %v1463 = vpop.permute.xlu0 %1462
    %1466 = vset.pattern.permute.xlu0 0
    %1467 = vperm.xlu0 %1466, %v881
    %v1468 = vpop.permute.xlu0 %1467
    %1471 = vset.pattern.permute.xlu0 0
    %1472 = vperm.xlu0 %1471, %v882
    %v1473 = vpop.permute.xlu0 %1472
    %1476 = vset.pattern.permute.xlu0 0
    %1477 = vperm.xlu0 %1476, %v883
    %v1478 = vpop.permute.xlu0 %1477
    %1481 = vset.pattern.permute.xlu0 0
    %1482 = vperm.xlu0 %1481, %v884
    %v1483 = vpop.permute.xlu0 %1482
    %1486 = vset.pattern.permute.xlu0 0
    %1487 = vperm.xlu0 %1486, %v885
    %v1488 = vpop.permute.xlu0 %1487
    %1491 = vset.pattern.permute.xlu0 0
    %1492 = vperm.xlu0 %1491, %v886
    %v1493 = vpop.permute.xlu0 %1492
    %1496 = vset.pattern.permute.xlu0 0
    %1497 = vperm.xlu0 %1496, %v887
    %v1498 = vpop.permute.xlu0 %1497
    %1501 = vset.pattern.permute.xlu0 0
    %1502 = vperm.xlu0 %1501, %v888
    %v1503 = vpop.permute.xlu0 %1502
    %1506 = vset.pattern.permute.xlu0 0
    %1507 = vperm.xlu0 %1506, %v889
    %v1508 = vpop.permute.xlu0 %1507
    %1511 = vset.pattern.permute.xlu0 0
    %1512 = vperm.xlu0 %1511, %v890
    %v1513 = vpop.permute.xlu0 %1512
    %1516 = vset.pattern.permute.xlu0 0
    %1517 = vperm.xlu0 %1516, %v891
    %v1518 = vpop.permute.xlu0 %1517
    %1521 = vset.pattern.permute.xlu0 0
    %1522 = vperm.xlu0 %1521, %v892
    %v1523 = vpop.permute.xlu0 %1522
    %1526 = vset.pattern.permute.xlu0 0
    %1527 = vperm.xlu0 %1526, %v893
    %v1528 = vpop.permute.xlu0 %1527
    %1531 = vset.pattern.permute.xlu0 0
    %1532 = vperm.xlu0 %1531, %v894
    %v1533 = vpop.permute.xlu0 %1532
    %1536 = vset.pattern.permute.xlu0 0
    %1537 = vperm.xlu0 %1536, %v895
    %v1538 = vpop.permute.xlu0 %1537
    %1541 = vset.pattern.permute.xlu0 0
    %1542 = vperm.xlu0 %1541, %v896
    %v1543 = vpop.permute.xlu0 %1542
    %1546 = vset.pattern.permute.xlu0 0
    %1547 = vperm.xlu0 %1546, %v897
    %v1548 = vpop.permute.xlu0 %1547
    %1551 = vset.pattern.permute.xlu0 0
    %1552 = vperm.xlu0 %1551, %v898
    %v1553 = vpop.permute.xlu0 %1552
    %1556 = vset.pattern.permute.xlu0 0
    %1557 = vperm.xlu0 %1556, %v899
    %v1558 = vpop.permute.xlu0 %1557
    %1561 = vset.pattern.permute.xlu0 0
    %1562 = vperm.xlu0 %1561, %v900
    %v1563 = vpop.permute.xlu0 %1562
    %1566 = vset.pattern.permute.xlu0 0
    %1567 = vperm.xlu0 %1566, %v901
    %v1568 = vpop.permute.xlu0 %1567
    %1571 = vset.pattern.permute.xlu0 0
    %1572 = vperm.xlu0 %1571, %v902
    %v1573 = vpop.permute.xlu0 %1572
    %1576 = vset.pattern.permute.xlu0 0
    %1577 = vperm.xlu0 %1576, %v903
    %v1578 = vpop.permute.xlu0 %1577
    %1581 = vset.pattern.permute.xlu0 0
    %1582 = vperm.xlu0 %1581, %v904
    %v1583 = vpop.permute.xlu0 %1582
    %1586 = vset.pattern.permute.xlu0 0
    %1587 = vperm.xlu0 %1586, %v905
    %v1588 = vpop.permute.xlu0 %1587
    %1591 = vset.pattern.permute.xlu0 0
    %1592 = vperm.xlu0 %1591, %v906
    %v1593 = vpop.permute.xlu0 %1592
    %1596 = vset.pattern.permute.xlu0 0
    %1597 = vperm.xlu0 %1596, %v907
    %v1598 = vpop.permute.xlu0 %1597
    %1601 = vset.pattern.permute.xlu0 0
    %1602 = vperm.xlu0 %1601, %v908
    %v1603 = vpop.permute.xlu0 %1602
    %1606 = vset.pattern.permute.xlu0 0
    %1607 = vperm.xlu0 %1606, %v909
    %v1608 = vpop.permute.xlu0 %1607
    %1611 = vset.pattern.permute.xlu0 0
    %1612 = vperm.xlu0 %1611, %v910
    %v1613 = vpop.permute.xlu0 %1612
    %1616 = vset.pattern.permute.xlu0 0
    %1617 = vperm.xlu0 %1616, %v911
    %v1618 = vpop.permute.xlu0 %1617
    %1621 = vset.pattern.permute.xlu0 0
    %1622 = vperm.xlu0 %1621, %v912
    %v1623 = vpop.permute.xlu0 %1622
    %1626 = vset.pattern.permute.xlu0 0
    %1627 = vperm.xlu0 %1626, %v913
    %v1628 = vpop.permute.xlu0 %1627
    %1631 = vset.pattern.permute.xlu0 0
    %1632 = vperm.xlu0 %1631, %v914
    %v1633 = vpop.permute.xlu0 %1632
    %1636 = vset.pattern.permute.xlu0 0
    %1637 = vperm.xlu0 %1636, %v915
    %v1638 = vpop.permute.xlu0 %1637
    %1641 = vset.pattern.permute.xlu0 0
    %1642 = vperm.xlu0 %1641, %v916
    %v1643 = vpop.permute.xlu0 %1642
    %1646 = vset.pattern.permute.xlu0 0
    %1647 = vperm.xlu0 %1646, %v917
    %v1648 = vpop.permute.xlu0 %1647
    %1651 = vset.pattern.permute.xlu0 0
    %1652 = vperm.xlu0 %1651, %v918
    %v1653 = vpop.permute.xlu0 %1652
    %1656 = vset.pattern.permute.xlu0 0
    %1657 = vperm.xlu0 %1656, %v919
    %v1658 = vpop.permute.xlu0 %1657
    %1661 = vset.pattern.permute.xlu0 0
    %1662 = vperm.xlu0 %1661, %v920
    %v1663 = vpop.permute.xlu0 %1662
    %1666 = vset.pattern.permute.xlu0 0
    %1667 = vperm.xlu0 %1666, %v921
    %v1668 = vpop.permute.xlu0 %1667
    %1671 = vset.pattern.permute.xlu0 0
    %1672 = vperm.xlu0 %1671, %v922
    %v1673 = vpop.permute.xlu0 %1672
    %1676 = vset.pattern.permute.xlu0 0
    %1677 = vperm.xlu0 %1676, %v923
    %v1678 = vpop.permute.xlu0 %1677
    %1681 = vset.pattern.permute.xlu0 0
    %1682 = vperm.xlu0 %1681, %v924
    %v1683 = vpop.permute.xlu0 %1682
    %1686 = vset.pattern.permute.xlu0 0
    %1687 = vperm.xlu0 %1686, %v925
    %v1688 = vpop.permute.xlu0 %1687
    %1691 = vset.pattern.permute.xlu0 0
    %1692 = vperm.xlu0 %1691, %v926
    %v1693 = vpop.permute.xlu0 %1692
    %1696 = vset.pattern.permute.xlu0 0
    %1697 = vperm.xlu0 %1696, %v927
    %v1698 = vpop.permute.xlu0 %1697
    %1701 = vset.pattern.permute.xlu0 0
    %1702 = vperm.xlu0 %1701, %v928
    %v1703 = vpop.permute.xlu0 %1702
    %1706 = vset.pattern.permute.xlu0 0
    %1707 = vperm.xlu0 %1706, %v929
    %v1708 = vpop.permute.xlu0 %1707
    %1711 = vset.pattern.permute.xlu0 0
    %1712 = vperm.xlu0 %1711, %v930
    %v1713 = vpop.permute.xlu0 %1712
    %1716 = vset.pattern.permute.xlu0 0
    %1717 = vperm.xlu0 %1716, %v931
    %v1718 = vpop.permute.xlu0 %1717
    %1721 = vset.pattern.permute.xlu0 0
    %1722 = vperm.xlu0 %1721, %v932
    %v1723 = vpop.permute.xlu0 %1722
    %1726 = vset.pattern.permute.xlu0 0
    %1727 = vperm.xlu0 %1726, %v933
    %v1728 = vpop.permute.xlu0 %1727
    %1731 = vset.pattern.permute.xlu0 0
    %1732 = vperm.xlu0 %1731, %v934
    %v1733 = vpop.permute.xlu0 %1732
    %1736 = vset.pattern.permute.xlu0 0
    %1737 = vperm.xlu0 %1736, %v935
    %v1738 = vpop.permute.xlu0 %1737
    %1741 = vset.pattern.permute.xlu0 0
    %1742 = vperm.xlu0 %1741, %v936
    %v1743 = vpop.permute.xlu0 %1742
    %1746 = vset.pattern.permute.xlu0 0
    %1747 = vperm.xlu0 %1746, %v937
    %v1748 = vpop.permute.xlu0 %1747
    %1751 = vset.pattern.permute.xlu0 0
    %1752 = vperm.xlu0 %1751, %v938
    %v1753 = vpop.permute.xlu0 %1752
    %1756 = vset.pattern.permute.xlu0 0
    %1757 = vperm.xlu0 %1756, %v939
    %v1758 = vpop.permute.xlu0 %1757
    %1761 = vset.pattern.permute.xlu0 0
    %1762 = vperm.xlu0 %1761, %v940
    %v1763 = vpop.permute.xlu0 %1762
    %1766 = vset.pattern.permute.xlu0 0
    %1767 = vperm.xlu0 %1766, %v941
    %v1768 = vpop.permute.xlu0 %1767
    %1771 = vset.pattern.permute.xlu0 0
    %1772 = vperm.xlu0 %1771, %v942
    %v1773 = vpop.permute.xlu0 %1772
    %1776 = vset.pattern.permute.xlu0 0
    %1777 = vperm.xlu0 %1776, %v943
    %v1778 = vpop.permute.xlu0 %1777
    %1781 = vset.pattern.permute.xlu0 0
    %1782 = vperm.xlu0 %1781, %v944
    %v1783 = vpop.permute.xlu0 %1782
    %1786 = vset.pattern.permute.xlu0 0
    %1787 = vperm.xlu0 %1786, %v945
    %v1788 = vpop.permute.xlu0 %1787
    %1791 = vset.pattern.permute.xlu0 0
    %1792 = vperm.xlu0 %1791, %v946
    %v1793 = vpop.permute.xlu0 %1792
    %1796 = vset.pattern.permute.xlu0 0
    %1797 = vperm.xlu0 %1796, %v947
    %v1798 = vpop.permute.xlu0 %1797
    %1801 = vset.pattern.permute.xlu0 0
    %1802 = vperm.xlu0 %1801, %v948
    %v1803 = vpop.permute.xlu0 %1802
    %1806 = vset.pattern.permute.xlu0 0
    %1807 = vperm.xlu0 %1806, %v949
    %v1808 = vpop.permute.xlu0 %1807
    %1811 = vset.pattern.permute.xlu0 0
    %1812 = vperm.xlu0 %1811, %v950
    %v1813 = vpop.permute.xlu0 %1812
    %1816 = vset.pattern.permute.xlu0 0
    %1817 = vperm.xlu0 %1816, %v951
    %v1818 = vpop.permute.xlu0 %1817
    %1821 = vset.pattern.permute.xlu0 0
    %1822 = vperm.xlu0 %1821, %v952
    %v1823 = vpop.permute.xlu0 %1822
    %1826 = vset.pattern.permute.xlu0 0
    %1827 = vperm.xlu0 %1826, %v953
    %v1828 = vpop.permute.xlu0 %1827
    %1831 = vset.pattern.permute.xlu0 0
    %1832 = vperm.xlu0 %1831, %v954
    %v1833 = vpop.permute.xlu0 %1832
    %1836 = vset.pattern.permute.xlu0 0
    %1837 = vperm.xlu0 %1836, %v955
    %v1838 = vpop.permute.xlu0 %1837
    %1841 = vset.pattern.permute.xlu0 0
    %1842 = vperm.xlu0 %1841, %v956
    %v1843 = vpop.permute.xlu0 %1842
    %1846 = vset.pattern.permute.xlu0 0
    %1847 = vperm.xlu0 %1846, %v957
    %v1848 = vpop.permute.xlu0 %1847
    %1851 = vset.pattern.permute.xlu0 0
    %1852 = vperm.xlu0 %1851, %v958
    %v1853 = vpop.permute.xlu0 %1852
    %1856 = vset.pattern.permute.xlu0 0
    %1857 = vperm.xlu0 %1856, %v959
    %v1858 = vpop.permute.xlu0 %1857
    %1861 = vset.pattern.permute.xlu0 0
    %1862 = vperm.xlu0 %1861, %v960
    %v1863 = vpop.permute.xlu0 %1862
    %1866 = vset.pattern.permute.xlu0 0
    %1867 = vperm.xlu0 %1866, %v961
    %v1868 = vpop.permute.xlu0 %1867
    %1871 = vset.pattern.permute.xlu0 0
    %1872 = vperm.xlu0 %1871, %v962
    %v1873 = vpop.permute.xlu0 %1872
    %1876 = vset.pattern.permute.xlu0 0
    %1877 = vperm.xlu0 %1876, %v963
    %v1878 = vpop.permute.xlu0 %1877
    %1881 = vset.pattern.permute.xlu0 0
    %1882 = vperm.xlu0 %1881, %v964
    %v1883 = vpop.permute.xlu0 %1882
    %1886 = vset.pattern.permute.xlu0 0
    %1887 = vperm.xlu0 %1886, %v965
    %v1888 = vpop.permute.xlu0 %1887
    %1891 = vset.pattern.permute.xlu0 0
    %1892 = vperm.xlu0 %1891, %v966
    %v1893 = vpop.permute.xlu0 %1892
    %1896 = vset.pattern.permute.xlu0 0
    %1897 = vperm.xlu0 %1896, %v967
    %v1898 = vpop.permute.xlu0 %1897
    %1901 = vset.pattern.permute.xlu0 0
    %1902 = vperm.xlu0 %1901, %v968
    %v1903 = vpop.permute.xlu0 %1902
    %1906 = vset.pattern.permute.xlu0 0
    %1907 = vperm.xlu0 %1906, %v969
    %v1908 = vpop.permute.xlu0 %1907
    %1911 = vset.pattern.permute.xlu0 0
    %1912 = vperm.xlu0 %1911, %v970
    %v1913 = vpop.permute.xlu0 %1912
    %1916 = vset.pattern.permute.xlu0 0
    %1917 = vperm.xlu0 %1916, %v971
    %v1918 = vpop.permute.xlu0 %1917
    %1921 = vset.pattern.permute.xlu0 0
    %1922 = vperm.xlu0 %1921, %v972
    %v1923 = vpop.permute.xlu0 %1922
    %1926 = vset.pattern.permute.xlu0 0
    %1927 = vperm.xlu0 %1926, %v973
    %v1928 = vpop.permute.xlu0 %1927
    %1931 = vset.pattern.permute.xlu0 0
    %1932 = vperm.xlu0 %1931, %v974
    %v1933 = vpop.permute.xlu0 %1932
    %1936 = vset.pattern.permute.xlu0 0
    %1937 = vperm.xlu0 %1936, %v975
    %v1938 = vpop.permute.xlu0 %1937
    %1941 = vset.pattern.permute.xlu0 0
    %1942 = vperm.xlu0 %1941, %v976
    %v1943 = vpop.permute.xlu0 %1942
    %1946 = vset.pattern.permute.xlu0 0
    %1947 = vperm.xlu0 %1946, %v977
    %v1948 = vpop.permute.xlu0 %1947
    %1951 = vset.pattern.permute.xlu0 0
    %1952 = vperm.xlu0 %1951, %v978
    %v1953 = vpop.permute.xlu0 %1952
    %1956 = vset.pattern.permute.xlu0 0
    %1957 = vperm.xlu0 %1956, %v979
    %v1958 = vpop.permute.xlu0 %1957
    %1961 = vset.pattern.permute.xlu0 0
    %1962 = vperm.xlu0 %1961, %v980
    %v1963 = vpop.permute.xlu0 %1962
    %1966 = vset.pattern.permute.xlu0 0
    %1967 = vperm.xlu0 %1966, %v981
    %v1968 = vpop.permute.xlu0 %1967
    %1971 = vset.pattern.permute.xlu0 0
    %1972 = vperm.xlu0 %1971, %v982
    %v1973 = vpop.permute.xlu0 %1972
    %1976 = vset.pattern.permute.xlu0 0
    %1977 = vperm.xlu0 %1976, %v983
    %v1978 = vpop.permute.xlu0 %1977
    %1981 = vset.pattern.permute.xlu0 0
    %1982 = vperm.xlu0 %1981, %v984
    %v1983 = vpop.permute.xlu0 %1982
    %1986 = vset.pattern.permute.xlu0 0
    %1987 = vperm.xlu0 %1986, %v985
    %v1988 = vpop.permute.xlu0 %1987
    %1991 = vset.pattern.permute.xlu0 0
    %1992 = vperm.xlu0 %1991, %v986
    %v1993 = vpop.permute.xlu0 %1992
    %1996 = vset.pattern.permute.xlu0 0
    %1997 = vperm.xlu0 %1996, %v987
    %v1998 = vpop.permute.xlu0 %1997
    %2001 = vset.pattern.permute.xlu0 0
    %2002 = vperm.xlu0 %2001, %v988
    %v2003 = vpop.permute.xlu0 %2002
    %2006 = vset.pattern.permute.xlu0 0
    %2007 = vperm.xlu0 %2006, %v989
    %v2008 = vpop.permute.xlu0 %2007
    %2011 = vset.pattern.permute.xlu0 0
    %2012 = vperm.xlu0 %2011, %v990
    %v2013 = vpop.permute.xlu0 %2012
    %2016 = vset.pattern.permute.xlu0 0
    %2017 = vperm.xlu0 %2016, %v991
    %v2018 = vpop.permute.xlu0 %2017
    %2021 = vset.pattern.permute.xlu0 0
    %2022 = vperm.xlu0 %2021, %v992
    %v2023 = vpop.permute.xlu0 %2022
    %2026 = vset.pattern.permute.xlu0 0
    %2027 = vperm.xlu0 %2026, %v993
    %v2028 = vpop.permute.xlu0 %2027
    %2031 = vset.pattern.permute.xlu0 0
    %2032 = vperm.xlu0 %2031, %v994
    %v2033 = vpop.permute.xlu0 %2032
    %2036 = vset.pattern.permute.xlu0 0
    %2037 = vperm.xlu0 %2036, %v995
    %v2038 = vpop.permute.xlu0 %2037
    %2041 = vset.pattern.permute.xlu0 0
    %2042 = vperm.xlu0 %2041, %v996
    %v2043 = vpop.permute.xlu0 %2042
    %2046 = vset.pattern.permute.xlu0 0
    %2047 = vperm.xlu0 %2046, %v997
    %v2048 = vpop.permute.xlu0 %2047
    %2051 = vset.pattern.permute.xlu0 0
    %2052 = vperm.xlu0 %2051, %v998
    %v2053 = vpop.permute.xlu0 %2052
    %2056 = vset.pattern.permute.xlu0 0
    %2057 = vperm.xlu0 %2056, %v999
    %v2058 = vpop.permute.xlu0 %2057
    %2061 = vset.pattern.permute.xlu0 0
    %2062 = vperm.xlu0 %2061, %v1000
    %v2063 = vpop.permute.xlu0 %2062
    %2066 = vset.pattern.permute.xlu0 0
    %2067 = vperm.xlu0 %2066, %v1001
    %v2068 = vpop.permute.xlu0 %2067
    %2071 = vset.pattern.permute.xlu0 0
    %2072 = vperm.xlu0 %2071, %v1002
    %v2073 = vpop.permute.xlu0 %2072
    %2076 = vset.pattern.permute.xlu0 0
    %2077 = vperm.xlu0 %2076, %v1003
    %v2078 = vpop.permute.xlu0 %2077
    %2081 = vset.pattern.permute.xlu0 0
    %2082 = vperm.xlu0 %2081, %v1004
    %v2083 = vpop.permute.xlu0 %2082
    %2086 = vset.pattern.permute.xlu0 0
    %2087 = vperm.xlu0 %2086, %v1005
    %v2088 = vpop.permute.xlu0 %2087
    %2091 = vset.pattern.permute.xlu0 0
    %2092 = vperm.xlu0 %2091, %v1006
    %v2093 = vpop.permute.xlu0 %2092
    %2096 = vset.pattern.permute.xlu0 0
    %2097 = vperm.xlu0 %2096, %v1007
    %v2098 = vpop.permute.xlu0 %2097
    %2101 = vset.pattern.permute.xlu0 0
    %2102 = vperm.xlu0 %2101, %v1008
    %v2103 = vpop.permute.xlu0 %2102
    %2106 = vset.pattern.permute.xlu0 0
    %2107 = vperm.xlu0 %2106, %v1009
    %v2108 = vpop.permute.xlu0 %2107
    %2111 = vset.pattern.permute.xlu0 0
    %2112 = vperm.xlu0 %2111, %v1010
    %v2113 = vpop.permute.xlu0 %2112
    %2116 = vset.pattern.permute.xlu0 0
    %2117 = vperm.xlu0 %2116, %v1011
    %v2118 = vpop.permute.xlu0 %2117
    %2121 = vset.pattern.permute.xlu0 0
    %2122 = vperm.xlu0 %2121, %v1012
    %v2123 = vpop.permute.xlu0 %2122
    %2126 = vset.pattern.permute.xlu0 0
    %2127 = vperm.xlu0 %2126, %v1013
    %v2128 = vpop.permute.xlu0 %2127
    %2131 = vset.pattern.permute.xlu0 0
    %2132 = vperm.xlu0 %2131, %v1014
    %v2133 = vpop.permute.xlu0 %2132
    %2136 = vset.pattern.permute.xlu0 0
    %2137 = vperm.xlu0 %2136, %v1015
    %v2138 = vpop.permute.xlu0 %2137
    %2141 = vset.pattern.permute.xlu0 0
    %2142 = vperm.xlu0 %2141, %v1016
    %v2143 = vpop.permute.xlu0 %2142
    %2146 = vset.pattern.permute.xlu0 0
    %2147 = vperm.xlu0 %2146, %v1017
    %v2148 = vpop.permute.xlu0 %2147
    %2151 = vset.pattern.permute.xlu0 0
    %2152 = vperm.xlu0 %2151, %v1018
    %v2153 = vpop.permute.xlu0 %2152
    %2156 = vset.pattern.permute.xlu0 0
    %2157 = vperm.xlu0 %2156, %v1019
    %v2158 = vpop.permute.xlu0 %2157
    %2161 = vset.pattern.permute.xlu0 0
    %2162 = vperm.xlu0 %2161, %v1020
    %v2163 = vpop.permute.xlu0 %2162
    %2166 = vset.pattern.permute.xlu0 0
    %2167 = vperm.xlu0 %2166, %v1021
    %v2168 = vpop.permute.xlu0 %2167
    %2171 = vset.pattern.permute.xlu0 0
    %2172 = vperm.xlu0 %2171, %v1022
    %v2173 = vpop.permute.xlu0 %2172
    %2176 = vset.pattern.permute.xlu0 0
    %2177 = vperm.xlu0 %2176, %v1023
    %v2178 = vpop.permute.xlu0 %2177
    %2181 = vset.pattern.permute.xlu0 0
    %2182 = vperm.xlu0 %2181, %v1024
    %v2183 = vpop.permute.xlu0 %2182
    %2186 = vset.pattern.permute.xlu0 0
    %2187 = vperm.xlu0 %2186, %v1025
    %v2188 = vpop.permute.xlu0 %2187
    %2191 = vset.pattern.permute.xlu0 0
    %2192 = vperm.xlu0 %2191, %v1026
    %v2193 = vpop.permute.xlu0 %2192
    %2196 = vset.pattern.permute.xlu0 0
    %2197 = vperm.xlu0 %2196, %v1027
    %v2198 = vpop.permute.xlu0 %2197
    %2201 = vset.pattern.permute.xlu0 0
    %2202 = vperm.xlu0 %2201, %v1028
    %v2203 = vpop.permute.xlu0 %2202
    %2206 = vset.pattern.permute.xlu0 0
    %2207 = vperm.xlu0 %2206, %v1029
    %v2208 = vpop.permute.xlu0 %2207
    %2211 = vset.pattern.permute.xlu0 0
    %2212 = vperm.xlu0 %2211, %v1030
    %v2213 = vpop.permute.xlu0 %2212
    %2216 = vset.pattern.permute.xlu0 0
    %2217 = vperm.xlu0 %2216, %v1031
    %v2218 = vpop.permute.xlu0 %2217
    %2221 = vset.pattern.permute.xlu0 0
    %2222 = vperm.xlu0 %2221, %v1032
    %v2223 = vpop.permute.xlu0 %2222
    %2226 = vset.pattern.permute.xlu0 0
    %2227 = vperm.xlu0 %2226, %v1033
    %v2228 = vpop.permute.xlu0 %2227
    %2231 = vset.pattern.permute.xlu0 0
    %2232 = vperm.xlu0 %2231, %v1034
    %v2233 = vpop.permute.xlu0 %2232
    %2236 = vset.pattern.permute.xlu0 0
    %2237 = vperm.xlu0 %2236, %v1035
    %v2238 = vpop.permute.xlu0 %2237
    %2241 = vset.pattern.permute.xlu0 0
    %2242 = vperm.xlu0 %2241, %v1036
    %v2243 = vpop.permute.xlu0 %2242
    %2246 = vset.pattern.permute.xlu0 0
    %2247 = vperm.xlu0 %2246, %v1037
    %v2248 = vpop.permute.xlu0 %2247
    %2251 = vset.pattern.permute.xlu0 0
    %2252 = vperm.xlu0 %2251, %v1038
    %v2253 = vpop.permute.xlu0 %2252
    %2256 = vset.pattern.permute.xlu0 0
    %2257 = vperm.xlu0 %2256, %v1039
    %v2258 = vpop.permute.xlu0 %2257
    %2261 = vset.pattern.permute.xlu0 0
    %2262 = vperm.xlu0 %2261, %v1040
    %v2263 = vpop.permute.xlu0 %2262
    %2266 = vset.pattern.permute.xlu0 0
    %2267 = vperm.xlu0 %2266, %v1041
    %v2268 = vpop.permute.xlu0 %2267
    %2271 = vset.pattern.permute.xlu0 0
    %2272 = vperm.xlu0 %2271, %v1042
    %v2273 = vpop.permute.xlu0 %2272
    %2276 = vset.pattern.permute.xlu0 0
    %2277 = vperm.xlu0 %2276, %v1043
    %v2278 = vpop.permute.xlu0 %2277
    %2281 = vset.pattern.permute.xlu0 0
    %2282 = vperm.xlu0 %2281, %v1044
    %v2283 = vpop.permute.xlu0 %2282
    %2286 = vset.pattern.permute.xlu0 0
    %2287 = vperm.xlu0 %2286, %v1045
    %v2288 = vpop.permute.xlu0 %2287
    %2291 = vset.pattern.permute.xlu0 0
    %2292 = vperm.xlu0 %2291, %v1046
    %v2293 = vpop.permute.xlu0 %2292
    %2296 = vset.pattern.permute.xlu0 0
    %2297 = vperm.xlu0 %2296, %v1047
    %v2298 = vpop.permute.xlu0 %2297
    %2301 = vset.pattern.permute.xlu0 0
    %2302 = vperm.xlu0 %2301, %v1048
    %v2303 = vpop.permute.xlu0 %2302
    %2306 = vset.pattern.permute.xlu0 0
    %2307 = vperm.xlu0 %2306, %v1049
    %v2308 = vpop.permute.xlu0 %2307
    %2311 = vset.pattern.permute.xlu0 0
    %2312 = vperm.xlu0 %2311, %v1050
    %v2313 = vpop.permute.xlu0 %2312
    %2316 = vset.pattern.permute.xlu0 0
    %2317 = vperm.xlu0 %2316, %v1051
    %v2318 = vpop.permute.xlu0 %2317
    %2321 = vset.pattern.permute.xlu0 0
    %2322 = vperm.xlu0 %2321, %v1052
    %v2323 = vpop.permute.xlu0 %2322
    %2326 = vset.pattern.permute.xlu0 0
    %2327 = vperm.xlu0 %2326, %v1053
    %v2328 = vpop.permute.xlu0 %2327
    %2331 = vset.pattern.permute.xlu0 0
    %2332 = vperm.xlu0 %2331, %v1054
    %v2333 = vpop.permute.xlu0 %2332
    %v2591 = vunpack.c.l.b16 %v285
    %v2592 = vunpack.c.l.b16 %v286
    %v2593 = vunpack.c.l.b16 %v287
    %v2594 = vunpack.c.l.b16 %v288
    %v2595 = vunpack.c.l.b16 %v289
    %v2596 = vunpack.c.l.b16 %v290
    %v2597 = vunpack.c.l.b16 %v291
    %v2598 = vunpack.c.l.b16 %v292
    %v2599 = vunpack.c.l.b16 %v293
    %v2600 = vunpack.c.l.b16 %v294
    %v2601 = vunpack.c.l.b16 %v295
    %v2602 = vunpack.c.l.b16 %v296
    %v2603 = vunpack.c.l.b16 %v297
    %v2604 = vunpack.c.l.b16 %v298
    %v2605 = vunpack.c.l.b16 %v299
    %v2606 = vunpack.c.l.b16 %v300
    %v2607 = vunpack.c.l.b16 %v301
    %v2608 = vunpack.c.l.b16 %v302
    %v2609 = vunpack.c.l.b16 %v303
    %v2610 = vunpack.c.l.b16 %v304
    %v2611 = vunpack.c.l.b16 %v305
    %v2612 = vunpack.c.l.b16 %v306
    %v2613 = vunpack.c.l.b16 %v307
    %v2614 = vunpack.c.l.b16 %v308
    %v2615 = vunpack.c.l.b16 %v309
    %v2616 = vunpack.c.l.b16 %v310
    %v2617 = vunpack.c.l.b16 %v311
    %v2618 = vunpack.c.l.b16 %v312
    %v2619 = vunpack.c.l.b16 %v313
    %v2620 = vunpack.c.l.b16 %v314
    %v2621 = vunpack.c.l.b16 %v315
    %v2622 = vunpack.c.l.b16 %v316
    %v2623 = vunpack.c.l.b16 %v317
    %v2624 = vunpack.c.l.b16 %v318
    %v2625 = vunpack.c.l.b16 %v319
    %v2626 = vunpack.c.l.b16 %v320
    %v2627 = vunpack.c.l.b16 %v321
    %v2628 = vunpack.c.l.b16 %v322
    %v2629 = vunpack.c.l.b16 %v323
    %v2630 = vunpack.c.l.b16 %v324
    %v2631 = vunpack.c.l.b16 %v325
    %v2632 = vunpack.c.l.b16 %v326
    %v2633 = vunpack.c.l.b16 %v327
    %v2634 = vunpack.c.l.b16 %v328
    %v2635 = vunpack.c.l.b16 %v329
    %v2636 = vunpack.c.l.b16 %v330
    %v2637 = vunpack.c.l.b16 %v331
    %v2638 = vunpack.c.l.b16 %v332
    %v2639 = vunpack.c.l.b16 %v333
    %v2640 = vunpack.c.l.b16 %v334
    %v2641 = vunpack.c.l.b16 %v335
    %v2642 = vunpack.c.l.b16 %v336
    %v2643 = vunpack.c.l.b16 %v337
    %v2644 = vunpack.c.l.b16 %v338
    %v2645 = vunpack.c.l.b16 %v339
    %v2646 = vunpack.c.l.b16 %v340
    %v2647 = vunpack.c.l.b16 %v341
    %v2648 = vunpack.c.l.b16 %v342
    %v2649 = vunpack.c.l.b16 %v343
    %v2650 = vunpack.c.l.b16 %v344
    %v2651 = vunpack.c.l.b16 %v345
    %v2652 = vunpack.c.l.b16 %v346
    %v2653 = vunpack.c.l.b16 %v347
    %v2654 = vunpack.c.l.b16 %v348
    %v2655 = vunpack.c.l.b16 %v349
    %v2656 = vunpack.c.l.b16 %v350
    %v2657 = vunpack.c.l.b16 %v351
    %v2658 = vunpack.c.l.b16 %v352
    %v2659 = vunpack.c.l.b16 %v353
    %v2660 = vunpack.c.l.b16 %v354
    %v2661 = vunpack.c.l.b16 %v355
    %v2662 = vunpack.c.l.b16 %v356
    %v2663 = vunpack.c.l.b16 %v357
    %v2664 = vunpack.c.l.b16 %v358
    %v2665 = vunpack.c.l.b16 %v359
    %v2666 = vunpack.c.l.b16 %v360
    %v2667 = vunpack.c.l.b16 %v361
    %v2668 = vunpack.c.l.b16 %v362
    %v2669 = vunpack.c.l.b16 %v363
    %v2670 = vunpack.c.l.b16 %v364
    %v2671 = vunpack.c.l.b16 %v365
    %v2672 = vunpack.c.l.b16 %v366
    %v2673 = vunpack.c.l.b16 %v367
    %v2674 = vunpack.c.l.b16 %v368
    %v2675 = vunpack.c.l.b16 %v369
    %v2676 = vunpack.c.l.b16 %v370
    %v2677 = vunpack.c.l.b16 %v371
    %v2678 = vunpack.c.l.b16 %v372
    %v2679 = vunpack.c.l.b16 %v373
    %v2680 = vunpack.c.l.b16 %v374
    %v2681 = vunpack.c.l.b16 %v375
    %v2682 = vunpack.c.l.b16 %v376
    %v2683 = vunpack.c.l.b16 %v377
    %v2684 = vunpack.c.l.b16 %v378
    %v2685 = vunpack.c.l.b16 %v379
    %v2686 = vunpack.c.l.b16 %v380
    %v2687 = vunpack.c.l.b16 %v381
    %v2688 = vunpack.c.l.b16 %v382
    %v2689 = vunpack.c.l.b16 %v383
    %v2690 = vunpack.c.l.b16 %v384
    %v2691 = vunpack.c.l.b16 %v385
    %v2692 = vunpack.c.l.b16 %v386
    %v2693 = vunpack.c.l.b16 %v387
    %v2694 = vunpack.c.l.b16 %v388
    %v2695 = vunpack.c.l.b16 %v389
    %v2696 = vunpack.c.l.b16 %v390
    %v2697 = vunpack.c.l.b16 %v391
    %v2698 = vunpack.c.l.b16 %v392
    %v2699 = vunpack.c.l.b16 %v393
    %v2700 = vunpack.c.l.b16 %v394
    %v2701 = vunpack.c.l.b16 %v395
    %v2702 = vunpack.c.l.b16 %v396
    %v2703 = vunpack.c.l.b16 %v397
    %v2704 = vunpack.c.l.b16 %v398
    %v2705 = vunpack.c.l.b16 %v399
    %v2706 = vunpack.c.l.b16 %v400
    %v2707 = vunpack.c.l.b16 %v401
    %v2708 = vunpack.c.l.b16 %v402
    %v2709 = vunpack.c.l.b16 %v403
    %v2710 = vunpack.c.l.b16 %v404
    %v2711 = vunpack.c.l.b16 %v405
    %v2712 = vunpack.c.l.b16 %v406
    %v2713 = vunpack.c.l.b16 %v407
    %v2714 = vunpack.c.l.b16 %v408
    %v2715 = vunpack.c.l.b16 %v409
    %v2716 = vunpack.c.l.b16 %v410
    %v2717 = vunpack.c.l.b16 %v411
    %v2718 = vunpack.c.l.b16 %v412
    %v2719 = vunpack.c.l.b16 %v413
    %v2720 = vunpack.c.l.b16 %v414
    %v2721 = vunpack.c.l.b16 %v415
    %v2722 = vunpack.c.l.b16 %v416
    %v2723 = vunpack.c.l.b16 %v417
    %v2724 = vunpack.c.l.b16 %v418
    %v2725 = vunpack.c.l.b16 %v419
    %v2726 = vunpack.c.l.b16 %v420
    %v2727 = vunpack.c.l.b16 %v421
    %v2728 = vunpack.c.l.b16 %v422
    %v2729 = vunpack.c.l.b16 %v423
    %v2730 = vunpack.c.l.b16 %v424
    %v2731 = vunpack.c.l.b16 %v425
    %v2732 = vunpack.c.l.b16 %v426
    %v2733 = vunpack.c.l.b16 %v427
    %v2734 = vunpack.c.l.b16 %v428
    %v2735 = vunpack.c.l.b16 %v429
    %v2736 = vunpack.c.l.b16 %v430
    %v2737 = vunpack.c.l.b16 %v431
    %v2738 = vunpack.c.l.b16 %v432
    %v2739 = vunpack.c.l.b16 %v433
    %v2740 = vunpack.c.l.b16 %v434
    %v2741 = vunpack.c.l.b16 %v435
    %v2742 = vunpack.c.l.b16 %v436
    %v2743 = vunpack.c.l.b16 %v437
    %v2744 = vunpack.c.l.b16 %v438
    %v2745 = vunpack.c.l.b16 %v439
    %v2746 = vunpack.c.l.b16 %v440
    %v2747 = vunpack.c.l.b16 %v441
    %v2748 = vunpack.c.l.b16 %v442
    %v2749 = vunpack.c.l.b16 %v443
    %v2750 = vunpack.c.l.b16 %v444
    %v2751 = vunpack.c.l.b16 %v445
    %v2752 = vunpack.c.l.b16 %v446
    %v2753 = vunpack.c.l.b16 %v447
    %v2754 = vunpack.c.l.b16 %v448
    %v2755 = vunpack.c.l.b16 %v449
    %v2756 = vunpack.c.l.b16 %v450
    %v2757 = vunpack.c.l.b16 %v451
    %v2758 = vunpack.c.l.b16 %v452
    %v2759 = vunpack.c.l.b16 %v453
    %v2760 = vunpack.c.l.b16 %v454
    %v2761 = vunpack.c.l.b16 %v455
    %v2762 = vunpack.c.l.b16 %v456
    %v2763 = vunpack.c.l.b16 %v457
    %v2764 = vunpack.c.l.b16 %v458
    %v2765 = vunpack.c.l.b16 %v459
    %v2766 = vunpack.c.l.b16 %v460
    %v2767 = vunpack.c.l.b16 %v461
    %v2768 = vunpack.c.l.b16 %v462
    %v2769 = vunpack.c.l.b16 %v463
    %v2770 = vunpack.c.l.b16 %v464
    %v2771 = vunpack.c.l.b16 %v465
    %v2772 = vunpack.c.l.b16 %v466
    %v2773 = vunpack.c.l.b16 %v467
    %v2774 = vunpack.c.l.b16 %v468
    %v2775 = vunpack.c.l.b16 %v469
    %v2776 = vunpack.c.l.b16 %v470
    %v2777 = vunpack.c.l.b16 %v471
    %v2778 = vunpack.c.l.b16 %v472
    %v2779 = vunpack.c.l.b16 %v473
    %v2780 = vunpack.c.l.b16 %v474
    %v2781 = vunpack.c.l.b16 %v475
    %v2782 = vunpack.c.l.b16 %v476
    %v2783 = vunpack.c.l.b16 %v477
    %v2784 = vunpack.c.l.b16 %v478
    %v2785 = vunpack.c.l.b16 %v479
    %v2786 = vunpack.c.l.b16 %v480
    %v2787 = vunpack.c.l.b16 %v481
    %v2788 = vunpack.c.l.b16 %v482
    %v2789 = vunpack.c.l.b16 %v483
    %v2790 = vunpack.c.l.b16 %v484
    %v2791 = vunpack.c.l.b16 %v485
    %v2792 = vunpack.c.l.b16 %v486
    %v2793 = vunpack.c.l.b16 %v487
    %v2794 = vunpack.c.l.b16 %v488
    %v2795 = vunpack.c.l.b16 %v489
    %v2796 = vunpack.c.l.b16 %v490
    %v2797 = vunpack.c.l.b16 %v491
    %v2798 = vunpack.c.l.b16 %v492
    %v2799 = vunpack.c.l.b16 %v493
    %v2800 = vunpack.c.l.b16 %v494
    %v2801 = vunpack.c.l.b16 %v495
    %v2802 = vunpack.c.l.b16 %v496
    %v2803 = vunpack.c.l.b16 %v497
    %v2804 = vunpack.c.l.b16 %v498
    %v2805 = vunpack.c.l.b16 %v499
    %v2806 = vunpack.c.l.b16 %v500
    %v2807 = vunpack.c.l.b16 %v501
    %v2808 = vunpack.c.l.b16 %v502
    %v2809 = vunpack.c.l.b16 %v503
    %v2810 = vunpack.c.l.b16 %v504
    %v2811 = vunpack.c.l.b16 %v505
    %v2812 = vunpack.c.l.b16 %v506
    %v2813 = vunpack.c.l.b16 %v507
    %v2814 = vunpack.c.l.b16 %v508
    %v2815 = vunpack.c.l.b16 %v509
    %v2816 = vunpack.c.l.b16 %v510
    %v2817 = vunpack.c.l.b16 %v511
    %v2818 = vunpack.c.l.b16 %v512
    %v2819 = vunpack.c.l.b16 %v513
    %v2820 = vunpack.c.l.b16 %v514
    %v2821 = vunpack.c.l.b16 %v515
    %v2822 = vunpack.c.l.b16 %v516
    %v2823 = vunpack.c.l.b16 %v517
    %v2824 = vunpack.c.l.b16 %v518
    %v2825 = vunpack.c.l.b16 %v519
    %v2826 = vunpack.c.l.b16 %v520
    %v2827 = vunpack.c.l.b16 %v521
    %v2828 = vunpack.c.l.b16 %v522
    %v2829 = vunpack.c.l.b16 %v523
    %v2830 = vunpack.c.l.b16 %v524
    %v2831 = vunpack.c.l.b16 %v525
    %v2832 = vunpack.c.l.b16 %v526
    %v2833 = vunpack.c.l.b16 %v527
    %v2834 = vunpack.c.l.b16 %v528
    %v2835 = vunpack.c.l.b16 %v529
    %v2836 = vunpack.c.l.b16 %v530
    %v2837 = vunpack.c.l.b16 %v531
    %v2838 = vunpack.c.l.b16 %v532
    %v2839 = vunpack.c.l.b16 %v533
    %v2840 = vunpack.c.l.b16 %v534
    %v2841 = vunpack.c.l.b16 %v535
    %v2842 = vunpack.c.l.b16 %v536
    %v2843 = vunpack.c.l.b16 %v537
    %v2844 = vunpack.c.l.b16 %v538
    %v2845 = vunpack.c.l.b16 %v539
    %v2846 = vunpack.c.l.b16 %v540
    %v2847 = vpack.c.b16 %v2592, %v2591
    %v2848 = vpack.c.b16 %v2594, %v2593
    %v2849 = vpack.c.b16 %v2596, %v2595
    %v2850 = vpack.c.b16 %v2598, %v2597
    %v2851 = vpack.c.b16 %v2600, %v2599
    %v2852 = vpack.c.b16 %v2602, %v2601
    %v2853 = vpack.c.b16 %v2604, %v2603
    %v2854 = vpack.c.b16 %v2606, %v2605
    %v2855 = vpack.c.b16 %v2608, %v2607
    %v2856 = vpack.c.b16 %v2610, %v2609
    %v2857 = vpack.c.b16 %v2612, %v2611
    %v2858 = vpack.c.b16 %v2614, %v2613
    %v2859 = vpack.c.b16 %v2616, %v2615
    %v2860 = vpack.c.b16 %v2618, %v2617
    %v2861 = vpack.c.b16 %v2620, %v2619
    %v2862 = vpack.c.b16 %v2622, %v2621
    %v2863 = vpack.c.b16 %v2624, %v2623
    %v2864 = vpack.c.b16 %v2626, %v2625
    %v2865 = vpack.c.b16 %v2628, %v2627
    %v2866 = vpack.c.b16 %v2630, %v2629
    %v2867 = vpack.c.b16 %v2632, %v2631
    %v2868 = vpack.c.b16 %v2634, %v2633
    %v2869 = vpack.c.b16 %v2636, %v2635
    %v2870 = vpack.c.b16 %v2638, %v2637
    %v2871 = vpack.c.b16 %v2640, %v2639
    %v2872 = vpack.c.b16 %v2642, %v2641
    %v2873 = vpack.c.b16 %v2644, %v2643
    %v2874 = vpack.c.b16 %v2646, %v2645
    %v2875 = vpack.c.b16 %v2648, %v2647
    %v2876 = vpack.c.b16 %v2650, %v2649
    %v2877 = vpack.c.b16 %v2652, %v2651
    %v2878 = vpack.c.b16 %v2654, %v2653
    %v2879 = vpack.c.b16 %v2656, %v2655
    %v2880 = vpack.c.b16 %v2658, %v2657
    %v2881 = vpack.c.b16 %v2660, %v2659
    %v2882 = vpack.c.b16 %v2662, %v2661
    %v2883 = vpack.c.b16 %v2664, %v2663
    %v2884 = vpack.c.b16 %v2666, %v2665
    %v2885 = vpack.c.b16 %v2668, %v2667
    %v2886 = vpack.c.b16 %v2670, %v2669
    %v2887 = vpack.c.b16 %v2672, %v2671
    %v2888 = vpack.c.b16 %v2674, %v2673
    %v2889 = vpack.c.b16 %v2676, %v2675
    %v2890 = vpack.c.b16 %v2678, %v2677
    %v2891 = vpack.c.b16 %v2680, %v2679
    %v2892 = vpack.c.b16 %v2682, %v2681
    %v2893 = vpack.c.b16 %v2684, %v2683
    %v2894 = vpack.c.b16 %v2686, %v2685
    %v2895 = vpack.c.b16 %v2688, %v2687
    %v2896 = vpack.c.b16 %v2690, %v2689
    %v2897 = vpack.c.b16 %v2692, %v2691
    %v2898 = vpack.c.b16 %v2694, %v2693
    %v2899 = vpack.c.b16 %v2696, %v2695
    %v2900 = vpack.c.b16 %v2698, %v2697
    %v2901 = vpack.c.b16 %v2700, %v2699
    %v2902 = vpack.c.b16 %v2702, %v2701
    %v2903 = vpack.c.b16 %v2704, %v2703
    %v2904 = vpack.c.b16 %v2706, %v2705
    %v2905 = vpack.c.b16 %v2708, %v2707
    %v2906 = vpack.c.b16 %v2710, %v2709
    %v2907 = vpack.c.b16 %v2712, %v2711
    %v2908 = vpack.c.b16 %v2714, %v2713
    %v2909 = vpack.c.b16 %v2716, %v2715
    %v2910 = vpack.c.b16 %v2718, %v2717
    %v2911 = vpack.c.b16 %v2720, %v2719
    %v2912 = vpack.c.b16 %v2722, %v2721
    %v2913 = vpack.c.b16 %v2724, %v2723
    %v2914 = vpack.c.b16 %v2726, %v2725
    %v2915 = vpack.c.b16 %v2728, %v2727
    %v2916 = vpack.c.b16 %v2730, %v2729
    %v2917 = vpack.c.b16 %v2732, %v2731
    %v2918 = vpack.c.b16 %v2734, %v2733
    %v2919 = vpack.c.b16 %v2736, %v2735
    %v2920 = vpack.c.b16 %v2738, %v2737
    %v2921 = vpack.c.b16 %v2740, %v2739
    %v2922 = vpack.c.b16 %v2742, %v2741
    %v2923 = vpack.c.b16 %v2744, %v2743
    %v2924 = vpack.c.b16 %v2746, %v2745
    %v2925 = vpack.c.b16 %v2748, %v2747
    %v2926 = vpack.c.b16 %v2750, %v2749
    %v2927 = vpack.c.b16 %v2752, %v2751
    %v2928 = vpack.c.b16 %v2754, %v2753
    %v2929 = vpack.c.b16 %v2756, %v2755
    %v2930 = vpack.c.b16 %v2758, %v2757
    %v2931 = vpack.c.b16 %v2760, %v2759
    %v2932 = vpack.c.b16 %v2762, %v2761
    %v2933 = vpack.c.b16 %v2764, %v2763
    %v2934 = vpack.c.b16 %v2766, %v2765
    %v2935 = vpack.c.b16 %v2768, %v2767
    %v2936 = vpack.c.b16 %v2770, %v2769
    %v2937 = vpack.c.b16 %v2772, %v2771
    %v2938 = vpack.c.b16 %v2774, %v2773
    %v2939 = vpack.c.b16 %v2776, %v2775
    %v2940 = vpack.c.b16 %v2778, %v2777
    %v2941 = vpack.c.b16 %v2780, %v2779
    %v2942 = vpack.c.b16 %v2782, %v2781
    %v2943 = vpack.c.b16 %v2784, %v2783
    %v2944 = vpack.c.b16 %v2786, %v2785
    %v2945 = vpack.c.b16 %v2788, %v2787
    %v2946 = vpack.c.b16 %v2790, %v2789
    %v2947 = vpack.c.b16 %v2792, %v2791
    %v2948 = vpack.c.b16 %v2794, %v2793
    %v2949 = vpack.c.b16 %v2796, %v2795
    %v2950 = vpack.c.b16 %v2798, %v2797
    %v2951 = vpack.c.b16 %v2800, %v2799
    %v2952 = vpack.c.b16 %v2802, %v2801
    %v2953 = vpack.c.b16 %v2804, %v2803
    %v2954 = vpack.c.b16 %v2806, %v2805
    %v2955 = vpack.c.b16 %v2808, %v2807
    %v2956 = vpack.c.b16 %v2810, %v2809
    %v2957 = vpack.c.b16 %v2812, %v2811
    %v2958 = vpack.c.b16 %v2814, %v2813
    %v2959 = vpack.c.b16 %v2816, %v2815
    %v2960 = vpack.c.b16 %v2818, %v2817
    %v2961 = vpack.c.b16 %v2820, %v2819
    %v2962 = vpack.c.b16 %v2822, %v2821
    %v2963 = vpack.c.b16 %v2824, %v2823
    %v2964 = vpack.c.b16 %v2826, %v2825
    %v2965 = vpack.c.b16 %v2828, %v2827
    %v2966 = vpack.c.b16 %v2830, %v2829
    %v2967 = vpack.c.b16 %v2832, %v2831
    %v2968 = vpack.c.b16 %v2834, %v2833
    %v2969 = vpack.c.b16 %v2836, %v2835
    %v2970 = vpack.c.b16 %v2838, %v2837
    %v2971 = vpack.c.b16 %v2840, %v2839
    %v2972 = vpack.c.b16 %v2842, %v2841
    %v2973 = vpack.c.b16 %v2844, %v2843
    %v2974 = vpack.c.b16 %v2846, %v2845
    %3103 = vmatpush.bf16.msra.mxu0 %v273
    %3104 = vmatpush.bf16.msra.mxu0 %v272
    %3105 = vmatpush.bf16.msra.mxu0 %v271
    %3106 = vmatpush.bf16.msra.mxu0 %v270
    %3107 = vmatpush.bf16.msra.mxu0 %v269
    %3108 = vmatpush.bf16.msra.mxu0 %v268
    %3109 = vmatpush.bf16.msra.mxu0 %v267
    %3110 = vmatpush.bf16.msra.mxu0 %v266
    %3111 = vmatmul.bf16.gmra.mxu0 %v2847
    %v3112 = vpop.f32.mrf.mxu0
    %v3113 = vadd.f32 %v1058, %v3112
    %v3114 = vpop.f32.mrf.mxu0
    %v3115 = vadd.f32 %v1063, %v3114
    %3116 = vmatmul.bf16.gmra.mxu0 %v2848
    %v3117 = vpop.f32.mrf.mxu0
    %v3118 = vadd.f32 %v1068, %v3117
    %v3119 = vpop.f32.mrf.mxu0
    %v3120 = vadd.f32 %v1073, %v3119
    %3121 = vmatmul.bf16.gmra.mxu0 %v2849
    %v3122 = vpop.f32.mrf.mxu0
    %v3123 = vadd.f32 %v1078, %v3122
    %v3124 = vpop.f32.mrf.mxu0
    %v3125 = vadd.f32 %v1083, %v3124
    %3126 = vmatmul.bf16.gmra.mxu0 %v2850
    %v3127 = vpop.f32.mrf.mxu0
    %v3128 = vadd.f32 %v1088, %v3127
    %v3129 = vpop.f32.mrf.mxu0
    %v3130 = vadd.f32 %v1093, %v3129
    %3131 = vmatmul.bf16.gmra.mxu0 %v2851
    %v3132 = vpop.f32.mrf.mxu0
    %v3133 = vadd.f32 %v1098, %v3132
    %v3134 = vpop.f32.mrf.mxu0
    %v3135 = vadd.f32 %v1103, %v3134
    %3136 = vmatmul.bf16.gmra.mxu0 %v2852
    %v3137 = vpop.f32.mrf.mxu0
    %v3138 = vadd.f32 %v1108, %v3137
    %v3139 = vpop.f32.mrf.mxu0
    %v3140 = vadd.f32 %v1113, %v3139
    %3141 = vmatmul.bf16.gmra.mxu0 %v2853
    %v3142 = vpop.f32.mrf.mxu0
    %v3143 = vadd.f32 %v1118, %v3142
    %v3144 = vpop.f32.mrf.mxu0
    %v3145 = vadd.f32 %v1123, %v3144
    %3146 = vmatmul.bf16.gmra.mxu0 %v2854
    %v3147 = vpop.f32.mrf.mxu0
    %v3148 = vadd.f32 %v1128, %v3147
    %v3149 = vpop.f32.mrf.mxu0
    %v3150 = vadd.f32 %v1133, %v3149
    %3151 = vmatmul.bf16.gmra.mxu0 %v2855
    %v3152 = vpop.f32.mrf.mxu0
    %v3153 = vadd.f32 %v1138, %v3152
    %v3154 = vpop.f32.mrf.mxu0
    %v3155 = vadd.f32 %v1143, %v3154
    %3156 = vmatmul.bf16.gmra.mxu0 %v2856
    %v3157 = vpop.f32.mrf.mxu0
    %v3158 = vadd.f32 %v1148, %v3157
    %v3159 = vpop.f32.mrf.mxu0
    %v3160 = vadd.f32 %v1153, %v3159
    %3161 = vmatmul.bf16.gmra.mxu0 %v2857
    %v3162 = vpop.f32.mrf.mxu0
    %v3163 = vadd.f32 %v1158, %v3162
    %v3164 = vpop.f32.mrf.mxu0
    %v3165 = vadd.f32 %v1163, %v3164
    %3166 = vmatmul.bf16.gmra.mxu0 %v2858
    %v3167 = vpop.f32.mrf.mxu0
    %v3168 = vadd.f32 %v1168, %v3167
    %v3169 = vpop.f32.mrf.mxu0
    %v3170 = vadd.f32 %v1173, %v3169
    %3171 = vmatmul.bf16.gmra.mxu0 %v2859
    %v3172 = vpop.f32.mrf.mxu0
    %v3173 = vadd.f32 %v1178, %v3172
    %v3174 = vpop.f32.mrf.mxu0
    %v3175 = vadd.f32 %v1183, %v3174
    %3176 = vmatmul.bf16.gmra.mxu0 %v2860
    %v3177 = vpop.f32.mrf.mxu0
    %v3178 = vadd.f32 %v1188, %v3177
    %v3179 = vpop.f32.mrf.mxu0
    %v3180 = vadd.f32 %v1193, %v3179
    %3181 = vmatmul.bf16.gmra.mxu0 %v2861
    %v3182 = vpop.f32.mrf.mxu0
    %v3183 = vadd.f32 %v1198, %v3182
    %v3184 = vpop.f32.mrf.mxu0
    %v3185 = vadd.f32 %v1203, %v3184
    %3186 = vmatmul.bf16.gmra.mxu0 %v2862
    %v3187 = vpop.f32.mrf.mxu0
    %v3188 = vadd.f32 %v1208, %v3187
    %v3189 = vpop.f32.mrf.mxu0
    %v3190 = vadd.f32 %v1213, %v3189
    %3191 = vmatmul.bf16.gmra.mxu0 %v2863
    %v3192 = vpop.f32.mrf.mxu0
    %v3193 = vadd.f32 %v1218, %v3192
    %v3194 = vpop.f32.mrf.mxu0
    %v3195 = vadd.f32 %v1223, %v3194
    %3196 = vmatmul.bf16.gmra.mxu0 %v2864
    %v3197 = vpop.f32.mrf.mxu0
    %v3198 = vadd.f32 %v1228, %v3197
    %v3199 = vpop.f32.mrf.mxu0
    %v3200 = vadd.f32 %v1233, %v3199
    %3201 = vmatmul.bf16.gmra.mxu0 %v2865
    %v3202 = vpop.f32.mrf.mxu0
    %v3203 = vadd.f32 %v1238, %v3202
    %v3204 = vpop.f32.mrf.mxu0
    %v3205 = vadd.f32 %v1243, %v3204
    %3206 = vmatmul.bf16.gmra.mxu0 %v2866
    %v3207 = vpop.f32.mrf.mxu0
    %v3208 = vadd.f32 %v1248, %v3207
    %v3209 = vpop.f32.mrf.mxu0
    %v3210 = vadd.f32 %v1253, %v3209
    %3211 = vmatmul.bf16.gmra.mxu0 %v2867
    %v3212 = vpop.f32.mrf.mxu0
    %v3213 = vadd.f32 %v1258, %v3212
    %v3214 = vpop.f32.mrf.mxu0
    %v3215 = vadd.f32 %v1263, %v3214
    %3216 = vmatmul.bf16.gmra.mxu0 %v2868
    %v3217 = vpop.f32.mrf.mxu0
    %v3218 = vadd.f32 %v1268, %v3217
    %v3219 = vpop.f32.mrf.mxu0
    %v3220 = vadd.f32 %v1273, %v3219
    %3221 = vmatmul.bf16.gmra.mxu0 %v2869
    %v3222 = vpop.f32.mrf.mxu0
    %v3223 = vadd.f32 %v1278, %v3222
    %v3224 = vpop.f32.mrf.mxu0
    %v3225 = vadd.f32 %v1283, %v3224
    %3226 = vmatmul.bf16.gmra.mxu0 %v2870
    %v3227 = vpop.f32.mrf.mxu0
    %v3228 = vadd.f32 %v1288, %v3227
    %v3229 = vpop.f32.mrf.mxu0
    %v3230 = vadd.f32 %v1293, %v3229
    %3231 = vmatmul.bf16.gmra.mxu0 %v2871
    %v3232 = vpop.f32.mrf.mxu0
    %v3233 = vadd.f32 %v1298, %v3232
    %v3234 = vpop.f32.mrf.mxu0
    %v3235 = vadd.f32 %v1303, %v3234
    %3236 = vmatmul.bf16.gmra.mxu0 %v2872
    %v3237 = vpop.f32.mrf.mxu0
    %v3238 = vadd.f32 %v1308, %v3237
    %v3239 = vpop.f32.mrf.mxu0
    %v3240 = vadd.f32 %v1313, %v3239
    %3241 = vmatmul.bf16.gmra.mxu0 %v2873
    %v3242 = vpop.f32.mrf.mxu0
    %v3243 = vadd.f32 %v1318, %v3242
    %v3244 = vpop.f32.mrf.mxu0
    %v3245 = vadd.f32 %v1323, %v3244
    %3246 = vmatmul.bf16.gmra.mxu0 %v2874
    %v3247 = vpop.f32.mrf.mxu0
    %v3248 = vadd.f32 %v1328, %v3247
    %v3249 = vpop.f32.mrf.mxu0
    %v3250 = vadd.f32 %v1333, %v3249
    %3251 = vmatmul.bf16.gmra.mxu0 %v2875
    %v3252 = vpop.f32.mrf.mxu0
    %v3253 = vadd.f32 %v1338, %v3252
    %v3254 = vpop.f32.mrf.mxu0
    %v3255 = vadd.f32 %v1343, %v3254
    %3256 = vmatmul.bf16.gmra.mxu0 %v2876
    %v3257 = vpop.f32.mrf.mxu0
    %v3258 = vadd.f32 %v1348, %v3257
    %v3259 = vpop.f32.mrf.mxu0
    %v3260 = vadd.f32 %v1353, %v3259
    %3261 = vmatmul.bf16.gmra.mxu0 %v2877
    %v3262 = vpop.f32.mrf.mxu0
    %v3263 = vadd.f32 %v1358, %v3262
    %v3264 = vpop.f32.mrf.mxu0
    %v3265 = vadd.f32 %v1363, %v3264
    %3266 = vmatmul.bf16.gmra.mxu0 %v2878
    %v3267 = vpop.f32.mrf.mxu0
    %v3268 = vadd.f32 %v1368, %v3267
    %v3269 = vpop.f32.mrf.mxu0
    %v3270 = vadd.f32 %v1373, %v3269
    %3271 = vmatmul.bf16.gmra.mxu0 %v2879
    %v3272 = vpop.f32.mrf.mxu0
    %v3273 = vadd.f32 %v1378, %v3272
    %v3274 = vpop.f32.mrf.mxu0
    %v3275 = vadd.f32 %v1383, %v3274
    %3276 = vmatmul.bf16.gmra.mxu0 %v2880
    %v3277 = vpop.f32.mrf.mxu0
    %v3278 = vadd.f32 %v1388, %v3277
    %v3279 = vpop.f32.mrf.mxu0
    %v3280 = vadd.f32 %v1393, %v3279
    %3281 = vmatmul.bf16.gmra.mxu0 %v2881
    %v3282 = vpop.f32.mrf.mxu0
    %v3283 = vadd.f32 %v1398, %v3282
    %v3284 = vpop.f32.mrf.mxu0
    %v3285 = vadd.f32 %v1403, %v3284
    %3286 = vmatmul.bf16.gmra.mxu0 %v2882
    %v3287 = vpop.f32.mrf.mxu0
    %v3288 = vadd.f32 %v1408, %v3287
    %v3289 = vpop.f32.mrf.mxu0
    %v3290 = vadd.f32 %v1413, %v3289
    %3291 = vmatmul.bf16.gmra.mxu0 %v2883
    %v3292 = vpop.f32.mrf.mxu0
    %v3293 = vadd.f32 %v1418, %v3292
    %v3294 = vpop.f32.mrf.mxu0
    %v3295 = vadd.f32 %v1423, %v3294
    %3296 = vmatmul.bf16.gmra.mxu0 %v2884
    %v3297 = vpop.f32.mrf.mxu0
    %v3298 = vadd.f32 %v1428, %v3297
    %v3299 = vpop.f32.mrf.mxu0
    %v3300 = vadd.f32 %v1433, %v3299
    %3301 = vmatmul.bf16.gmra.mxu0 %v2885
    %v3302 = vpop.f32.mrf.mxu0
    %v3303 = vadd.f32 %v1438, %v3302
    %v3304 = vpop.f32.mrf.mxu0
    %v3305 = vadd.f32 %v1443, %v3304
    %3306 = vmatmul.bf16.gmra.mxu0 %v2886
    %v3307 = vpop.f32.mrf.mxu0
    %v3308 = vadd.f32 %v1448, %v3307
    %v3309 = vpop.f32.mrf.mxu0
    %v3310 = vadd.f32 %v1453, %v3309
    %3311 = vmatmul.bf16.gmra.mxu0 %v2887
    %v3312 = vpop.f32.mrf.mxu0
    %v3313 = vadd.f32 %v1458, %v3312
    %v3314 = vpop.f32.mrf.mxu0
    %v3315 = vadd.f32 %v1463, %v3314
    %3316 = vmatmul.bf16.gmra.mxu0 %v2888
    %v3317 = vpop.f32.mrf.mxu0
    %v3318 = vadd.f32 %v1468, %v3317
    %v3319 = vpop.f32.mrf.mxu0
    %v3320 = vadd.f32 %v1473, %v3319
    %3321 = vmatmul.bf16.gmra.mxu0 %v2889
    %v3322 = vpop.f32.mrf.mxu0
    %v3323 = vadd.f32 %v1478, %v3322
    %v3324 = vpop.f32.mrf.mxu0
    %v3325 = vadd.f32 %v1483, %v3324
    %3326 = vmatmul.bf16.gmra.mxu0 %v2890
    %v3327 = vpop.f32.mrf.mxu0
    %v3328 = vadd.f32 %v1488, %v3327
    %v3329 = vpop.f32.mrf.mxu0
    %v3330 = vadd.f32 %v1493, %v3329
    %3331 = vmatmul.bf16.gmra.mxu0 %v2891
    %v3332 = vpop.f32.mrf.mxu0
    %v3333 = vadd.f32 %v1498, %v3332
    %v3334 = vpop.f32.mrf.mxu0
    %v3335 = vadd.f32 %v1503, %v3334
    %3336 = vmatmul.bf16.gmra.mxu0 %v2892
    %v3337 = vpop.f32.mrf.mxu0
    %v3338 = vadd.f32 %v1508, %v3337
    %v3339 = vpop.f32.mrf.mxu0
    %v3340 = vadd.f32 %v1513, %v3339
    %3341 = vmatmul.bf16.gmra.mxu0 %v2893
    %v3342 = vpop.f32.mrf.mxu0
    %v3343 = vadd.f32 %v1518, %v3342
    %v3344 = vpop.f32.mrf.mxu0
    %v3345 = vadd.f32 %v1523, %v3344
    %3346 = vmatmul.bf16.gmra.mxu0 %v2894
    %v3347 = vpop.f32.mrf.mxu0
    %v3348 = vadd.f32 %v1528, %v3347
    %v3349 = vpop.f32.mrf.mxu0
    %v3350 = vadd.f32 %v1533, %v3349
    %3351 = vmatmul.bf16.gmra.mxu0 %v2895
    %v3352 = vpop.f32.mrf.mxu0
    %v3353 = vadd.f32 %v1538, %v3352
    %v3354 = vpop.f32.mrf.mxu0
    %v3355 = vadd.f32 %v1543, %v3354
    %3356 = vmatmul.bf16.gmra.mxu0 %v2896
    %v3357 = vpop.f32.mrf.mxu0
    %v3358 = vadd.f32 %v1548, %v3357
    %v3359 = vpop.f32.mrf.mxu0
    %v3360 = vadd.f32 %v1553, %v3359
    %3361 = vmatmul.bf16.gmra.mxu0 %v2897
    %v3362 = vpop.f32.mrf.mxu0
    %v3363 = vadd.f32 %v1558, %v3362
    %v3364 = vpop.f32.mrf.mxu0
    %v3365 = vadd.f32 %v1563, %v3364
    %3366 = vmatmul.bf16.gmra.mxu0 %v2898
    %v3367 = vpop.f32.mrf.mxu0
    %v3368 = vadd.f32 %v1568, %v3367
    %v3369 = vpop.f32.mrf.mxu0
    %v3370 = vadd.f32 %v1573, %v3369
    %3371 = vmatmul.bf16.gmra.mxu0 %v2899
    %v3372 = vpop.f32.mrf.mxu0
    %v3373 = vadd.f32 %v1578, %v3372
    %v3374 = vpop.f32.mrf.mxu0
    %v3375 = vadd.f32 %v1583, %v3374
    %3376 = vmatmul.bf16.gmra.mxu0 %v2900
    %v3377 = vpop.f32.mrf.mxu0
    %v3378 = vadd.f32 %v1588, %v3377
    %v3379 = vpop.f32.mrf.mxu0
    %v3380 = vadd.f32 %v1593, %v3379
    %3381 = vmatmul.bf16.gmra.mxu0 %v2901
    %v3382 = vpop.f32.mrf.mxu0
    %v3383 = vadd.f32 %v1598, %v3382
    %v3384 = vpop.f32.mrf.mxu0
    %v3385 = vadd.f32 %v1603, %v3384
    %3386 = vmatmul.bf16.gmra.mxu0 %v2902
    %v3387 = vpop.f32.mrf.mxu0
    %v3388 = vadd.f32 %v1608, %v3387
    %v3389 = vpop.f32.mrf.mxu0
    %v3390 = vadd.f32 %v1613, %v3389
    %3391 = vmatmul.bf16.gmra.mxu0 %v2903
    %v3392 = vpop.f32.mrf.mxu0
    %v3393 = vadd.f32 %v1618, %v3392
    %v3394 = vpop.f32.mrf.mxu0
    %v3395 = vadd.f32 %v1623, %v3394
    %3396 = vmatmul.bf16.gmra.mxu0 %v2904
    %v3397 = vpop.f32.mrf.mxu0
    %v3398 = vadd.f32 %v1628, %v3397
    %v3399 = vpop.f32.mrf.mxu0
    %v3400 = vadd.f32 %v1633, %v3399
    %3401 = vmatmul.bf16.gmra.mxu0 %v2905
    %v3402 = vpop.f32.mrf.mxu0
    %v3403 = vadd.f32 %v1638, %v3402
    %v3404 = vpop.f32.mrf.mxu0
    %v3405 = vadd.f32 %v1643, %v3404
    %3406 = vmatmul.bf16.gmra.mxu0 %v2906
    %v3407 = vpop.f32.mrf.mxu0
    %v3408 = vadd.f32 %v1648, %v3407
    %v3409 = vpop.f32.mrf.mxu0
    %v3410 = vadd.f32 %v1653, %v3409
    %3411 = vmatmul.bf16.gmra.mxu0 %v2907
    %v3412 = vpop.f32.mrf.mxu0
    %v3413 = vadd.f32 %v1658, %v3412
    %v3414 = vpop.f32.mrf.mxu0
    %v3415 = vadd.f32 %v1663, %v3414
    %3416 = vmatmul.bf16.gmra.mxu0 %v2908
    %v3417 = vpop.f32.mrf.mxu0
    %v3418 = vadd.f32 %v1668, %v3417
    %v3419 = vpop.f32.mrf.mxu0
    %v3420 = vadd.f32 %v1673, %v3419
    %3421 = vmatmul.bf16.gmra.mxu0 %v2909
    %v3422 = vpop.f32.mrf.mxu0
    %v3423 = vadd.f32 %v1678, %v3422
    %v3424 = vpop.f32.mrf.mxu0
    %v3425 = vadd.f32 %v1683, %v3424
    %3426 = vmatmul.bf16.gmra.mxu0 %v2910
    %v3427 = vpop.f32.mrf.mxu0
    %v3428 = vadd.f32 %v1688, %v3427
    %v3429 = vpop.f32.mrf.mxu0
    %v3430 = vadd.f32 %v1693, %v3429
    %3431 = vmatmul.bf16.gmra.mxu0 %v2911
    %v3432 = vpop.f32.mrf.mxu0
    %v3433 = vadd.f32 %v1698, %v3432
    %v3434 = vpop.f32.mrf.mxu0
    %v3435 = vadd.f32 %v1703, %v3434
    %3436 = vmatmul.bf16.gmra.mxu0 %v2912
    %v3437 = vpop.f32.mrf.mxu0
    %v3438 = vadd.f32 %v1708, %v3437
    %v3439 = vpop.f32.mrf.mxu0
    %v3440 = vadd.f32 %v1713, %v3439
    %3441 = vmatmul.bf16.gmra.mxu0 %v2913
    %v3442 = vpop.f32.mrf.mxu0
    %v3443 = vadd.f32 %v1718, %v3442
    %v3444 = vpop.f32.mrf.mxu0
    %v3445 = vadd.f32 %v1723, %v3444
    %3446 = vmatmul.bf16.gmra.mxu0 %v2914
    %v3447 = vpop.f32.mrf.mxu0
    %v3448 = vadd.f32 %v1728, %v3447
    %v3449 = vpop.f32.mrf.mxu0
    %v3450 = vadd.f32 %v1733, %v3449
    %3451 = vmatmul.bf16.gmra.mxu0 %v2915
    %v3452 = vpop.f32.mrf.mxu0
    %v3453 = vadd.f32 %v1738, %v3452
    %v3454 = vpop.f32.mrf.mxu0
    %v3455 = vadd.f32 %v1743, %v3454
    %3456 = vmatmul.bf16.gmra.mxu0 %v2916
    %v3457 = vpop.f32.mrf.mxu0
    %v3458 = vadd.f32 %v1748, %v3457
    %v3459 = vpop.f32.mrf.mxu0
    %v3460 = vadd.f32 %v1753, %v3459
    %3461 = vmatmul.bf16.gmra.mxu0 %v2917
    %v3462 = vpop.f32.mrf.mxu0
    %v3463 = vadd.f32 %v1758, %v3462
    %v3464 = vpop.f32.mrf.mxu0
    %v3465 = vadd.f32 %v1763, %v3464
    %3466 = vmatmul.bf16.gmra.mxu0 %v2918
    %v3467 = vpop.f32.mrf.mxu0
    %v3468 = vadd.f32 %v1768, %v3467
    %v3469 = vpop.f32.mrf.mxu0
    %v3470 = vadd.f32 %v1773, %v3469
    %3471 = vmatmul.bf16.gmra.mxu0 %v2919
    %v3472 = vpop.f32.mrf.mxu0
    %v3473 = vadd.f32 %v1778, %v3472
    %v3474 = vpop.f32.mrf.mxu0
    %v3475 = vadd.f32 %v1783, %v3474
    %3476 = vmatmul.bf16.gmra.mxu0 %v2920
    %v3477 = vpop.f32.mrf.mxu0
    %v3478 = vadd.f32 %v1788, %v3477
    %v3479 = vpop.f32.mrf.mxu0
    %v3480 = vadd.f32 %v1793, %v3479
    %3481 = vmatmul.bf16.gmra.mxu0 %v2921
    %v3482 = vpop.f32.mrf.mxu0
    %v3483 = vadd.f32 %v1798, %v3482
    %v3484 = vpop.f32.mrf.mxu0
    %v3485 = vadd.f32 %v1803, %v3484
    %3486 = vmatmul.bf16.gmra.mxu0 %v2922
    %v3487 = vpop.f32.mrf.mxu0
    %v3488 = vadd.f32 %v1808, %v3487
    %v3489 = vpop.f32.mrf.mxu0
    %v3490 = vadd.f32 %v1813, %v3489
    %3491 = vmatmul.bf16.gmra.mxu0 %v2923
    %v3492 = vpop.f32.mrf.mxu0
    %v3493 = vadd.f32 %v1818, %v3492
    %v3494 = vpop.f32.mrf.mxu0
    %v3495 = vadd.f32 %v1823, %v3494
    %3496 = vmatmul.bf16.gmra.mxu0 %v2924
    %v3497 = vpop.f32.mrf.mxu0
    %v3498 = vadd.f32 %v1828, %v3497
    %v3499 = vpop.f32.mrf.mxu0
    %v3500 = vadd.f32 %v1833, %v3499
    %3501 = vmatmul.bf16.gmra.mxu0 %v2925
    %v3502 = vpop.f32.mrf.mxu0
    %v3503 = vadd.f32 %v1838, %v3502
    %v3504 = vpop.f32.mrf.mxu0
    %v3505 = vadd.f32 %v1843, %v3504
    %3506 = vmatmul.bf16.gmra.mxu0 %v2926
    %v3507 = vpop.f32.mrf.mxu0
    %v3508 = vadd.f32 %v1848, %v3507
    %v3509 = vpop.f32.mrf.mxu0
    %v3510 = vadd.f32 %v1853, %v3509
    %3511 = vmatmul.bf16.gmra.mxu0 %v2927
    %v3512 = vpop.f32.mrf.mxu0
    %v3513 = vadd.f32 %v1858, %v3512
    %v3514 = vpop.f32.mrf.mxu0
    %v3515 = vadd.f32 %v1863, %v3514
    %3516 = vmatmul.bf16.gmra.mxu0 %v2928
    %v3517 = vpop.f32.mrf.mxu0
    %v3518 = vadd.f32 %v1868, %v3517
    %v3519 = vpop.f32.mrf.mxu0
    %v3520 = vadd.f32 %v1873, %v3519
    %3521 = vmatmul.bf16.gmra.mxu0 %v2929
    %v3522 = vpop.f32.mrf.mxu0
    %v3523 = vadd.f32 %v1878, %v3522
    %v3524 = vpop.f32.mrf.mxu0
    %v3525 = vadd.f32 %v1883, %v3524
    %3526 = vmatmul.bf16.gmra.mxu0 %v2930
    %v3527 = vpop.f32.mrf.mxu0
    %v3528 = vadd.f32 %v1888, %v3527
    %v3529 = vpop.f32.mrf.mxu0
    %v3530 = vadd.f32 %v1893, %v3529
    %3531 = vmatmul.bf16.gmra.mxu0 %v2931
    %v3532 = vpop.f32.mrf.mxu0
    %v3533 = vadd.f32 %v1898, %v3532
    %v3534 = vpop.f32.mrf.mxu0
    %v3535 = vadd.f32 %v1903, %v3534
    %3536 = vmatmul.bf16.gmra.mxu0 %v2932
    %v3537 = vpop.f32.mrf.mxu0
    %v3538 = vadd.f32 %v1908, %v3537
    %v3539 = vpop.f32.mrf.mxu0
    %v3540 = vadd.f32 %v1913, %v3539
    %3541 = vmatmul.bf16.gmra.mxu0 %v2933
    %v3542 = vpop.f32.mrf.mxu0
    %v3543 = vadd.f32 %v1918, %v3542
    %v3544 = vpop.f32.mrf.mxu0
    %v3545 = vadd.f32 %v1923, %v3544
    %3546 = vmatmul.bf16.gmra.mxu0 %v2934
    %v3547 = vpop.f32.mrf.mxu0
    %v3548 = vadd.f32 %v1928, %v3547
    %v3549 = vpop.f32.mrf.mxu0
    %v3550 = vadd.f32 %v1933, %v3549
    %3551 = vmatmul.bf16.gmra.mxu0 %v2935
    %v3552 = vpop.f32.mrf.mxu0
    %v3553 = vadd.f32 %v1938, %v3552
    %v3554 = vpop.f32.mrf.mxu0
    %v3555 = vadd.f32 %v1943, %v3554
    %3556 = vmatmul.bf16.gmra.mxu0 %v2936
    %v3557 = vpop.f32.mrf.mxu0
    %v3558 = vadd.f32 %v1948, %v3557
    %v3559 = vpop.f32.mrf.mxu0
    %v3560 = vadd.f32 %v1953, %v3559
    %3561 = vmatmul.bf16.gmra.mxu0 %v2937
    %v3562 = vpop.f32.mrf.mxu0
    %v3563 = vadd.f32 %v1958, %v3562
    %v3564 = vpop.f32.mrf.mxu0
    %v3565 = vadd.f32 %v1963, %v3564
    %3566 = vmatmul.bf16.gmra.mxu0 %v2938
    %v3567 = vpop.f32.mrf.mxu0
    %v3568 = vadd.f32 %v1968, %v3567
    %v3569 = vpop.f32.mrf.mxu0
    %v3570 = vadd.f32 %v1973, %v3569
    %3571 = vmatmul.bf16.gmra.mxu0 %v2939
    %v3572 = vpop.f32.mrf.mxu0
    %v3573 = vadd.f32 %v1978, %v3572
    %v3574 = vpop.f32.mrf.mxu0
    %v3575 = vadd.f32 %v1983, %v3574
    %3576 = vmatmul.bf16.gmra.mxu0 %v2940
    %v3577 = vpop.f32.mrf.mxu0
    %v3578 = vadd.f32 %v1988, %v3577
    %v3579 = vpop.f32.mrf.mxu0
    %v3580 = vadd.f32 %v1993, %v3579
    %3581 = vmatmul.bf16.gmra.mxu0 %v2941
    %v3582 = vpop.f32.mrf.mxu0
    %v3583 = vadd.f32 %v1998, %v3582
    %v3584 = vpop.f32.mrf.mxu0
    %v3585 = vadd.f32 %v2003, %v3584
    %3586 = vmatmul.bf16.gmra.mxu0 %v2942
    %v3587 = vpop.f32.mrf.mxu0
    %v3588 = vadd.f32 %v2008, %v3587
    %v3589 = vpop.f32.mrf.mxu0
    %v3590 = vadd.f32 %v2013, %v3589
    %3591 = vmatmul.bf16.gmra.mxu0 %v2943
    %v3592 = vpop.f32.mrf.mxu0
    %v3593 = vadd.f32 %v2018, %v3592
    %v3594 = vpop.f32.mrf.mxu0
    %v3595 = vadd.f32 %v2023, %v3594
    %3596 = vmatmul.bf16.gmra.mxu0 %v2944
    %v3597 = vpop.f32.mrf.mxu0
    %v3598 = vadd.f32 %v2028, %v3597
    %v3599 = vpop.f32.mrf.mxu0
    %v3600 = vadd.f32 %v2033, %v3599
    %3601 = vmatmul.bf16.gmra.mxu0 %v2945
    %v3602 = vpop.f32.mrf.mxu0
    %v3603 = vadd.f32 %v2038, %v3602
    %v3604 = vpop.f32.mrf.mxu0
    %v3605 = vadd.f32 %v2043, %v3604
    %3606 = vmatmul.bf16.gmra.mxu0 %v2946
    %v3607 = vpop.f32.mrf.mxu0
    %v3608 = vadd.f32 %v2048, %v3607
    %v3609 = vpop.f32.mrf.mxu0
    %v3610 = vadd.f32 %v2053, %v3609
    %3611 = vmatmul.bf16.gmra.mxu0 %v2947
    %v3612 = vpop.f32.mrf.mxu0
    %v3613 = vadd.f32 %v2058, %v3612
    %v3614 = vpop.f32.mrf.mxu0
    %v3615 = vadd.f32 %v2063, %v3614
    %3616 = vmatmul.bf16.gmra.mxu0 %v2948
    %v3617 = vpop.f32.mrf.mxu0
    %v3618 = vadd.f32 %v2068, %v3617
    %v3619 = vpop.f32.mrf.mxu0
    %v3620 = vadd.f32 %v2073, %v3619
    %3621 = vmatmul.bf16.gmra.mxu0 %v2949
    %v3622 = vpop.f32.mrf.mxu0
    %v3623 = vadd.f32 %v2078, %v3622
    %v3624 = vpop.f32.mrf.mxu0
    %v3625 = vadd.f32 %v2083, %v3624
    %3626 = vmatmul.bf16.gmra.mxu0 %v2950
    %v3627 = vpop.f32.mrf.mxu0
    %v3628 = vadd.f32 %v2088, %v3627
    %v3629 = vpop.f32.mrf.mxu0
    %v3630 = vadd.f32 %v2093, %v3629
    %3631 = vmatmul.bf16.gmra.mxu0 %v2951
    %v3632 = vpop.f32.mrf.mxu0
    %v3633 = vadd.f32 %v2098, %v3632
    %v3634 = vpop.f32.mrf.mxu0
    %v3635 = vadd.f32 %v2103, %v3634
    %3636 = vmatmul.bf16.gmra.mxu0 %v2952
    %v3637 = vpop.f32.mrf.mxu0
    %v3638 = vadd.f32 %v2108, %v3637
    %v3639 = vpop.f32.mrf.mxu0
    %v3640 = vadd.f32 %v2113, %v3639
    %3641 = vmatmul.bf16.gmra.mxu0 %v2953
    %v3642 = vpop.f32.mrf.mxu0
    %v3643 = vadd.f32 %v2118, %v3642
    %v3644 = vpop.f32.mrf.mxu0
    %v3645 = vadd.f32 %v2123, %v3644
    %3646 = vmatmul.bf16.gmra.mxu0 %v2954
    %v3647 = vpop.f32.mrf.mxu0
    %v3648 = vadd.f32 %v2128, %v3647
    %v3649 = vpop.f32.mrf.mxu0
    %v3650 = vadd.f32 %v2133, %v3649
    %3651 = vmatmul.bf16.gmra.mxu0 %v2955
    %v3652 = vpop.f32.mrf.mxu0
    %v3653 = vadd.f32 %v2138, %v3652
    %v3654 = vpop.f32.mrf.mxu0
    %v3655 = vadd.f32 %v2143, %v3654
    %3656 = vmatmul.bf16.gmra.mxu0 %v2956
    %v3657 = vpop.f32.mrf.mxu0
    %v3658 = vadd.f32 %v2148, %v3657
    %v3659 = vpop.f32.mrf.mxu0
    %v3660 = vadd.f32 %v2153, %v3659
    %3661 = vmatmul.bf16.gmra.mxu0 %v2957
    %v3662 = vpop.f32.mrf.mxu0
    %v3663 = vadd.f32 %v2158, %v3662
    %v3664 = vpop.f32.mrf.mxu0
    %v3665 = vadd.f32 %v2163, %v3664
    %3666 = vmatmul.bf16.gmra.mxu0 %v2958
    %v3667 = vpop.f32.mrf.mxu0
    %v3668 = vadd.f32 %v2168, %v3667
    %v3669 = vpop.f32.mrf.mxu0
    %v3670 = vadd.f32 %v2173, %v3669
    %3671 = vmatmul.bf16.gmra.mxu0 %v2959
    %v3672 = vpop.f32.mrf.mxu0
    %v3673 = vadd.f32 %v2178, %v3672
    %v3674 = vpop.f32.mrf.mxu0
    %v3675 = vadd.f32 %v2183, %v3674
    %3676 = vmatmul.bf16.gmra.mxu0 %v2960
    %v3677 = vpop.f32.mrf.mxu0
    %v3678 = vadd.f32 %v2188, %v3677
    %v3679 = vpop.f32.mrf.mxu0
    %v3680 = vadd.f32 %v2193, %v3679
    %3681 = vmatmul.bf16.gmra.mxu0 %v2961
    %v3682 = vpop.f32.mrf.mxu0
    %v3683 = vadd.f32 %v2198, %v3682
    %v3684 = vpop.f32.mrf.mxu0
    %v3685 = vadd.f32 %v2203, %v3684
    %3686 = vmatmul.bf16.gmra.mxu0 %v2962
    %v3687 = vpop.f32.mrf.mxu0
    %v3688 = vadd.f32 %v2208, %v3687
    %v3689 = vpop.f32.mrf.mxu0
    %v3690 = vadd.f32 %v2213, %v3689
    %3691 = vmatmul.bf16.gmra.mxu0 %v2963
    %v3692 = vpop.f32.mrf.mxu0
    %v3693 = vadd.f32 %v2218, %v3692
    %v3694 = vpop.f32.mrf.mxu0
    %v3695 = vadd.f32 %v2223, %v3694
    %3696 = vmatmul.bf16.gmra.mxu0 %v2964
    %v3697 = vpop.f32.mrf.mxu0
    %v3698 = vadd.f32 %v2228, %v3697
    %v3699 = vpop.f32.mrf.mxu0
    %v3700 = vadd.f32 %v2233, %v3699
    %3701 = vmatmul.bf16.gmra.mxu0 %v2965
    %v3702 = vpop.f32.mrf.mxu0
    %v3703 = vadd.f32 %v2238, %v3702
    %v3704 = vpop.f32.mrf.mxu0
    %v3705 = vadd.f32 %v2243, %v3704
    %3706 = vmatmul.bf16.gmra.mxu0 %v2966
    %v3707 = vpop.f32.mrf.mxu0
    %v3708 = vadd.f32 %v2248, %v3707
    %v3709 = vpop.f32.mrf.mxu0
    %v3710 = vadd.f32 %v2253, %v3709
    %3711 = vmatmul.bf16.gmra.mxu0 %v2967
    %v3712 = vpop.f32.mrf.mxu0
    %v3713 = vadd.f32 %v2258, %v3712
    %v3714 = vpop.f32.mrf.mxu0
    %v3715 = vadd.f32 %v2263, %v3714
    %3716 = vmatmul.bf16.gmra.mxu0 %v2968
    %v3717 = vpop.f32.mrf.mxu0
    %v3718 = vadd.f32 %v2268, %v3717
    %v3719 = vpop.f32.mrf.mxu0
    %v3720 = vadd.f32 %v2273, %v3719
    %3721 = vmatmul.bf16.gmra.mxu0 %v2969
    %v3722 = vpop.f32.mrf.mxu0
    %v3723 = vadd.f32 %v2278, %v3722
    %v3724 = vpop.f32.mrf.mxu0
    %v3725 = vadd.f32 %v2283, %v3724
    %3726 = vmatmul.bf16.gmra.mxu0 %v2970
    %v3727 = vpop.f32.mrf.mxu0
    %v3728 = vadd.f32 %v2288, %v3727
    %v3729 = vpop.f32.mrf.mxu0
    %v3730 = vadd.f32 %v2293, %v3729
    %3731 = vmatmul.bf16.gmra.mxu0 %v2971
    %v3732 = vpop.f32.mrf.mxu0
    %v3733 = vadd.f32 %v2298, %v3732
    %v3734 = vpop.f32.mrf.mxu0
    %v3735 = vadd.f32 %v2303, %v3734
    %3736 = vmatmul.bf16.gmra.mxu0 %v2972
    %v3737 = vpop.f32.mrf.mxu0
    %v3738 = vadd.f32 %v2308, %v3737
    %v3739 = vpop.f32.mrf.mxu0
    %v3740 = vadd.f32 %v2313, %v3739
    %3741 = vmatmul.bf16.gmra.mxu0 %v2973
    %v3742 = vpop.f32.mrf.mxu0
    %v3743 = vadd.f32 %v2318, %v3742
    %v3744 = vpop.f32.mrf.mxu0
    %v3745 = vadd.f32 %v2323, %v3744
    %3746 = vmatmul.bf16.gmra.mxu0 %v2974
    %v3747 = vpop.f32.mrf.mxu0
    %v3748 = vadd.f32 %v2328, %v3747
    %v3749 = vpop.f32.mrf.mxu0
    %v3750 = vadd.f32 %v2333, %v3749
    %3751 = vdwg.mxu0
    %v3752 = vpack.c.bf16 %v3113, %v3113
    %v3753 = vpack.c.bf16 %v3115, %v3115
    %v3754 = vpack.c.bf16 %v3118, %v3118
    %v3755 = vpack.c.bf16 %v3120, %v3120
    %v3756 = vpack.c.bf16 %v3123, %v3123
    %v3757 = vpack.c.bf16 %v3125, %v3125
    %v3758 = vpack.c.bf16 %v3128, %v3128
    %v3759 = vpack.c.bf16 %v3130, %v3130
    %v3760 = vpack.c.bf16 %v3133, %v3133
    %v3761 = vpack.c.bf16 %v3135, %v3135
    %v3762 = vpack.c.bf16 %v3138, %v3138
    %v3763 = vpack.c.bf16 %v3140, %v3140
    %v3764 = vpack.c.bf16 %v3143, %v3143
    %v3765 = vpack.c.bf16 %v3145, %v3145
    %v3766 = vpack.c.bf16 %v3148, %v3148
    %v3767 = vpack.c.bf16 %v3150, %v3150
    %v3768 = vpack.c.bf16 %v3153, %v3153
    %v3769 = vpack.c.bf16 %v3155, %v3155
    %v3770 = vpack.c.bf16 %v3158, %v3158
    %v3771 = vpack.c.bf16 %v3160, %v3160
    %v3772 = vpack.c.bf16 %v3163, %v3163
    %v3773 = vpack.c.bf16 %v3165, %v3165
    %v3774 = vpack.c.bf16 %v3168, %v3168
    %v3775 = vpack.c.bf16 %v3170, %v3170
    %v3776 = vpack.c.bf16 %v3173, %v3173
    %v3777 = vpack.c.bf16 %v3175, %v3175
    %v3778 = vpack.c.bf16 %v3178, %v3178
    %v3779 = vpack.c.bf16 %v3180, %v3180
    %v3780 = vpack.c.bf16 %v3183, %v3183
    %v3781 = vpack.c.bf16 %v3185, %v3185
    %v3782 = vpack.c.bf16 %v3188, %v3188
    %v3783 = vpack.c.bf16 %v3190, %v3190
    %v3784 = vpack.c.bf16 %v3193, %v3193
    %v3785 = vpack.c.bf16 %v3195, %v3195
    %v3786 = vpack.c.bf16 %v3198, %v3198
    %v3787 = vpack.c.bf16 %v3200, %v3200
    %v3788 = vpack.c.bf16 %v3203, %v3203
    %v3789 = vpack.c.bf16 %v3205, %v3205
    %v3790 = vpack.c.bf16 %v3208, %v3208
    %v3791 = vpack.c.bf16 %v3210, %v3210
    %v3792 = vpack.c.bf16 %v3213, %v3213
    %v3793 = vpack.c.bf16 %v3215, %v3215
    %v3794 = vpack.c.bf16 %v3218, %v3218
    %v3795 = vpack.c.bf16 %v3220, %v3220
    %v3796 = vpack.c.bf16 %v3223, %v3223
    %v3797 = vpack.c.bf16 %v3225, %v3225
    %v3798 = vpack.c.bf16 %v3228, %v3228
    %v3799 = vpack.c.bf16 %v3230, %v3230
    %v3800 = vpack.c.bf16 %v3233, %v3233
    %v3801 = vpack.c.bf16 %v3235, %v3235
    %v3802 = vpack.c.bf16 %v3238, %v3238
    %v3803 = vpack.c.bf16 %v3240, %v3240
    %v3804 = vpack.c.bf16 %v3243, %v3243
    %v3805 = vpack.c.bf16 %v3245, %v3245
    %v3806 = vpack.c.bf16 %v3248, %v3248
    %v3807 = vpack.c.bf16 %v3250, %v3250
    %v3808 = vpack.c.bf16 %v3253, %v3253
    %v3809 = vpack.c.bf16 %v3255, %v3255
    %v3810 = vpack.c.bf16 %v3258, %v3258
    %v3811 = vpack.c.bf16 %v3260, %v3260
    %v3812 = vpack.c.bf16 %v3263, %v3263
    %v3813 = vpack.c.bf16 %v3265, %v3265
    %v3814 = vpack.c.bf16 %v3268, %v3268
    %v3815 = vpack.c.bf16 %v3270, %v3270
    %v3816 = vpack.c.bf16 %v3273, %v3273
    %v3817 = vpack.c.bf16 %v3275, %v3275
    %v3818 = vpack.c.bf16 %v3278, %v3278
    %v3819 = vpack.c.bf16 %v3280, %v3280
    %v3820 = vpack.c.bf16 %v3283, %v3283
    %v3821 = vpack.c.bf16 %v3285, %v3285
    %v3822 = vpack.c.bf16 %v3288, %v3288
    %v3823 = vpack.c.bf16 %v3290, %v3290
    %v3824 = vpack.c.bf16 %v3293, %v3293
    %v3825 = vpack.c.bf16 %v3295, %v3295
    %v3826 = vpack.c.bf16 %v3298, %v3298
    %v3827 = vpack.c.bf16 %v3300, %v3300
    %v3828 = vpack.c.bf16 %v3303, %v3303
    %v3829 = vpack.c.bf16 %v3305, %v3305
    %v3830 = vpack.c.bf16 %v3308, %v3308
    %v3831 = vpack.c.bf16 %v3310, %v3310
    %v3832 = vpack.c.bf16 %v3313, %v3313
    %v3833 = vpack.c.bf16 %v3315, %v3315
    %v3834 = vpack.c.bf16 %v3318, %v3318
    %v3835 = vpack.c.bf16 %v3320, %v3320
    %v3836 = vpack.c.bf16 %v3323, %v3323
    %v3837 = vpack.c.bf16 %v3325, %v3325
    %v3838 = vpack.c.bf16 %v3328, %v3328
    %v3839 = vpack.c.bf16 %v3330, %v3330
    %v3840 = vpack.c.bf16 %v3333, %v3333
    %v3841 = vpack.c.bf16 %v3335, %v3335
    %v3842 = vpack.c.bf16 %v3338, %v3338
    %v3843 = vpack.c.bf16 %v3340, %v3340
    %v3844 = vpack.c.bf16 %v3343, %v3343
    %v3845 = vpack.c.bf16 %v3345, %v3345
    %v3846 = vpack.c.bf16 %v3348, %v3348
    %v3847 = vpack.c.bf16 %v3350, %v3350
    %v3848 = vpack.c.bf16 %v3353, %v3353
    %v3849 = vpack.c.bf16 %v3355, %v3355
    %v3850 = vpack.c.bf16 %v3358, %v3358
    %v3851 = vpack.c.bf16 %v3360, %v3360
    %v3852 = vpack.c.bf16 %v3363, %v3363
    %v3853 = vpack.c.bf16 %v3365, %v3365
    %v3854 = vpack.c.bf16 %v3368, %v3368
    %v3855 = vpack.c.bf16 %v3370, %v3370
    %v3856 = vpack.c.bf16 %v3373, %v3373
    %v3857 = vpack.c.bf16 %v3375, %v3375
    %v3858 = vpack.c.bf16 %v3378, %v3378
    %v3859 = vpack.c.bf16 %v3380, %v3380
    %v3860 = vpack.c.bf16 %v3383, %v3383
    %v3861 = vpack.c.bf16 %v3385, %v3385
    %v3862 = vpack.c.bf16 %v3388, %v3388
    %v3863 = vpack.c.bf16 %v3390, %v3390
    %v3864 = vpack.c.bf16 %v3393, %v3393
    %v3865 = vpack.c.bf16 %v3395, %v3395
    %v3866 = vpack.c.bf16 %v3398, %v3398
    %v3867 = vpack.c.bf16 %v3400, %v3400
    %v3868 = vpack.c.bf16 %v3403, %v3403
    %v3869 = vpack.c.bf16 %v3405, %v3405
    %v3870 = vpack.c.bf16 %v3408, %v3408
    %v3871 = vpack.c.bf16 %v3410, %v3410
    %v3872 = vpack.c.bf16 %v3413, %v3413
    %v3873 = vpack.c.bf16 %v3415, %v3415
    %v3874 = vpack.c.bf16 %v3418, %v3418
    %v3875 = vpack.c.bf16 %v3420, %v3420
    %v3876 = vpack.c.bf16 %v3423, %v3423
    %v3877 = vpack.c.bf16 %v3425, %v3425
    %v3878 = vpack.c.bf16 %v3428, %v3428
    %v3879 = vpack.c.bf16 %v3430, %v3430
    %v3880 = vpack.c.bf16 %v3433, %v3433
    %v3881 = vpack.c.bf16 %v3435, %v3435
    %v3882 = vpack.c.bf16 %v3438, %v3438
    %v3883 = vpack.c.bf16 %v3440, %v3440
    %v3884 = vpack.c.bf16 %v3443, %v3443
    %v3885 = vpack.c.bf16 %v3445, %v3445
    %v3886 = vpack.c.bf16 %v3448, %v3448
    %v3887 = vpack.c.bf16 %v3450, %v3450
    %v3888 = vpack.c.bf16 %v3453, %v3453
    %v3889 = vpack.c.bf16 %v3455, %v3455
    %v3890 = vpack.c.bf16 %v3458, %v3458
    %v3891 = vpack.c.bf16 %v3460, %v3460
    %v3892 = vpack.c.bf16 %v3463, %v3463
    %v3893 = vpack.c.bf16 %v3465, %v3465
    %v3894 = vpack.c.bf16 %v3468, %v3468
    %v3895 = vpack.c.bf16 %v3470, %v3470
    %v3896 = vpack.c.bf16 %v3473, %v3473
    %v3897 = vpack.c.bf16 %v3475, %v3475
    %v3898 = vpack.c.bf16 %v3478, %v3478
    %v3899 = vpack.c.bf16 %v3480, %v3480
    %v3900 = vpack.c.bf16 %v3483, %v3483
    %v3901 = vpack.c.bf16 %v3485, %v3485
    %v3902 = vpack.c.bf16 %v3488, %v3488
    %v3903 = vpack.c.bf16 %v3490, %v3490
    %v3904 = vpack.c.bf16 %v3493, %v3493
    %v3905 = vpack.c.bf16 %v3495, %v3495
    %v3906 = vpack.c.bf16 %v3498, %v3498
    %v3907 = vpack.c.bf16 %v3500, %v3500
    %v3908 = vpack.c.bf16 %v3503, %v3503
    %v3909 = vpack.c.bf16 %v3505, %v3505
    %v3910 = vpack.c.bf16 %v3508, %v3508
    %v3911 = vpack.c.bf16 %v3510, %v3510
    %v3912 = vpack.c.bf16 %v3513, %v3513
    %v3913 = vpack.c.bf16 %v3515, %v3515
    %v3914 = vpack.c.bf16 %v3518, %v3518
    %v3915 = vpack.c.bf16 %v3520, %v3520
    %v3916 = vpack.c.bf16 %v3523, %v3523
    %v3917 = vpack.c.bf16 %v3525, %v3525
    %v3918 = vpack.c.bf16 %v3528, %v3528
    %v3919 = vpack.c.bf16 %v3530, %v3530
    %v3920 = vpack.c.bf16 %v3533, %v3533
    %v3921 = vpack.c.bf16 %v3535, %v3535
    %v3922 = vpack.c.bf16 %v3538, %v3538
    %v3923 = vpack.c.bf16 %v3540, %v3540
    %v3924 = vpack.c.bf16 %v3543, %v3543
    %v3925 = vpack.c.bf16 %v3545, %v3545
    %v3926 = vpack.c.bf16 %v3548, %v3548
    %v3927 = vpack.c.bf16 %v3550, %v3550
    %v3928 = vpack.c.bf16 %v3553, %v3553
    %v3929 = vpack.c.bf16 %v3555, %v3555
    %v3930 = vpack.c.bf16 %v3558, %v3558
    %v3931 = vpack.c.bf16 %v3560, %v3560
    %v3932 = vpack.c.bf16 %v3563, %v3563
    %v3933 = vpack.c.bf16 %v3565, %v3565
    %v3934 = vpack.c.bf16 %v3568, %v3568
    %v3935 = vpack.c.bf16 %v3570, %v3570
    %v3936 = vpack.c.bf16 %v3573, %v3573
    %v3937 = vpack.c.bf16 %v3575, %v3575
    %v3938 = vpack.c.bf16 %v3578, %v3578
    %v3939 = vpack.c.bf16 %v3580, %v3580
    %v3940 = vpack.c.bf16 %v3583, %v3583
    %v3941 = vpack.c.bf16 %v3585, %v3585
    %v3942 = vpack.c.bf16 %v3588, %v3588
    %v3943 = vpack.c.bf16 %v3590, %v3590
    %v3944 = vpack.c.bf16 %v3593, %v3593
    %v3945 = vpack.c.bf16 %v3595, %v3595
    %v3946 = vpack.c.bf16 %v3598, %v3598
    %v3947 = vpack.c.bf16 %v3600, %v3600
    %v3948 = vpack.c.bf16 %v3603, %v3603
    %v3949 = vpack.c.bf16 %v3605, %v3605
    %v3950 = vpack.c.bf16 %v3608, %v3608
    %v3951 = vpack.c.bf16 %v3610, %v3610
    %v3952 = vpack.c.bf16 %v3613, %v3613
    %v3953 = vpack.c.bf16 %v3615, %v3615
    %v3954 = vpack.c.bf16 %v3618, %v3618
    %v3955 = vpack.c.bf16 %v3620, %v3620
    %v3956 = vpack.c.bf16 %v3623, %v3623
    %v3957 = vpack.c.bf16 %v3625, %v3625
    %v3958 = vpack.c.bf16 %v3628, %v3628
    %v3959 = vpack.c.bf16 %v3630, %v3630
    %v3960 = vpack.c.bf16 %v3633, %v3633
    %v3961 = vpack.c.bf16 %v3635, %v3635
    %v3962 = vpack.c.bf16 %v3638, %v3638
    %v3963 = vpack.c.bf16 %v3640, %v3640
    %v3964 = vpack.c.bf16 %v3643, %v3643
    %v3965 = vpack.c.bf16 %v3645, %v3645
    %v3966 = vpack.c.bf16 %v3648, %v3648
    %v3967 = vpack.c.bf16 %v3650, %v3650
    %v3968 = vpack.c.bf16 %v3653, %v3653
    %v3969 = vpack.c.bf16 %v3655, %v3655
    %v3970 = vpack.c.bf16 %v3658, %v3658
    %v3971 = vpack.c.bf16 %v3660, %v3660
    %v3972 = vpack.c.bf16 %v3663, %v3663
    %v3973 = vpack.c.bf16 %v3665, %v3665
    %v3974 = vpack.c.bf16 %v3668, %v3668
    %v3975 = vpack.c.bf16 %v3670, %v3670
    %v3976 = vpack.c.bf16 %v3673, %v3673
    %v3977 = vpack.c.bf16 %v3675, %v3675
    %v3978 = vpack.c.bf16 %v3678, %v3678
    %v3979 = vpack.c.bf16 %v3680, %v3680
    %v3980 = vpack.c.bf16 %v3683, %v3683
    %v3981 = vpack.c.bf16 %v3685, %v3685
    %v3982 = vpack.c.bf16 %v3688, %v3688
    %v3983 = vpack.c.bf16 %v3690, %v3690
    %v3984 = vpack.c.bf16 %v3693, %v3693
    %v3985 = vpack.c.bf16 %v3695, %v3695
    %v3986 = vpack.c.bf16 %v3698, %v3698
    %v3987 = vpack.c.bf16 %v3700, %v3700
    %v3988 = vpack.c.bf16 %v3703, %v3703
    %v3989 = vpack.c.bf16 %v3705, %v3705
    %v3990 = vpack.c.bf16 %v3708, %v3708
    %v3991 = vpack.c.bf16 %v3710, %v3710
    %v3992 = vpack.c.bf16 %v3713, %v3713
    %v3993 = vpack.c.bf16 %v3715, %v3715
    %v3994 = vpack.c.bf16 %v3718, %v3718
    %v3995 = vpack.c.bf16 %v3720, %v3720
    %v3996 = vpack.c.bf16 %v3723, %v3723
    %v3997 = vpack.c.bf16 %v3725, %v3725
    %v3998 = vpack.c.bf16 %v3728, %v3728
    %v3999 = vpack.c.bf16 %v3730, %v3730
    %v4000 = vpack.c.bf16 %v3733, %v3733
    %v4001 = vpack.c.bf16 %v3735, %v3735
    %v4002 = vpack.c.bf16 %v3738, %v3738
    %v4003 = vpack.c.bf16 %v3740, %v3740
    %v4004 = vpack.c.bf16 %v3743, %v3743
    %v4005 = vpack.c.bf16 %v3745, %v3745
    %v4006 = vpack.c.bf16 %v3748, %v3748
    %v4007 = vpack.c.bf16 %v3750, %v3750
    %s4008 = smul.addr %s281, 4
    %s4009 = scalar_lea.vmem %s5, %s4008
    %vm4010 = vcmask 191488
    %4011 = vst.msk [vmem:[%s4009] sm:$0xf] %vm4010, %v3752
    %4012 = vst.msk [vmem:[%s4009 + $0x4] sm:$0xf] %vm4010, %v3753
    %4013 = vst.msk [vmem:[%s4009 + $0x8] sm:$0xf] %vm4010, %v3754
    %4014 = vst.msk [vmem:[%s4009 + $0xc] sm:$0xf] %vm4010, %v3755
    %4015 = vst.msk [vmem:[%s4009 + $0x10] sm:$0xf] %vm4010, %v3756
    %4016 = vst.msk [vmem:[%s4009 + $0x14] sm:$0xf] %vm4010, %v3757
    %4017 = vst.msk [vmem:[%s4009 + $0x18] sm:$0xf] %vm4010, %v3758
    %4018 = vst.msk [vmem:[%s4009 + $0x1c] sm:$0xf] %vm4010, %v3759
    %4019 = vst.msk [vmem:[%s4009 + $0x20] sm:$0xf] %vm4010, %v3760
    %4020 = vst.msk [vmem:[%s4009 + $0x24] sm:$0xf] %vm4010, %v3761
    %4021 = vst.msk [vmem:[%s4009 + $0x28] sm:$0xf] %vm4010, %v3762
    %4022 = vst.msk [vmem:[%s4009 + $0x2c] sm:$0xf] %vm4010, %v3763
    %4023 = vst.msk [vmem:[%s4009 + $0x30] sm:$0xf] %vm4010, %v3764
    %4024 = vst.msk [vmem:[%s4009 + $0x34] sm:$0xf] %vm4010, %v3765
    %4025 = vst.msk [vmem:[%s4009 + $0x38] sm:$0xf] %vm4010, %v3766
    %4026 = vst.msk [vmem:[%s4009 + $0x3c] sm:$0xf] %vm4010, %v3767
    %4027 = vst.msk [vmem:[%s4009 + $0x40] sm:$0xf] %vm4010, %v3768
    %4028 = vst.msk [vmem:[%s4009 + $0x44] sm:$0xf] %vm4010, %v3769
    %4029 = vst.msk [vmem:[%s4009 + $0x48] sm:$0xf] %vm4010, %v3770
    %4030 = vst.msk [vmem:[%s4009 + $0x4c] sm:$0xf] %vm4010, %v3771
    %4031 = vst.msk [vmem:[%s4009 + $0x50] sm:$0xf] %vm4010, %v3772
    %4032 = vst.msk [vmem:[%s4009 + $0x54] sm:$0xf] %vm4010, %v3773
    %4033 = vst.msk [vmem:[%s4009 + $0x58] sm:$0xf] %vm4010, %v3774
    %4034 = vst.msk [vmem:[%s4009 + $0x5c] sm:$0xf] %vm4010, %v3775
    %4035 = vst.msk [vmem:[%s4009 + $0x60] sm:$0xf] %vm4010, %v3776
    %4036 = vst.msk [vmem:[%s4009 + $0x64] sm:$0xf] %vm4010, %v3777
    %4037 = vst.msk [vmem:[%s4009 + $0x68] sm:$0xf] %vm4010, %v3778
    %4038 = vst.msk [vmem:[%s4009 + $0x6c] sm:$0xf] %vm4010, %v3779
    %4039 = vst.msk [vmem:[%s4009 + $0x70] sm:$0xf] %vm4010, %v3780
    %4040 = vst.msk [vmem:[%s4009 + $0x74] sm:$0xf] %vm4010, %v3781
    %4041 = vst.msk [vmem:[%s4009 + $0x78] sm:$0xf] %vm4010, %v3782
    %4042 = vst.msk [vmem:[%s4009 + $0x7c] sm:$0xf] %vm4010, %v3783
    %4043 = vst.msk [vmem:[%s4009 + $0x80] sm:$0xf] %vm4010, %v3784
    %4044 = vst.msk [vmem:[%s4009 + $0x84] sm:$0xf] %vm4010, %v3785
    %4045 = vst.msk [vmem:[%s4009 + $0x88] sm:$0xf] %vm4010, %v3786
    %4046 = vst.msk [vmem:[%s4009 + $0x8c] sm:$0xf] %vm4010, %v3787
    %4047 = vst.msk [vmem:[%s4009 + $0x90] sm:$0xf] %vm4010, %v3788
    %4048 = vst.msk [vmem:[%s4009 + $0x94] sm:$0xf] %vm4010, %v3789
    %4049 = vst.msk [vmem:[%s4009 + $0x98] sm:$0xf] %vm4010, %v3790
    %4050 = vst.msk [vmem:[%s4009 + $0x9c] sm:$0xf] %vm4010, %v3791
    %4051 = vst.msk [vmem:[%s4009 + $0xa0] sm:$0xf] %vm4010, %v3792
    %4052 = vst.msk [vmem:[%s4009 + $0xa4] sm:$0xf] %vm4010, %v3793
    %4053 = vst.msk [vmem:[%s4009 + $0xa8] sm:$0xf] %vm4010, %v3794
    %4054 = vst.msk [vmem:[%s4009 + $0xac] sm:$0xf] %vm4010, %v3795
    %4055 = vst.msk [vmem:[%s4009 + $0xb0] sm:$0xf] %vm4010, %v3796
    %4056 = vst.msk [vmem:[%s4009 + $0xb4] sm:$0xf] %vm4010, %v3797
    %4057 = vst.msk [vmem:[%s4009 + $0xb8] sm:$0xf] %vm4010, %v3798
    %4058 = vst.msk [vmem:[%s4009 + $0xbc] sm:$0xf] %vm4010, %v3799
    %4059 = vst.msk [vmem:[%s4009 + $0xc0] sm:$0xf] %vm4010, %v3800
    %4060 = vst.msk [vmem:[%s4009 + $0xc4] sm:$0xf] %vm4010, %v3801
    %4061 = vst.msk [vmem:[%s4009 + $0xc8] sm:$0xf] %vm4010, %v3802
    %4062 = vst.msk [vmem:[%s4009 + $0xcc] sm:$0xf] %vm4010, %v3803
    %4063 = vst.msk [vmem:[%s4009 + $0xd0] sm:$0xf] %vm4010, %v3804
    %4064 = vst.msk [vmem:[%s4009 + $0xd4] sm:$0xf] %vm4010, %v3805
    %4065 = vst.msk [vmem:[%s4009 + $0xd8] sm:$0xf] %vm4010, %v3806
    %4066 = vst.msk [vmem:[%s4009 + $0xdc] sm:$0xf] %vm4010, %v3807
    %4067 = vst.msk [vmem:[%s4009 + $0xe0] sm:$0xf] %vm4010, %v3808
    %4068 = vst.msk [vmem:[%s4009 + $0xe4] sm:$0xf] %vm4010, %v3809
    %4069 = vst.msk [vmem:[%s4009 + $0xe8] sm:$0xf] %vm4010, %v3810
    %4070 = vst.msk [vmem:[%s4009 + $0xec] sm:$0xf] %vm4010, %v3811
    %4071 = vst.msk [vmem:[%s4009 + $0xf0] sm:$0xf] %vm4010, %v3812
    %4072 = vst.msk [vmem:[%s4009 + $0xf4] sm:$0xf] %vm4010, %v3813
    %4073 = vst.msk [vmem:[%s4009 + $0xf8] sm:$0xf] %vm4010, %v3814
    %4074 = vst.msk [vmem:[%s4009 + $0xfc] sm:$0xf] %vm4010, %v3815
    %4075 = vst.msk [vmem:[%s4009 + $0x100] sm:$0xf] %vm4010, %v3816
    %4076 = vst.msk [vmem:[%s4009 + $0x104] sm:$0xf] %vm4010, %v3817
    %4077 = vst.msk [vmem:[%s4009 + $0x108] sm:$0xf] %vm4010, %v3818
    %4078 = vst.msk [vmem:[%s4009 + $0x10c] sm:$0xf] %vm4010, %v3819
    %4079 = vst.msk [vmem:[%s4009 + $0x110] sm:$0xf] %vm4010, %v3820
    %4080 = vst.msk [vmem:[%s4009 + $0x114] sm:$0xf] %vm4010, %v3821
    %4081 = vst.msk [vmem:[%s4009 + $0x118] sm:$0xf] %vm4010, %v3822
    %4082 = vst.msk [vmem:[%s4009 + $0x11c] sm:$0xf] %vm4010, %v3823
    %4083 = vst.msk [vmem:[%s4009 + $0x120] sm:$0xf] %vm4010, %v3824
    %4084 = vst.msk [vmem:[%s4009 + $0x124] sm:$0xf] %vm4010, %v3825
    %4085 = vst.msk [vmem:[%s4009 + $0x128] sm:$0xf] %vm4010, %v3826
    %4086 = vst.msk [vmem:[%s4009 + $0x12c] sm:$0xf] %vm4010, %v3827
    %4087 = vst.msk [vmem:[%s4009 + $0x130] sm:$0xf] %vm4010, %v3828
    %4088 = vst.msk [vmem:[%s4009 + $0x134] sm:$0xf] %vm4010, %v3829
    %4089 = vst.msk [vmem:[%s4009 + $0x138] sm:$0xf] %vm4010, %v3830
    %4090 = vst.msk [vmem:[%s4009 + $0x13c] sm:$0xf] %vm4010, %v3831
    %4091 = vst.msk [vmem:[%s4009 + $0x140] sm:$0xf] %vm4010, %v3832
    %4092 = vst.msk [vmem:[%s4009 + $0x144] sm:$0xf] %vm4010, %v3833
    %4093 = vst.msk [vmem:[%s4009 + $0x148] sm:$0xf] %vm4010, %v3834
    %4094 = vst.msk [vmem:[%s4009 + $0x14c] sm:$0xf] %vm4010, %v3835
    %4095 = vst.msk [vmem:[%s4009 + $0x150] sm:$0xf] %vm4010, %v3836
    %4096 = vst.msk [vmem:[%s4009 + $0x154] sm:$0xf] %vm4010, %v3837
    %4097 = vst.msk [vmem:[%s4009 + $0x158] sm:$0xf] %vm4010, %v3838
    %4098 = vst.msk [vmem:[%s4009 + $0x15c] sm:$0xf] %vm4010, %v3839
    %4099 = vst.msk [vmem:[%s4009 + $0x160] sm:$0xf] %vm4010, %v3840
    %4100 = vst.msk [vmem:[%s4009 + $0x164] sm:$0xf] %vm4010, %v3841
    %4101 = vst.msk [vmem:[%s4009 + $0x168] sm:$0xf] %vm4010, %v3842
    %4102 = vst.msk [vmem:[%s4009 + $0x16c] sm:$0xf] %vm4010, %v3843
    %4103 = vst.msk [vmem:[%s4009 + $0x170] sm:$0xf] %vm4010, %v3844
    %4104 = vst.msk [vmem:[%s4009 + $0x174] sm:$0xf] %vm4010, %v3845
    %4105 = vst.msk [vmem:[%s4009 + $0x178] sm:$0xf] %vm4010, %v3846
    %4106 = vst.msk [vmem:[%s4009 + $0x17c] sm:$0xf] %vm4010, %v3847
    %4107 = vst.msk [vmem:[%s4009 + $0x180] sm:$0xf] %vm4010, %v3848
    %4108 = vst.msk [vmem:[%s4009 + $0x184] sm:$0xf] %vm4010, %v3849
    %4109 = vst.msk [vmem:[%s4009 + $0x188] sm:$0xf] %vm4010, %v3850
    %4110 = vst.msk [vmem:[%s4009 + $0x18c] sm:$0xf] %vm4010, %v3851
    %4111 = vst.msk [vmem:[%s4009 + $0x190] sm:$0xf] %vm4010, %v3852
    %4112 = vst.msk [vmem:[%s4009 + $0x194] sm:$0xf] %vm4010, %v3853
    %4113 = vst.msk [vmem:[%s4009 + $0x198] sm:$0xf] %vm4010, %v3854
    %4114 = vst.msk [vmem:[%s4009 + $0x19c] sm:$0xf] %vm4010, %v3855
    %4115 = vst.msk [vmem:[%s4009 + $0x1a0] sm:$0xf] %vm4010, %v3856
    %4116 = vst.msk [vmem:[%s4009 + $0x1a4] sm:$0xf] %vm4010, %v3857
    %4117 = vst.msk [vmem:[%s4009 + $0x1a8] sm:$0xf] %vm4010, %v3858
    %4118 = vst.msk [vmem:[%s4009 + $0x1ac] sm:$0xf] %vm4010, %v3859
    %4119 = vst.msk [vmem:[%s4009 + $0x1b0] sm:$0xf] %vm4010, %v3860
    %4120 = vst.msk [vmem:[%s4009 + $0x1b4] sm:$0xf] %vm4010, %v3861
    %4121 = vst.msk [vmem:[%s4009 + $0x1b8] sm:$0xf] %vm4010, %v3862
    %4122 = vst.msk [vmem:[%s4009 + $0x1bc] sm:$0xf] %vm4010, %v3863
    %4123 = vst.msk [vmem:[%s4009 + $0x1c0] sm:$0xf] %vm4010, %v3864
    %4124 = vst.msk [vmem:[%s4009 + $0x1c4] sm:$0xf] %vm4010, %v3865
    %4125 = vst.msk [vmem:[%s4009 + $0x1c8] sm:$0xf] %vm4010, %v3866
    %4126 = vst.msk [vmem:[%s4009 + $0x1cc] sm:$0xf] %vm4010, %v3867
    %4127 = vst.msk [vmem:[%s4009 + $0x1d0] sm:$0xf] %vm4010, %v3868
    %4128 = vst.msk [vmem:[%s4009 + $0x1d4] sm:$0xf] %vm4010, %v3869
    %4129 = vst.msk [vmem:[%s4009 + $0x1d8] sm:$0xf] %vm4010, %v3870
    %4130 = vst.msk [vmem:[%s4009 + $0x1dc] sm:$0xf] %vm4010, %v3871
    %4131 = vst.msk [vmem:[%s4009 + $0x1e0] sm:$0xf] %vm4010, %v3872
    %4132 = vst.msk [vmem:[%s4009 + $0x1e4] sm:$0xf] %vm4010, %v3873
    %4133 = vst.msk [vmem:[%s4009 + $0x1e8] sm:$0xf] %vm4010, %v3874
    %4134 = vst.msk [vmem:[%s4009 + $0x1ec] sm:$0xf] %vm4010, %v3875
    %4135 = vst.msk [vmem:[%s4009 + $0x1f0] sm:$0xf] %vm4010, %v3876
    %4136 = vst.msk [vmem:[%s4009 + $0x1f4] sm:$0xf] %vm4010, %v3877
    %4137 = vst.msk [vmem:[%s4009 + $0x1f8] sm:$0xf] %vm4010, %v3878
    %4138 = vst.msk [vmem:[%s4009 + $0x1fc] sm:$0xf] %vm4010, %v3879
    %4139 = vst.msk [vmem:[%s4009 + $0x200] sm:$0xf] %vm4010, %v3880
    %4140 = vst.msk [vmem:[%s4009 + $0x204] sm:$0xf] %vm4010, %v3881
    %4141 = vst.msk [vmem:[%s4009 + $0x208] sm:$0xf] %vm4010, %v3882
    %4142 = vst.msk [vmem:[%s4009 + $0x20c] sm:$0xf] %vm4010, %v3883
    %4143 = vst.msk [vmem:[%s4009 + $0x210] sm:$0xf] %vm4010, %v3884
    %4144 = vst.msk [vmem:[%s4009 + $0x214] sm:$0xf] %vm4010, %v3885
    %4145 = vst.msk [vmem:[%s4009 + $0x218] sm:$0xf] %vm4010, %v3886
    %4146 = vst.msk [vmem:[%s4009 + $0x21c] sm:$0xf] %vm4010, %v3887
    %4147 = vst.msk [vmem:[%s4009 + $0x220] sm:$0xf] %vm4010, %v3888
    %4148 = vst.msk [vmem:[%s4009 + $0x224] sm:$0xf] %vm4010, %v3889
    %4149 = vst.msk [vmem:[%s4009 + $0x228] sm:$0xf] %vm4010, %v3890
    %4150 = vst.msk [vmem:[%s4009 + $0x22c] sm:$0xf] %vm4010, %v3891
    %4151 = vst.msk [vmem:[%s4009 + $0x230] sm:$0xf] %vm4010, %v3892
    %4152 = vst.msk [vmem:[%s4009 + $0x234] sm:$0xf] %vm4010, %v3893
    %4153 = vst.msk [vmem:[%s4009 + $0x238] sm:$0xf] %vm4010, %v3894
    %4154 = vst.msk [vmem:[%s4009 + $0x23c] sm:$0xf] %vm4010, %v3895
    %4155 = vst.msk [vmem:[%s4009 + $0x240] sm:$0xf] %vm4010, %v3896
    %4156 = vst.msk [vmem:[%s4009 + $0x244] sm:$0xf] %vm4010, %v3897
    %4157 = vst.msk [vmem:[%s4009 + $0x248] sm:$0xf] %vm4010, %v3898
    %4158 = vst.msk [vmem:[%s4009 + $0x24c] sm:$0xf] %vm4010, %v3899
    %4159 = vst.msk [vmem:[%s4009 + $0x250] sm:$0xf] %vm4010, %v3900
    %4160 = vst.msk [vmem:[%s4009 + $0x254] sm:$0xf] %vm4010, %v3901
    %4161 = vst.msk [vmem:[%s4009 + $0x258] sm:$0xf] %vm4010, %v3902
    %4162 = vst.msk [vmem:[%s4009 + $0x25c] sm:$0xf] %vm4010, %v3903
    %4163 = vst.msk [vmem:[%s4009 + $0x260] sm:$0xf] %vm4010, %v3904
    %4164 = vst.msk [vmem:[%s4009 + $0x264] sm:$0xf] %vm4010, %v3905
    %4165 = vst.msk [vmem:[%s4009 + $0x268] sm:$0xf] %vm4010, %v3906
    %4166 = vst.msk [vmem:[%s4009 + $0x26c] sm:$0xf] %vm4010, %v3907
    %4167 = vst.msk [vmem:[%s4009 + $0x270] sm:$0xf] %vm4010, %v3908
    %4168 = vst.msk [vmem:[%s4009 + $0x274] sm:$0xf] %vm4010, %v3909
    %4169 = vst.msk [vmem:[%s4009 + $0x278] sm:$0xf] %vm4010, %v3910
    %4170 = vst.msk [vmem:[%s4009 + $0x27c] sm:$0xf] %vm4010, %v3911
    %4171 = vst.msk [vmem:[%s4009 + $0x280] sm:$0xf] %vm4010, %v3912
    %4172 = vst.msk [vmem:[%s4009 + $0x284] sm:$0xf] %vm4010, %v3913
    %4173 = vst.msk [vmem:[%s4009 + $0x288] sm:$0xf] %vm4010, %v3914
    %4174 = vst.msk [vmem:[%s4009 + $0x28c] sm:$0xf] %vm4010, %v3915
    %4175 = vst.msk [vmem:[%s4009 + $0x290] sm:$0xf] %vm4010, %v3916
    %4176 = vst.msk [vmem:[%s4009 + $0x294] sm:$0xf] %vm4010, %v3917
    %4177 = vst.msk [vmem:[%s4009 + $0x298] sm:$0xf] %vm4010, %v3918
    %4178 = vst.msk [vmem:[%s4009 + $0x29c] sm:$0xf] %vm4010, %v3919
    %4179 = vst.msk [vmem:[%s4009 + $0x2a0] sm:$0xf] %vm4010, %v3920
    %4180 = vst.msk [vmem:[%s4009 + $0x2a4] sm:$0xf] %vm4010, %v3921
    %4181 = vst.msk [vmem:[%s4009 + $0x2a8] sm:$0xf] %vm4010, %v3922
    %4182 = vst.msk [vmem:[%s4009 + $0x2ac] sm:$0xf] %vm4010, %v3923
    %4183 = vst.msk [vmem:[%s4009 + $0x2b0] sm:$0xf] %vm4010, %v3924
    %4184 = vst.msk [vmem:[%s4009 + $0x2b4] sm:$0xf] %vm4010, %v3925
    %4185 = vst.msk [vmem:[%s4009 + $0x2b8] sm:$0xf] %vm4010, %v3926
    %4186 = vst.msk [vmem:[%s4009 + $0x2bc] sm:$0xf] %vm4010, %v3927
    %4187 = vst.msk [vmem:[%s4009 + $0x2c0] sm:$0xf] %vm4010, %v3928
    %4188 = vst.msk [vmem:[%s4009 + $0x2c4] sm:$0xf] %vm4010, %v3929
    %4189 = vst.msk [vmem:[%s4009 + $0x2c8] sm:$0xf] %vm4010, %v3930
    %4190 = vst.msk [vmem:[%s4009 + $0x2cc] sm:$0xf] %vm4010, %v3931
    %4191 = vst.msk [vmem:[%s4009 + $0x2d0] sm:$0xf] %vm4010, %v3932
    %4192 = vst.msk [vmem:[%s4009 + $0x2d4] sm:$0xf] %vm4010, %v3933
    %4193 = vst.msk [vmem:[%s4009 + $0x2d8] sm:$0xf] %vm4010, %v3934
    %4194 = vst.msk [vmem:[%s4009 + $0x2dc] sm:$0xf] %vm4010, %v3935
    %4195 = vst.msk [vmem:[%s4009 + $0x2e0] sm:$0xf] %vm4010, %v3936
    %4196 = vst.msk [vmem:[%s4009 + $0x2e4] sm:$0xf] %vm4010, %v3937
    %4197 = vst.msk [vmem:[%s4009 + $0x2e8] sm:$0xf] %vm4010, %v3938
    %4198 = vst.msk [vmem:[%s4009 + $0x2ec] sm:$0xf] %vm4010, %v3939
    %4199 = vst.msk [vmem:[%s4009 + $0x2f0] sm:$0xf] %vm4010, %v3940
    %4200 = vst.msk [vmem:[%s4009 + $0x2f4] sm:$0xf] %vm4010, %v3941
    %4201 = vst.msk [vmem:[%s4009 + $0x2f8] sm:$0xf] %vm4010, %v3942
    %4202 = vst.msk [vmem:[%s4009 + $0x2fc] sm:$0xf] %vm4010, %v3943
    %4203 = vst.msk [vmem:[%s4009 + $0x300] sm:$0xf] %vm4010, %v3944
    %4204 = vst.msk [vmem:[%s4009 + $0x304] sm:$0xf] %vm4010, %v3945
    %4205 = vst.msk [vmem:[%s4009 + $0x308] sm:$0xf] %vm4010, %v3946
    %4206 = vst.msk [vmem:[%s4009 + $0x30c] sm:$0xf] %vm4010, %v3947
    %4207 = vst.msk [vmem:[%s4009 + $0x310] sm:$0xf] %vm4010, %v3948
    %4208 = vst.msk [vmem:[%s4009 + $0x314] sm:$0xf] %vm4010, %v3949
    %4209 = vst.msk [vmem:[%s4009 + $0x318] sm:$0xf] %vm4010, %v3950
    %4210 = vst.msk [vmem:[%s4009 + $0x31c] sm:$0xf] %vm4010, %v3951
    %4211 = vst.msk [vmem:[%s4009 + $0x320] sm:$0xf] %vm4010, %v3952
    %4212 = vst.msk [vmem:[%s4009 + $0x324] sm:$0xf] %vm4010, %v3953
    %4213 = vst.msk [vmem:[%s4009 + $0x328] sm:$0xf] %vm4010, %v3954
    %4214 = vst.msk [vmem:[%s4009 + $0x32c] sm:$0xf] %vm4010, %v3955
    %4215 = vst.msk [vmem:[%s4009 + $0x330] sm:$0xf] %vm4010, %v3956
    %4216 = vst.msk [vmem:[%s4009 + $0x334] sm:$0xf] %vm4010, %v3957
    %4217 = vst.msk [vmem:[%s4009 + $0x338] sm:$0xf] %vm4010, %v3958
    %4218 = vst.msk [vmem:[%s4009 + $0x33c] sm:$0xf] %vm4010, %v3959
    %4219 = vst.msk [vmem:[%s4009 + $0x340] sm:$0xf] %vm4010, %v3960
    %4220 = vst.msk [vmem:[%s4009 + $0x344] sm:$0xf] %vm4010, %v3961
    %4221 = vst.msk [vmem:[%s4009 + $0x348] sm:$0xf] %vm4010, %v3962
    %4222 = vst.msk [vmem:[%s4009 + $0x34c] sm:$0xf] %vm4010, %v3963
    %4223 = vst.msk [vmem:[%s4009 + $0x350] sm:$0xf] %vm4010, %v3964
    %4224 = vst.msk [vmem:[%s4009 + $0x354] sm:$0xf] %vm4010, %v3965
    %4225 = vst.msk [vmem:[%s4009 + $0x358] sm:$0xf] %vm4010, %v3966
    %4226 = vst.msk [vmem:[%s4009 + $0x35c] sm:$0xf] %vm4010, %v3967
    %4227 = vst.msk [vmem:[%s4009 + $0x360] sm:$0xf] %vm4010, %v3968
    %4228 = vst.msk [vmem:[%s4009 + $0x364] sm:$0xf] %vm4010, %v3969
    %4229 = vst.msk [vmem:[%s4009 + $0x368] sm:$0xf] %vm4010, %v3970
    %4230 = vst.msk [vmem:[%s4009 + $0x36c] sm:$0xf] %vm4010, %v3971
    %4231 = vst.msk [vmem:[%s4009 + $0x370] sm:$0xf] %vm4010, %v3972
    %4232 = vst.msk [vmem:[%s4009 + $0x374] sm:$0xf] %vm4010, %v3973
    %4233 = vst.msk [vmem:[%s4009 + $0x378] sm:$0xf] %vm4010, %v3974
    %4234 = vst.msk [vmem:[%s4009 + $0x37c] sm:$0xf] %vm4010, %v3975
    %4235 = vst.msk [vmem:[%s4009 + $0x380] sm:$0xf] %vm4010, %v3976
    %4236 = vst.msk [vmem:[%s4009 + $0x384] sm:$0xf] %vm4010, %v3977
    %4237 = vst.msk [vmem:[%s4009 + $0x388] sm:$0xf] %vm4010, %v3978
    %4238 = vst.msk [vmem:[%s4009 + $0x38c] sm:$0xf] %vm4010, %v3979
    %4239 = vst.msk [vmem:[%s4009 + $0x390] sm:$0xf] %vm4010, %v3980
    %4240 = vst.msk [vmem:[%s4009 + $0x394] sm:$0xf] %vm4010, %v3981
    %4241 = vst.msk [vmem:[%s4009 + $0x398] sm:$0xf] %vm4010, %v3982
    %4242 = vst.msk [vmem:[%s4009 + $0x39c] sm:$0xf] %vm4010, %v3983
    %4243 = vst.msk [vmem:[%s4009 + $0x3a0] sm:$0xf] %vm4010, %v3984
    %4244 = vst.msk [vmem:[%s4009 + $0x3a4] sm:$0xf] %vm4010, %v3985
    %4245 = vst.msk [vmem:[%s4009 + $0x3a8] sm:$0xf] %vm4010, %v3986
    %4246 = vst.msk [vmem:[%s4009 + $0x3ac] sm:$0xf] %vm4010, %v3987
    %4247 = vst.msk [vmem:[%s4009 + $0x3b0] sm:$0xf] %vm4010, %v3988
    %4248 = vst.msk [vmem:[%s4009 + $0x3b4] sm:$0xf] %vm4010, %v3989
    %4249 = vst.msk [vmem:[%s4009 + $0x3b8] sm:$0xf] %vm4010, %v3990
    %4250 = vst.msk [vmem:[%s4009 + $0x3bc] sm:$0xf] %vm4010, %v3991
    %4251 = vst.msk [vmem:[%s4009 + $0x3c0] sm:$0xf] %vm4010, %v3992
    %4252 = vst.msk [vmem:[%s4009 + $0x3c4] sm:$0xf] %vm4010, %v3993
    %4253 = vst.msk [vmem:[%s4009 + $0x3c8] sm:$0xf] %vm4010, %v3994
    %4254 = vst.msk [vmem:[%s4009 + $0x3cc] sm:$0xf] %vm4010, %v3995
    %4255 = vst.msk [vmem:[%s4009 + $0x3d0] sm:$0xf] %vm4010, %v3996
    %4256 = vst.msk [vmem:[%s4009 + $0x3d4] sm:$0xf] %vm4010, %v3997
    %4257 = vst.msk [vmem:[%s4009 + $0x3d8] sm:$0xf] %vm4010, %v3998
    %4258 = vst.msk [vmem:[%s4009 + $0x3dc] sm:$0xf] %vm4010, %v3999
    %4259 = vst.msk [vmem:[%s4009 + $0x3e0] sm:$0xf] %vm4010, %v4000
    %4260 = vst.msk [vmem:[%s4009 + $0x3e4] sm:$0xf] %vm4010, %v4001
    %4261 = vst.msk [vmem:[%s4009 + $0x3e8] sm:$0xf] %vm4010, %v4002
    %4262 = vst.msk [vmem:[%s4009 + $0x3ec] sm:$0xf] %vm4010, %v4003
    %4263 = vst.msk [vmem:[%s4009 + $0x3f0] sm:$0xf] %vm4010, %v4004
    %4264 = vst.msk [vmem:[%s4009 + $0x3f4] sm:$0xf] %vm4010, %v4005
    %4265 = vst.msk [vmem:[%s4009 + $0x3f8] sm:$0xf] %vm4010, %v4006
    %4266 = vst.msk [vmem:[%s4009 + $0x3fc] sm:$0xf] %vm4010, %v4007
  $region26: #{tpu_custom_call.1} parent=0 // loop_footer
    %s279 = sadd.s32 1, %s275
  $region27: #{tpu_custom_call.1} parent=0 // loop_footer_branch
    %274 = sbr.rel target = $region23
  $region28: #{tpu_custom_call.1} parent=0 // loop_exit
    _
  // Predicated region
  $region29: #{tpu_custom_call.1} parent=0 // pred_check
    _
  $region30: #{tpu_custom_call.1} parent=0 // pred_check_branch
    %4268 = sbr.rel (0) target = $region32
  $region31: #{tpu_custom_call.1} parent=0 // pred_region
    _
  $region32: #{tpu_custom_call.1} parent=0 // pred_fallthru
    _
  // Predicated region
  $region33: #{tpu_custom_call.1} parent=0 // pred_check
    _
  $region34: #{tpu_custom_call.1} parent=0 // pred_check_branch
    %4270 = sbr.rel (0) target = $region36
  $region35: #{tpu_custom_call.1} parent=0 // pred_region
    _
  $region36: #{tpu_custom_call.1} parent=0 // pred_fallthru
    _

</llo_original>
